<compile_context>
chip_gen: v7x
topology: tpu7x:2x2x1
jax: 0.10.0
libtpu: 0.0.40
codegen_flags: <defaults>
</compile_context>

<pallas_src>
import math
import functools

import jax
import jax.numpy as jnp
from jax import lax
from jax.experimental import pallas as pl
from jax.experimental.pallas import tpu as pltpu


_LN_EPS = 1e-12
_MASK_FILL = -10000.0


def _round_up(x, m):
    return ((x + m - 1) // m) * m


def _pick_tile(dim, prefs):
    """Largest preferred tile that evenly divides dim, else the full dim."""
    for t in prefs:
        if dim % t == 0:
            return t
    return dim


def _layernorm(y, gamma, beta):
    """LayerNorm over last dim, eps=1e-12 (matches reference LayerNorm)."""
    mean = jnp.mean(y, axis=-1, keepdims=True)
    var = jnp.mean((y - mean) ** 2, axis=-1, keepdims=True)
    return (y - mean) * lax.rsqrt(var + _LN_EPS) * gamma + beta


# ----------------------------------------------------------------------------
# Kernel 1/2: fused multi-head attention + output projection + add&LayerNorm
# ----------------------------------------------------------------------------

def _mha_ln_kernel(xq_ref, xkv_ref, m_ref, wq_ref, wkv_ref, wo_ref, vec_ref,
                   o_ref, ctx_ref, *, n_head, scale):
    xq = xq_ref[0]                        # (tq, D) bf16  (also the residual)
    xkv = xkv_ref[0]                      # (Sk, D) bf16
    vecs = vec_ref[...]                   # (6, D) f32: bq, bk, bv, bo, g, b
    # additive mask bias, hoisted once (0 / -10000), cast bf16 -> f32
    bias = m_ref[0, 0].astype(jnp.float32)        # (Mq, Sk), Mq in {1, tq}

    D = xq.shape[-1]
    Dh = D // n_head

    # Q and fused K/V projections (bf16 operands, f32 accumulation on MXU).
    q = jnp.dot(xq, wq_ref[...], preferred_element_type=jnp.float32) + vecs[0:1]
    q = q * scale                                         # fold scale once
    kv = jnp.dot(xkv, wkv_ref[...], preferred_element_type=jnp.float32)
    k = kv[:, :D] + vecs[1:2]
    v = kv[:, D:] + vecs[2:3]

    qb = q.astype(jnp.bfloat16)
    kb = k.astype(jnp.bfloat16)
    vb = v.astype(jnp.bfloat16)

    for h in range(n_head):               # static unroll over heads
        sl = slice(h * Dh, (h + 1) * Dh)
        # scores: contract over head_dim without an explicit transpose.
        s = lax.dot_general(qb[:, sl], kb[:, sl],
                            (((1,), (1,)), ((), ())),
                            preferred_element_type=jnp.float32)
        s = s + bias                                   # additive mask bias
        s_max = jnp.max(s, axis=-1, keepdims=True)
        e = jnp.exp(s - s_max)
        denom = jnp.sum(e, axis=-1, keepdims=True)
        p = e * pl.reciprocal(denom, approx=True)      # EUP, f32 softmax
        # write per-head context straight to VMEM scratch (bounds live ranges)
        ctx_ref[:, sl] = jnp.dot(p.astype(jnp.bfloat16), vb[:, sl],
                                 preferred_element_type=jnp.float32)

    out = jnp.dot(ctx_ref[...].astype(jnp.bfloat16), wo_ref[...],
                  preferred_element_type=jnp.float32) + vecs[3:4]

    y = out + xq.astype(jnp.float32)                    # residual add (f32)
    o_ref[0] = _layernorm(y, vecs[4:5], vecs[5:6]).astype(o_ref.dtype)


def mha_add_layernorm(x_q, x_kv, bias, p, n_head):
    """Fused MHA(x_q, x_kv) + residual + LayerNorm.

    x_q:  (B, Sq, D) bf16
    x_kv: (B, Sk, D) bf16
    bias: (B, 1, Mq, Sk) bf16 additive mask bias (0 / -10000), Mq in {1, Sq}
    Returns (B, Sq, D) bf16.
    """
    B, Sq, D = x_q.shape
    Sk = x_kv.shape[1]
    Mq = bias.shape[2]

    tq = _pick_tile(Sq, (512, 256, 128))
    nq = Sq // tq

    if Mq == 1:
        m_spec = pl.BlockSpec((1, 1, 1, Sk), lambda b, qi: (b, 0, 0, 0))
    else:
        m_spec = pl.BlockSpec((1, 1, tq, Sk), lambda b, qi: (b, 0, qi, 0))

    kernel = functools.partial(_mha_ln_kernel, n_head=n_head,
                               scale=1.0 / math.sqrt(D // n_head))
    return pl.pallas_call(
        kernel,
        grid=(B, nq),
        in_specs=[
            pl.BlockSpec((1, tq, D), lambda b, qi: (b, qi, 0)),   # x_q
            pl.BlockSpec((1, Sk, D), lambda b, qi: (b, 0, 0)),    # x_kv
            m_spec,                                               # mask bias
            pl.BlockSpec((D, D), lambda b, qi: (0, 0)),           # wq (bf16)
            pl.BlockSpec((D, 2 * D), lambda b, qi: (0, 0)),       # wkv (bf16)
            pl.BlockSpec((D, D), lambda b, qi: (0, 0)),           # wo (bf16)
            pl.BlockSpec((6, D), lambda b, qi: (0, 0)),           # packed vecs
        ],
        out_specs=pl.BlockSpec((1, tq, D), lambda b, qi: (b, qi, 0)),
        out_shape=jax.ShapeDtypeStruct((B, Sq, D), jnp.bfloat16),
        scratch_shapes=[pltpu.VMEM((tq, D), jnp.float32)],        # ctx scratch
        compiler_params=pltpu.CompilerParams(
            dimension_semantics=("parallel", "parallel")),
    )(x_q, x_kv, bias, p["wq"], p["wkv"], p["wo"], p["vecs"])


# ----------------------------------------------------------------------------
# Kernel 3: fused FFN (linear + ReLU + linear) + add&LayerNorm, tiled over F
# ----------------------------------------------------------------------------

def _ffn_ln_kernel(x_ref, w1_ref, b1_ref, w2_ref, vec_ref, o_ref, acc_ref):
    f = pl.program_id(1)

    @pl.when(f == 0)
    def _():
        acc_ref[...] = jnp.zeros_like(acc_ref)

    x = x_ref[...]                                    # (tm, D) bf16 (residual)
    h = jnp.dot(x, w1_ref[...],
                preferred_element_type=jnp.float32) + b1_ref[...]
    h = jnp.maximum(h, 0.0)
    acc_ref[...] += jnp.dot(h.astype(jnp.bfloat16), w2_ref[...],
                            preferred_element_type=jnp.float32)

    @pl.when(f == pl.num_programs(1) - 1)
    def _():
        vecs = vec_ref[...]                           # (3, D): b2, g, b
        y = acc_ref[...] + vecs[0:1] + x.astype(jnp.float32)
        o_ref[...] = _layernorm(y, vecs[1:2], vecs[2:3]).astype(o_ref.dtype)


def ffn_add_layernorm(x2d, p):
    """x2d: (M, D) bf16 -> (M, D) bf16."""
    M, D = x2d.shape
    F = p["w1"].shape[1]
    tm = _pick_tile(M, (256, 128))
    tf = _pick_tile(F, (1024, 512, 256))
    return pl.pallas_call(
        _ffn_ln_kernel,
        grid=(M // tm, F // tf),
        in_specs=[
            pl.BlockSpec((tm, D), lambda i, f: (i, 0)),     # x (resident per i)
            pl.BlockSpec((D, tf), lambda i, f: (0, f)),     # w1 slice (bf16)
            pl.BlockSpec((1, tf), lambda i, f: (0, f)),     # b1 slice
            pl.BlockSpec((tf, D), lambda i, f: (f, 0)),     # w2 slice (bf16)
            pl.BlockSpec((3, D), lambda i, f: (0, 0)),      # packed b2/gamma/beta
        ],
        out_specs=pl.BlockSpec((tm, D), lambda i, f: (i, 0)),
        out_shape=jax.ShapeDtypeStruct((M, D), jnp.bfloat16),
        scratch_shapes=[pltpu.VMEM((tm, D), jnp.float32)],
        compiler_params=pltpu.CompilerParams(
            dimension_semantics=("parallel", "arbitrary")),
    )(x2d, p["w1"], p["b1"], p["w2"], p["vecs"])


# ----------------------------------------------------------------------------
# Tiled linear (final vocab projection): MXU matmul with f32 VMEM accumulator
# ----------------------------------------------------------------------------

def _linear_kernel(x_ref, w_ref, b_ref, o_ref, acc_ref):
    @pl.when(pl.program_id(2) == 0)
    def _():
        acc_ref[...] = jnp.zeros_like(acc_ref)

    acc_ref[...] += jnp.dot(x_ref[...], w_ref[...],
                            preferred_element_type=jnp.float32)

    @pl.when(pl.program_id(2) == pl.num_programs(2) - 1)
    def _():
        o_ref[...] = (acc_ref[...] + b_ref[...]).astype(o_ref.dtype)


def linear(x2d, w, b):
    """x2d: (M, K) bf16, w: (K, N) bf16, b: (N,) f32 -> (M, N) f32."""
    M, K = x2d.shape
    N = w.shape[1]

    # Pad N (and large non-aligned M) so tiles never fall back to full extents.
    Np = _round_up(N, 128)
    if Np != N:
        w = jnp.pad(w, ((0, 0), (0, Np - N)))
        b = jnp.pad(b, ((0, Np - N),))
    Mp = M if M <= 128 else _round_up(M, 128)
    if Mp != M:
        x2d = jnp.pad(x2d, ((0, Mp - M), (0, 0)))

    tm = _pick_tile(Mp, (256, 128))
    tn = _pick_tile(Np, (512, 256, 128))
    tk = _pick_tile(K, (512, 256, 128))

    out = pl.pallas_call(
        _linear_kernel,
        grid=(Mp // tm, Np // tn, K // tk),
        in_specs=[
            pl.BlockSpec((tm, tk), lambda i, j, k: (i, k)),
            pl.BlockSpec((tk, tn), lambda i, j, k: (k, j)),
            pl.BlockSpec((1, tn), lambda i, j, k: (0, j)),
        ],
        out_specs=pl.BlockSpec((tm, tn), lambda i, j, k: (i, j)),
        out_shape=jax.ShapeDtypeStruct((Mp, Np), jnp.float32),
        scratch_shapes=[pltpu.VMEM((tm, tn), jnp.float32)],
        compiler_params=pltpu.CompilerParams(
            dimension_semantics=("parallel", "parallel", "arbitrary")),
    )(x2d, w, b.reshape(1, Np))
    return out[:M, :N]


# ----------------------------------------------------------------------------
# Model composition
# ----------------------------------------------------------------------------

def decoder_layer(dec, enc, trg_bias, src_bias, p, n_head):
    B, S, D = dec.shape
    # 1. masked self-attention + add&norm (fused kernel)
    x = mha_add_layernorm(dec, dec, trg_bias, p["self_attn"], n_head)
    # 2. encoder-decoder attention + add&norm (fused kernel)
    x = mha_add_layernorm(x, enc, src_bias, p["cross_attn"], n_head)
    # 3. position-wise FFN + add&norm (fused kernel)
    x = ffn_add_layernorm(x.reshape(B * S, D), p["ffn"]).reshape(B, S, D)
    return x


def sinusoidal_encoding(max_len, d_model):
    pos = jnp.arange(max_len, dtype=jnp.float32)[:, None]
    i2 = jnp.arange(0, d_model, 2, dtype=jnp.float32)
    angle = pos / jnp.power(10000.0, i2 / d_model)
    pe = jnp.zeros((max_len, d_model), dtype=jnp.float32)
    pe = pe.at[:, 0::2].set(jnp.sin(angle))
    pe = pe.at[:, 1::2].set(jnp.cos(angle))
    return pe


def stage1_forward(params, trg, enc_src, trg_mask, src_trg_mask, n_head):
    B, S = trg.shape
    D = params["tok_emb"].shape[1]

    # TODO(synk): token-embedding gather + positional add stay as XLA glue.
    x = (params["tok_emb"][trg] + params["pos_enc"][:S][None, :, :]
         ).astype(jnp.bfloat16)
    enc = enc_src.astype(jnp.bfloat16)

    # Convert 0/1 masks to additive bf16 bias once (halves mask DMA, removes
    # the per-head compare/select inside the kernels).
    trg_bias = jnp.where(trg_mask == 0, _MASK_FILL, 0.0).astype(jnp.bfloat16)
    src_bias = jnp.where(src_trg_mask == 0, _MASK_FILL, 0.0).astype(jnp.bfloat16)

    for lp in params["layers"]:
        x = decoder_layer(x, enc, trg_bias, src_bias, lp, n_head)

    out = linear(x.reshape(B * S, D), params["out_w"], params["out_b"])
    return out.reshape(B, S, params["out_w"].shape[1])


# ----------------------------------------------------------------------------
# Deterministic parameter init (matmul weights stored in bf16, packed vecs)
# ----------------------------------------------------------------------------

def init_params(key, d_model, n_head, ffn_hidden, dec_voc_size, n_layers, max_len):
    keys = iter(jax.random.split(key, n_layers * 12 + 8))

    def w(shape, scale=0.02, dtype=jnp.bfloat16):
        return (scale * jax.random.normal(next(keys), shape)).astype(dtype)

    zeros = jnp.zeros((d_model,), jnp.float32)
    ones = jnp.ones((d_model,), jnp.float32)

    def attn_params():
        wq = w((d_model, d_model))
        wk = w((d_model, d_model))
        wv = w((d_model, d_model))
        wo = w((d_model, d_model))
        # packed small params: [bq, bk, bv, bo, ln_gamma, ln_beta]
        vecs = jnp.stack([zeros, zeros, zeros, zeros, ones, zeros], axis=0)
        return dict(wq=wq, wkv=jnp.concatenate([wk, wv], axis=1), wo=wo, vecs=vecs)

    def ffn_params():
        return dict(
            w1=w((d_model, ffn_hidden)),
            b1=jnp.zeros((1, ffn_hidden), jnp.float32),
            w2=w((ffn_hidden, d_model)),
            # packed small params: [b2, ln_gamma, ln_beta]
            vecs=jnp.stack([zeros, ones, zeros], axis=0),
        )

    layers = []
    for _ in range(n_layers):
        layers.append(dict(self_attn=attn_params(),
                           cross_attn=attn_params(),
                           ffn=ffn_params()))

    tok_emb = (0.02 * jax.random.normal(next(keys),
                                        (dec_voc_size, d_model))).astype(jnp.float32)
    tok_emb = tok_emb.at[1].set(0.0)   # padding_idx=1

    return dict(
        tok_emb=tok_emb,
        pos_enc=sinusoidal_encoding(max_len, d_model),
        layers=layers,
        out_w=w((d_model, dec_voc_size)),
        out_b=jnp.zeros((dec_voc_size,), jnp.float32),
    )


# ----------------------------------------------------------------------------
# Demo
# ----------------------------------------------------------------------------

if __name__ == "__main__":
    d_model, n_head = 32, 4
    max_len, ffn_hidden = 16, 64
    dec_voc_size, n_layers = 40, 2
    B, S_trg, S_src = 2, 8, 8
    pad_idx = 1

    key = jax.random.PRNGKey(0)
    k_par, k_trg, k_enc = jax.random.split(key, 3)

    params = init_params(k_par, d_model, n_head, ffn_hidden,
                         dec_voc_size, n_layers, max_len)

    trg = jax.random.randint(k_trg, (B, S_trg), 2, dec_voc_size, dtype=jnp.int32)
    enc_src = jax.random.normal(k_enc, (B, S_src, d_model), dtype=jnp.float32)

    # trg_mask = pad_mask & causal_mask, shape (B, 1, S_trg, S_trg)
    pad_mask = (trg != pad_idx).astype(jnp.float32)[:, None, :, None]
    causal = jnp.tril(jnp.ones((S_trg, S_trg), jnp.float32))[None, None, :, :]
    trg_mask = pad_mask * causal
    # src_trg_mask, shape (B, 1, 1, S_src) — no padding in enc_src here
    src_trg_mask = jnp.ones((B, 1, 1, S_src), jnp.float32)

    fwd = jax.jit(lambda p, t, e, tm, sm: stage1_forward(p, t, e, tm, sm, n_head))
    out = fwd(params, trg, enc_src, trg_mask, src_trg_mask)
    out = jax.block_until_ready(out)
    assert out.shape == (B, S_trg, dec_voc_size)
    print("KERNEL_OK")
</pallas_src>

<mosaic_0001>
module attributes {stable_mosaic.version = 11 : i64} {
  func.func @_mha_ln_kernel(%arg0: i32, %arg1: i32, %arg2: memref<1x8x32xbf16, #tpu.memory_space<vmem>>, %arg3: memref<1x8x32xbf16, #tpu.memory_space<vmem>>, %arg4: memref<1x1x1x8xbf16, #tpu.memory_space<vmem>>, %arg5: memref<32x32xbf16, #tpu.memory_space<vmem>>, %arg6: memref<32x64xbf16, #tpu.memory_space<vmem>>, %arg7: memref<32x32xbf16, #tpu.memory_space<vmem>>, %arg8: memref<6x32xf32, #tpu.memory_space<vmem>>, %arg9: memref<1x8x32xbf16, #tpu.memory_space<vmem>>, %arg10: memref<8x32xf32, #tpu.memory_space<vmem>>) attributes {dimension_semantics = [#tpu.dimension_semantics<parallel>, #tpu.dimension_semantics<parallel>], iteration_bounds = array<i64: 2, 1>, scalar_prefetch = 0 : i64, scratch_operands = 1 : i64, tpu.core_type = #tpu.core_type<tc>, window_params = [{transform_indices = @transform_0, window_bounds = array<i64: 1, 8, 32>}, {transform_indices = @transform_1, window_bounds = array<i64: 1, 8, 32>}, {transform_indices = @transform_2, window_bounds = array<i64: 1, 1, 1, 8>}, {pipeline_mode = #tpu.pipeline_mode<synchronous>, transform_indices = @transform_3, window_bounds = array<i64: 32, 32>}, {pipeline_mode = #tpu.pipeline_mode<synchronous>, transform_indices = @transform_4, window_bounds = array<i64: 32, 64>}, {pipeline_mode = #tpu.pipeline_mode<synchronous>, transform_indices = @transform_5, window_bounds = array<i64: 32, 32>}, {pipeline_mode = #tpu.pipeline_mode<synchronous>, transform_indices = @transform_6, window_bounds = array<i64: 6, 32>}, {transform_indices = @transform_7, window_bounds = array<i64: 1, 8, 32>}]} {
    %c0 = arith.constant 0 : index
    %c0_0 = arith.constant 0 : index
    %c0_1 = arith.constant 0 : index
    %0 = vector.load %arg2[%c0, %c0_0, %c0_1] : memref<1x8x32xbf16, #tpu.memory_space<vmem>>, vector<1x8x32xbf16>
    %1 = vector.shape_cast %0 : vector<1x8x32xbf16> to vector<8x32xbf16>
    %c0_2 = arith.constant 0 : index
    %c0_3 = arith.constant 0 : index
    %c0_4 = arith.constant 0 : index
    %2 = vector.load %arg3[%c0_2, %c0_3, %c0_4] : memref<1x8x32xbf16, #tpu.memory_space<vmem>>, vector<1x8x32xbf16>
    %3 = vector.shape_cast %2 : vector<1x8x32xbf16> to vector<8x32xbf16>
    %c0_5 = arith.constant 0 : index
    %c0_6 = arith.constant 0 : index
    %4 = vector.load %arg8[%c0_5, %c0_6] : memref<6x32xf32, #tpu.memory_space<vmem>>, vector<6x32xf32>
    %c0_7 = arith.constant 0 : index
    %c0_8 = arith.constant 0 : index
    %c0_9 = arith.constant 0 : index
    %c0_10 = arith.constant 0 : index
    %5 = vector.load %arg4[%c0_7, %c0_8, %c0_9, %c0_10] : memref<1x1x1x8xbf16, #tpu.memory_space<vmem>>, vector<1x1x1x8xbf16>
    %6 = vector.shape_cast %5 : vector<1x1x1x8xbf16> to vector<1x8xbf16>
    %7 = arith.extf %6 : vector<1x8xbf16> to vector<1x8xf32>
    %c0_11 = arith.constant 0 : index
    %c0_12 = arith.constant 0 : index
    %8 = vector.load %arg5[%c0_11, %c0_12] : memref<32x32xbf16, #tpu.memory_space<vmem>>, vector<32x32xbf16>
    %cst = arith.constant dense<0.000000e+00> : vector<8x32xf32>
    %9 = tpu.matmul %1, %8, %cst {dimension_numbers = #tpu.dot_dimension_numbers<[1], [0], [0], [1], [0, 0, 1, 1], [], []>} : vector<8x32xbf16>, vector<32x32xbf16>, vector<8x32xf32> -> vector<8x32xf32>
    %10 = vector.extract_strided_slice %4 {offsets = [0, 0], sizes = [1, 32], strides = [1, 1]} : vector<6x32xf32> to vector<1x32xf32>
    %11 = vector.broadcast %10 : vector<1x32xf32> to vector<8x32xf32>
    %12 = arith.addf %9, %11 : vector<8x32xf32>
    %cst_13 = arith.constant 0.353553385 : f32
    %13 = vector.broadcast %cst_13 : f32 to vector<8x32xf32>
    %14 = arith.mulf %12, %13 : vector<8x32xf32>
    %c0_14 = arith.constant 0 : index
    %c0_15 = arith.constant 0 : index
    %15 = vector.load %arg6[%c0_14, %c0_15] : memref<32x64xbf16, #tpu.memory_space<vmem>>, vector<32x64xbf16>
    %cst_16 = arith.constant dense<0.000000e+00> : vector<8x64xf32>
    %16 = tpu.matmul %3, %15, %cst_16 {dimension_numbers = #tpu.dot_dimension_numbers<[1], [0], [0], [1], [0, 0, 1, 1], [], []>} : vector<8x32xbf16>, vector<32x64xbf16>, vector<8x64xf32> -> vector<8x64xf32>
    %17 = vector.extract_strided_slice %16 {offsets = [0, 0], sizes = [8, 32], strides = [1, 1]} : vector<8x64xf32> to vector<8x32xf32>
    %18 = vector.extract_strided_slice %4 {offsets = [1, 0], sizes = [1, 32], strides = [1, 1]} : vector<6x32xf32> to vector<1x32xf32>
    %19 = vector.broadcast %18 : vector<1x32xf32> to vector<8x32xf32>
    %20 = arith.addf %17, %19 : vector<8x32xf32>
    %21 = vector.extract_strided_slice %16 {offsets = [0, 32], sizes = [8, 32], strides = [1, 1]} : vector<8x64xf32> to vector<8x32xf32>
    %22 = vector.extract_strided_slice %4 {offsets = [2, 0], sizes = [1, 32], strides = [1, 1]} : vector<6x32xf32> to vector<1x32xf32>
    %23 = vector.broadcast %22 : vector<1x32xf32> to vector<8x32xf32>
    %24 = arith.addf %21, %23 : vector<8x32xf32>
    %25 = arith.truncf %14 : vector<8x32xf32> to vector<8x32xbf16>
    %26 = arith.truncf %20 : vector<8x32xf32> to vector<8x32xbf16>
    %27 = arith.truncf %24 : vector<8x32xf32> to vector<8x32xbf16>
    %28 = vector.extract_strided_slice %25 {offsets = [0, 0], sizes = [8, 8], strides = [1, 1]} : vector<8x32xbf16> to vector<8x8xbf16>
    %29 = vector.extract_strided_slice %26 {offsets = [0, 0], sizes = [8, 8], strides = [1, 1]} : vector<8x32xbf16> to vector<8x8xbf16>
    %cst_17 = arith.constant dense<0.000000e+00> : vector<8x8xf32>
    %30 = tpu.matmul %28, %29, %cst_17 {dimension_numbers = #tpu.dot_dimension_numbers<[1], [1], [0], [0], [0, 0, 1, 0], [], []>} : vector<8x8xbf16>, vector<8x8xbf16>, vector<8x8xf32> -> vector<8x8xf32>
    %31 = vector.broadcast %7 : vector<1x8xf32> to vector<8x8xf32>
    %32 = arith.addf %30, %31 : vector<8x8xf32>
    %cst_18 = arith.constant dense<0xFF800000> : vector<8xf32>
    %33 = vector.multi_reduction <maximumf>, %32, %cst_18 [1] : vector<8x8xf32> to vector<8xf32>
    %34 = vector.shape_cast %33 : vector<8xf32> to vector<8x1xf32>
    %35 = vector.broadcast %34 : vector<8x1xf32> to vector<8x8xf32>
    %36 = arith.subf %32, %35 : vector<8x8xf32>
    %37 = math.exp %36 : vector<8x8xf32>
    %cst_19 = arith.constant dense<0.000000e+00> : vector<8xf32>
    %38 = vector.multi_reduction <add>, %37, %cst_19 [1] : vector<8x8xf32> to vector<8xf32>
    %39 = vector.shape_cast %38 : vector<8xf32> to vector<8x1xf32>
    %40 = tpu.reciprocal %39 {approx = true} : vector<8x1xf32> -> vector<8x1xf32>
    %41 = vector.broadcast %40 : vector<8x1xf32> to vector<8x8xf32>
    %42 = arith.mulf %37, %41 : vector<8x8xf32>
    %43 = arith.truncf %42 : vector<8x8xf32> to vector<8x8xbf16>
    %44 = vector.extract_strided_slice %27 {offsets = [0, 0], sizes = [8, 8], strides = [1, 1]} : vector<8x32xbf16> to vector<8x8xbf16>
    %cst_20 = arith.constant dense<0.000000e+00> : vector<8x8xf32>
    %45 = tpu.matmul %43, %44, %cst_20 {dimension_numbers = #tpu.dot_dimension_numbers<[1], [0], [0], [1], [0, 0, 1, 1], [], []>} : vector<8x8xbf16>, vector<8x8xbf16>, vector<8x8xf32> -> vector<8x8xf32>
    %c0_21 = arith.constant 0 : index
    %c0_22 = arith.constant 0 : index
    %46 = vector.load %arg10[%c0_21, %c0_22] : memref<8x32xf32, #tpu.memory_space<vmem>>, vector<8x8xf32>
    tpu.vector_store %arg10[%c0_21, %c0_22], %45 {strides = array<i32>} : memref<8x32xf32, #tpu.memory_space<vmem>>, vector<8x8xf32>,
    %47 = vector.extract_strided_slice %25 {offsets = [0, 8], sizes = [8, 8], strides = [1, 1]} : vector<8x32xbf16> to vector<8x8xbf16>
    %48 = vector.extract_strided_slice %26 {offsets = [0, 8], sizes = [8, 8], strides = [1, 1]} : vector<8x32xbf16> to vector<8x8xbf16>
    %cst_23 = arith.constant dense<0.000000e+00> : vector<8x8xf32>
    %49 = tpu.matmul %47, %48, %cst_23 {dimension_numbers = #tpu.dot_dimension_numbers<[1], [1], [0], [0], [0, 0, 1, 0], [], []>} : vector<8x8xbf16>, vector<8x8xbf16>, vector<8x8xf32> -> vector<8x8xf32>
    %50 = vector.broadcast %7 : vector<1x8xf32> to vector<8x8xf32>
    %51 = arith.addf %49, %50 : vector<8x8xf32>
    %cst_24 = arith.constant dense<0xFF800000> : vector<8xf32>
    %52 = vector.multi_reduction <maximumf>, %51, %cst_24 [1] : vector<8x8xf32> to vector<8xf32>
    %53 = vector.shape_cast %52 : vector<8xf32> to vector<8x1xf32>
    %54 = vector.broadcast %53 : vector<8x1xf32> to vector<8x8xf32>
    %55 = arith.subf %51, %54 : vector<8x8xf32>
    %56 = math.exp %55 : vector<8x8xf32>
    %cst_25 = arith.constant dense<0.000000e+00> : vector<8xf32>
    %57 = vector.multi_reduction <add>, %56, %cst_25 [1] : vector<8x8xf32> to vector<8xf32>
    %58 = vector.shape_cast %57 : vector<8xf32> to vector<8x1xf32>
    %59 = tpu.reciprocal %58 {approx = true} : vector<8x1xf32> -> vector<8x1xf32>
    %60 = vector.broadcast %59 : vector<8x1xf32> to vector<8x8xf32>
    %61 = arith.mulf %56, %60 : vector<8x8xf32>
    %62 = arith.truncf %61 : vector<8x8xf32> to vector<8x8xbf16>
    %63 = vector.extract_strided_slice %27 {offsets = [0, 8], sizes = [8, 8], strides = [1, 1]} : vector<8x32xbf16> to vector<8x8xbf16>
    %cst_26 = arith.constant dense<0.000000e+00> : vector<8x8xf32>
    %64 = tpu.matmul %62, %63, %cst_26 {dimension_numbers = #tpu.dot_dimension_numbers<[1], [0], [0], [1], [0, 0, 1, 1], [], []>} : vector<8x8xbf16>, vector<8x8xbf16>, vector<8x8xf32> -> vector<8x8xf32>
    %c0_27 = arith.constant 0 : index
    %c8 = arith.constant 8 : index
    %65 = vector.load %arg10[%c0_27, %c8] : memref<8x32xf32, #tpu.memory_space<vmem>>, vector<8x8xf32>
    tpu.vector_store %arg10[%c0_27, %c8], %64 {strides = array<i32>} : memref<8x32xf32, #tpu.memory_space<vmem>>, vector<8x8xf32>,
    %66 = vector.extract_strided_slice %25 {offsets = [0, 16], sizes = [8, 8], strides = [1, 1]} : vector<8x32xbf16> to vector<8x8xbf16>
    %67 = vector.extract_strided_slice %26 {offsets = [0, 16], sizes = [8, 8], strides = [1, 1]} : vector<8x32xbf16> to vector<8x8xbf16>
    %cst_28 = arith.constant dense<0.000000e+00> : vector<8x8xf32>
    %68 = tpu.matmul %66, %67, %cst_28 {dimension_numbers = #tpu.dot_dimension_numbers<[1], [1], [0], [0], [0, 0, 1, 0], [], []>} : vector<8x8xbf16>, vector<8x8xbf16>, vector<8x8xf32> -> vector<8x8xf32>
    %69 = vector.broadcast %7 : vector<1x8xf32> to vector<8x8xf32>
    %70 = arith.addf %68, %69 : vector<8x8xf32>
    %cst_29 = arith.constant dense<0xFF800000> : vector<8xf32>
    %71 = vector.multi_reduction <maximumf>, %70, %cst_29 [1] : vector<8x8xf32> to vector<8xf32>
    %72 = vector.shape_cast %71 : vector<8xf32> to vector<8x1xf32>
    %73 = vector.broadcast %72 : vector<8x1xf32> to vector<8x8xf32>
    %74 = arith.subf %70, %73 : vector<8x8xf32>
    %75 = math.exp %74 : vector<8x8xf32>
    %cst_30 = arith.constant dense<0.000000e+00> : vector<8xf32>
    %76 = vector.multi_reduction <add>, %75, %cst_30 [1] : vector<8x8xf32> to vector<8xf32>
    %77 = vector.shape_cast %76 : vector<8xf32> to vector<8x1xf32>
    %78 = tpu.reciprocal %77 {approx = true} : vector<8x1xf32> -> vector<8x1xf32>
    %79 = vector.broadcast %78 : vector<8x1xf32> to vector<8x8xf32>
    %80 = arith.mulf %75, %79 : vector<8x8xf32>
    %81 = arith.truncf %80 : vector<8x8xf32> to vector<8x8xbf16>
    %82 = vector.extract_strided_slice %27 {offsets = [0, 16], sizes = [8, 8], strides = [1, 1]} : vector<8x32xbf16> to vector<8x8xbf16>
    %cst_31 = arith.constant dense<0.000000e+00> : vector<8x8xf32>
    %83 = tpu.matmul %81, %82, %cst_31 {dimension_numbers = #tpu.dot_dimension_numbers<[1], [0], [0], [1], [0, 0, 1, 1], [], []>} : vector<8x8xbf16>, vector<8x8xbf16>, vector<8x8xf32> -> vector<8x8xf32>
    %c0_32 = arith.constant 0 : index
    %c16 = arith.constant 16 : index
    %84 = vector.load %arg10[%c0_32, %c16] : memref<8x32xf32, #tpu.memory_space<vmem>>, vector<8x8xf32>
    tpu.vector_store %arg10[%c0_32, %c16], %83 {strides = array<i32>} : memref<8x32xf32, #tpu.memory_space<vmem>>, vector<8x8xf32>,
    %85 = vector.extract_strided_slice %25 {offsets = [0, 24], sizes = [8, 8], strides = [1, 1]} : vector<8x32xbf16> to vector<8x8xbf16>
    %86 = vector.extract_strided_slice %26 {offsets = [0, 24], sizes = [8, 8], strides = [1, 1]} : vector<8x32xbf16> to vector<8x8xbf16>
    %cst_33 = arith.constant dense<0.000000e+00> : vector<8x8xf32>
    %87 = tpu.matmul %85, %86, %cst_33 {dimension_numbers = #tpu.dot_dimension_numbers<[1], [1], [0], [0], [0, 0, 1, 0], [], []>} : vector<8x8xbf16>, vector<8x8xbf16>, vector<8x8xf32> -> vector<8x8xf32>
    %88 = vector.broadcast %7 : vector<1x8xf32> to vector<8x8xf32>
    %89 = arith.addf %87, %88 : vector<8x8xf32>
    %cst_34 = arith.constant dense<0xFF800000> : vector<8xf32>
    %90 = vector.multi_reduction <maximumf>, %89, %cst_34 [1] : vector<8x8xf32> to vector<8xf32>
    %91 = vector.shape_cast %90 : vector<8xf32> to vector<8x1xf32>
    %92 = vector.broadcast %91 : vector<8x1xf32> to vector<8x8xf32>
    %93 = arith.subf %89, %92 : vector<8x8xf32>
    %94 = math.exp %93 : vector<8x8xf32>
    %cst_35 = arith.constant dense<0.000000e+00> : vector<8xf32>
    %95 = vector.multi_reduction <add>, %94, %cst_35 [1] : vector<8x8xf32> to vector<8xf32>
    %96 = vector.shape_cast %95 : vector<8xf32> to vector<8x1xf32>
    %97 = tpu.reciprocal %96 {approx = true} : vector<8x1xf32> -> vector<8x1xf32>
    %98 = vector.broadcast %97 : vector<8x1xf32> to vector<8x8xf32>
    %99 = arith.mulf %94, %98 : vector<8x8xf32>
    %100 = arith.truncf %99 : vector<8x8xf32> to vector<8x8xbf16>
    %101 = vector.extract_strided_slice %27 {offsets = [0, 24], sizes = [8, 8], strides = [1, 1]} : vector<8x32xbf16> to vector<8x8xbf16>
    %cst_36 = arith.constant dense<0.000000e+00> : vector<8x8xf32>
    %102 = tpu.matmul %100, %101, %cst_36 {dimension_numbers = #tpu.dot_dimension_numbers<[1], [0], [0], [1], [0, 0, 1, 1], [], []>} : vector<8x8xbf16>, vector<8x8xbf16>, vector<8x8xf32> -> vector<8x8xf32>
    %c0_37 = arith.constant 0 : index
    %c24 = arith.constant 24 : index
    %103 = vector.load %arg10[%c0_37, %c24] : memref<8x32xf32, #tpu.memory_space<vmem>>, vector<8x8xf32>
    tpu.vector_store %arg10[%c0_37, %c24], %102 {strides = array<i32>} : memref<8x32xf32, #tpu.memory_space<vmem>>, vector<8x8xf32>,
    %c0_38 = arith.constant 0 : index
    %c0_39 = arith.constant 0 : index
    %104 = vector.load %arg10[%c0_38, %c0_39] : memref<8x32xf32, #tpu.memory_space<vmem>>, vector<8x32xf32>
    %105 = arith.truncf %104 : vector<8x32xf32> to vector<8x32xbf16>
    %c0_40 = arith.constant 0 : index
    %c0_41 = arith.constant 0 : index
    %106 = vector.load %arg7[%c0_40, %c0_41] : memref<32x32xbf16, #tpu.memory_space<vmem>>, vector<32x32xbf16>
    %cst_42 = arith.constant dense<0.000000e+00> : vector<8x32xf32>
    %107 = tpu.matmul %105, %106, %cst_42 {dimension_numbers = #tpu.dot_dimension_numbers<[1], [0], [0], [1], [0, 0, 1, 1], [], []>} : vector<8x32xbf16>, vector<32x32xbf16>, vector<8x32xf32> -> vector<8x32xf32>
    %108 = vector.extract_strided_slice %4 {offsets = [3, 0], sizes = [1, 32], strides = [1, 1]} : vector<6x32xf32> to vector<1x32xf32>
    %109 = vector.broadcast %108 : vector<1x32xf32> to vector<8x32xf32>
    %110 = arith.addf %107, %109 : vector<8x32xf32>
    %111 = arith.extf %1 : vector<8x32xbf16> to vector<8x32xf32>
    %112 = arith.addf %110, %111 : vector<8x32xf32>
    %113 = vector.extract_strided_slice %4 {offsets = [4, 0], sizes = [1, 32], strides = [1, 1]} : vector<6x32xf32> to vector<1x32xf32>
    %114 = vector.extract_strided_slice %4 {offsets = [5, 0], sizes = [1, 32], strides = [1, 1]} : vector<6x32xf32> to vector<1x32xf32>
    %cst_43 = arith.constant dense<0.000000e+00> : vector<8xf32>
    %115 = vector.multi_reduction <add>, %112, %cst_43 [1] : vector<8x32xf32> to vector<8xf32>
    %116 = vector.shape_cast %115 : vector<8xf32> to vector<8x1xf32>
    %cst_44 = arith.constant 3.200000e+01 : f32
    %117 = vector.broadcast %cst_44 : f32 to vector<8x1xf32>
    %118 = arith.divf %116, %117 : vector<8x1xf32>
    %119 = vector.broadcast %118 : vector<8x1xf32> to vector<8x32xf32>
    %120 = arith.subf %112, %119 : vector<8x32xf32>
    %121 = arith.mulf %120, %120 : vector<8x32xf32>
    %cst_45 = arith.constant dense<0.000000e+00> : vector<8xf32>
    %122 = vector.multi_reduction <add>, %121, %cst_45 [1] : vector<8x32xf32> to vector<8xf32>
    %123 = vector.shape_cast %122 : vector<8xf32> to vector<8x1xf32>
    %cst_46 = arith.constant 3.200000e+01 : f32
    %124 = vector.broadcast %cst_46 : f32 to vector<8x1xf32>
    %125 = arith.divf %123, %124 : vector<8x1xf32>
    %126 = vector.broadcast %118 : vector<8x1xf32> to vector<8x32xf32>
    %127 = arith.subf %112, %126 : vector<8x32xf32>
    %cst_47 = arith.constant 9.99999996E-13 : f32
    %128 = vector.broadcast %cst_47 : f32 to vector<8x1xf32>
    %129 = arith.addf %125, %128 : vector<8x1xf32>
    %130 = math.rsqrt %129 : vector<8x1xf32>
    %131 = vector.broadcast %130 : vector<8x1xf32> to vector<8x32xf32>
    %132 = arith.mulf %127, %131 : vector<8x32xf32>
    %133 = vector.broadcast %113 : vector<1x32xf32> to vector<8x32xf32>
    %134 = arith.mulf %132, %133 : vector<8x32xf32>
    %135 = vector.broadcast %114 : vector<1x32xf32> to vector<8x32xf32>
    %136 = arith.addf %134, %135 : vector<8x32xf32>
    %137 = arith.truncf %136 : vector<8x32xf32> to vector<8x32xbf16>
    %c0_48 = arith.constant 0 : index
    %c0_49 = arith.constant 0 : index
    %c0_50 = arith.constant 0 : index
    %138 = vector.load %arg9[%c0_48, %c0_49, %c0_50] : memref<1x8x32xbf16, #tpu.memory_space<vmem>>, vector<1x8x32xbf16>
    %139 = vector.shape_cast %138 : vector<1x8x32xbf16> to vector<8x32xbf16>
    %140 = vector.shape_cast %137 : vector<8x32xbf16> to vector<1x8x32xbf16>
    tpu.vector_store %arg9[%c0_48, %c0_49, %c0_50], %140 {strides = array<i32>} : memref<1x8x32xbf16, #tpu.memory_space<vmem>>, vector<1x8x32xbf16>,
    return
  }
  func.func @transform_0(%arg0: i32, %arg1: i32) -> (i32, i32, i32) {
    %c0_i32 = arith.constant 0 : i32
    %c0_i32_0 = arith.constant 0 : i32
    return %arg0, %arg1, %c0_i32 : i32, i32, i32
  }
  func.func @transform_1(%arg0: i32, %arg1: i32) -> (i32, i32, i32) {
    %c0_i32 = arith.constant 0 : i32
    %c0_i32_0 = arith.constant 0 : i32
    %c0_i32_1 = arith.constant 0 : i32
    return %arg0, %c0_i32, %c0_i32_0 : i32, i32, i32
  }
  func.func @transform_2(%arg0: i32, %arg1: i32) -> (i32, i32, i32, i32) {
    %c0_i32 = arith.constant 0 : i32
    %c0_i32_0 = arith.constant 0 : i32
    %c0_i32_1 = arith.constant 0 : i32
    %c0_i32_2 = arith.constant 0 : i32
    return %arg0, %c0_i32, %c0_i32_0, %c0_i32_1 : i32, i32, i32, i32
  }
  func.func @transform_3(%arg0: i32, %arg1: i32) -> (i32, i32) {
    %c0_i32 = arith.constant 0 : i32
    %c0_i32_0 = arith.constant 0 : i32
    %c0_i32_1 = arith.constant 0 : i32
    return %c0_i32, %c0_i32_0 : i32, i32
  }
  func.func @transform_4(%arg0: i32, %arg1: i32) -> (i32, i32) {
    %c0_i32 = arith.constant 0 : i32
    %c0_i32_0 = arith.constant 0 : i32
    %c0_i32_1 = arith.constant 0 : i32
    return %c0_i32, %c0_i32_0 : i32, i32
  }
  func.func @transform_5(%arg0: i32, %arg1: i32) -> (i32, i32) {
    %c0_i32 = arith.constant 0 : i32
    %c0_i32_0 = arith.constant 0 : i32
    %c0_i32_1 = arith.constant 0 : i32
    return %c0_i32, %c0_i32_0 : i32, i32
  }
  func.func @transform_6(%arg0: i32, %arg1: i32) -> (i32, i32) {
    %c0_i32 = arith.constant 0 : i32
    %c0_i32_0 = arith.constant 0 : i32
    %c0_i32_1 = arith.constant 0 : i32
    return %c0_i32, %c0_i32_0 : i32, i32
  }
  func.func @transform_7(%arg0: i32, %arg1: i32) -> (i32, i32, i32) {
    %c0_i32 = arith.constant 0 : i32
    %c0_i32_0 = arith.constant 0 : i32
    return %arg0, %arg1, %c0_i32 : i32, i32, i32
  }
}

module attributes {stable_mosaic.version = 11 : i64} {
  func.func @_mha_ln_kernel(%arg0: i32, %arg1: i32, %arg2: memref<1x8x32xbf16, #tpu.memory_space<vmem>>, %arg3: memref<1x8x32xbf16, #tpu.memory_space<vmem>>, %arg4: memref<1x1x8x8xbf16, #tpu.memory_space<vmem>>, %arg5: memref<32x32xbf16, #tpu.memory_space<vmem>>, %arg6: memref<32x64xbf16, #tpu.memory_space<vmem>>, %arg7: memref<32x32xbf16, #tpu.memory_space<vmem>>, %arg8: memref<6x32xf32, #tpu.memory_space<vmem>>, %arg9: memref<1x8x32xbf16, #tpu.memory_space<vmem>>, %arg10: memref<8x32xf32, #tpu.memory_space<vmem>>) attributes {dimension_semantics = [#tpu.dimension_semantics<parallel>, #tpu.dimension_semantics<parallel>], iteration_bounds = array<i64: 2, 1>, scalar_prefetch = 0 : i64, scratch_operands = 1 : i64, tpu.core_type = #tpu.core_type<tc>, window_params = [{transform_indices = @transform_0, window_bounds = array<i64: 1, 8, 32>}, {transform_indices = @transform_1, window_bounds = array<i64: 1, 8, 32>}, {transform_indices = @transform_2, window_bounds = array<i64: 1, 1, 8, 8>}, {pipeline_mode = #tpu.pipeline_mode<synchronous>, transform_indices = @transform_3, window_bounds = array<i64: 32, 32>}, {pipeline_mode = #tpu.pipeline_mode<synchronous>, transform_indices = @transform_4, window_bounds = array<i64: 32, 64>}, {pipeline_mode = #tpu.pipeline_mode<synchronous>, transform_indices = @transform_5, window_bounds = array<i64: 32, 32>}, {pipeline_mode = #tpu.pipeline_mode<synchronous>, transform_indices = @transform_6, window_bounds = array<i64: 6, 32>}, {transform_indices = @transform_7, window_bounds = array<i64: 1, 8, 32>}]} {
    %c0 = arith.constant 0 : index
    %c0_0 = arith.constant 0 : index
    %c0_1 = arith.constant 0 : index
    %0 = vector.load %arg2[%c0, %c0_0, %c0_1] : memref<1x8x32xbf16, #tpu.memory_space<vmem>>, vector<1x8x32xbf16>
    %1 = vector.shape_cast %0 : vector<1x8x32xbf16> to vector<8x32xbf16>
    %c0_2 = arith.constant 0 : index
    %c0_3 = arith.constant 0 : index
    %c0_4 = arith.constant 0 : index
    %2 = vector.load %arg3[%c0_2, %c0_3, %c0_4] : memref<1x8x32xbf16, #tpu.memory_space<vmem>>, vector<1x8x32xbf16>
    %3 = vector.shape_cast %2 : vector<1x8x32xbf16> to vector<8x32xbf16>
    %c0_5 = arith.constant 0 : index
    %c0_6 = arith.constant 0 : index
    %4 = vector.load %arg8[%c0_5, %c0_6] : memref<6x32xf32, #tpu.memory_space<vmem>>, vector<6x32xf32>
    %c0_7 = arith.constant 0 : index
    %c0_8 = arith.constant 0 : index
    %c0_9 = arith.constant 0 : index
    %c0_10 = arith.constant 0 : index
    %5 = vector.load %arg4[%c0_7, %c0_8, %c0_9, %c0_10] : memref<1x1x8x8xbf16, #tpu.memory_space<vmem>>, vector<1x1x8x8xbf16>
    %6 = vector.shape_cast %5 : vector<1x1x8x8xbf16> to vector<8x8xbf16>
    %7 = arith.extf %6 : vector<8x8xbf16> to vector<8x8xf32>
    %c0_11 = arith.constant 0 : index
    %c0_12 = arith.constant 0 : index
    %8 = vector.load %arg5[%c0_11, %c0_12] : memref<32x32xbf16, #tpu.memory_space<vmem>>, vector<32x32xbf16>
    %cst = arith.constant dense<0.000000e+00> : vector<8x32xf32>
    %9 = tpu.matmul %1, %8, %cst {dimension_numbers = #tpu.dot_dimension_numbers<[1], [0], [0], [1], [0, 0, 1, 1], [], []>} : vector<8x32xbf16>, vector<32x32xbf16>, vector<8x32xf32> -> vector<8x32xf32>
    %10 = vector.extract_strided_slice %4 {offsets = [0, 0], sizes = [1, 32], strides = [1, 1]} : vector<6x32xf32> to vector<1x32xf32>
    %11 = vector.broadcast %10 : vector<1x32xf32> to vector<8x32xf32>
    %12 = arith.addf %9, %11 : vector<8x32xf32>
    %cst_13 = arith.constant 0.353553385 : f32
    %13 = vector.broadcast %cst_13 : f32 to vector<8x32xf32>
    %14 = arith.mulf %12, %13 : vector<8x32xf32>
    %c0_14 = arith.constant 0 : index
    %c0_15 = arith.constant 0 : index
    %15 = vector.load %arg6[%c0_14, %c0_15] : memref<32x64xbf16, #tpu.memory_space<vmem>>, vector<32x64xbf16>
    %cst_16 = arith.constant dense<0.000000e+00> : vector<8x64xf32>
    %16 = tpu.matmul %3, %15, %cst_16 {dimension_numbers = #tpu.dot_dimension_numbers<[1], [0], [0], [1], [0, 0, 1, 1], [], []>} : vector<8x32xbf16>, vector<32x64xbf16>, vector<8x64xf32> -> vector<8x64xf32>
    %17 = vector.extract_strided_slice %16 {offsets = [0, 0], sizes = [8, 32], strides = [1, 1]} : vector<8x64xf32> to vector<8x32xf32>
    %18 = vector.extract_strided_slice %4 {offsets = [1, 0], sizes = [1, 32], strides = [1, 1]} : vector<6x32xf32> to vector<1x32xf32>
    %19 = vector.broadcast %18 : vector<1x32xf32> to vector<8x32xf32>
    %20 = arith.addf %17, %19 : vector<8x32xf32>
    %21 = vector.extract_strided_slice %16 {offsets = [0, 32], sizes = [8, 32], strides = [1, 1]} : vector<8x64xf32> to vector<8x32xf32>
    %22 = vector.extract_strided_slice %4 {offsets = [2, 0], sizes = [1, 32], strides = [1, 1]} : vector<6x32xf32> to vector<1x32xf32>
    %23 = vector.broadcast %22 : vector<1x32xf32> to vector<8x32xf32>
    %24 = arith.addf %21, %23 : vector<8x32xf32>
    %25 = arith.truncf %14 : vector<8x32xf32> to vector<8x32xbf16>
    %26 = arith.truncf %20 : vector<8x32xf32> to vector<8x32xbf16>
    %27 = arith.truncf %24 : vector<8x32xf32> to vector<8x32xbf16>
    %28 = vector.extract_strided_slice %25 {offsets = [0, 0], sizes = [8, 8], strides = [1, 1]} : vector<8x32xbf16> to vector<8x8xbf16>
    %29 = vector.extract_strided_slice %26 {offsets = [0, 0], sizes = [8, 8], strides = [1, 1]} : vector<8x32xbf16> to vector<8x8xbf16>
    %cst_17 = arith.constant dense<0.000000e+00> : vector<8x8xf32>
    %30 = tpu.matmul %28, %29, %cst_17 {dimension_numbers = #tpu.dot_dimension_numbers<[1], [1], [0], [0], [0, 0, 1, 0], [], []>} : vector<8x8xbf16>, vector<8x8xbf16>, vector<8x8xf32> -> vector<8x8xf32>
    %31 = arith.addf %30, %7 : vector<8x8xf32>
    %cst_18 = arith.constant dense<0xFF800000> : vector<8xf32>
    %32 = vector.multi_reduction <maximumf>, %31, %cst_18 [1] : vector<8x8xf32> to vector<8xf32>
    %33 = vector.shape_cast %32 : vector<8xf32> to vector<8x1xf32>
    %34 = vector.broadcast %33 : vector<8x1xf32> to vector<8x8xf32>
    %35 = arith.subf %31, %34 : vector<8x8xf32>
    %36 = math.exp %35 : vector<8x8xf32>
    %cst_19 = arith.constant dense<0.000000e+00> : vector<8xf32>
    %37 = vector.multi_reduction <add>, %36, %cst_19 [1] : vector<8x8xf32> to vector<8xf32>
    %38 = vector.shape_cast %37 : vector<8xf32> to vector<8x1xf32>
    %39 = tpu.reciprocal %38 {approx = true} : vector<8x1xf32> -> vector<8x1xf32>
    %40 = vector.broadcast %39 : vector<8x1xf32> to vector<8x8xf32>
    %41 = arith.mulf %36, %40 : vector<8x8xf32>
    %42 = arith.truncf %41 : vector<8x8xf32> to vector<8x8xbf16>
    %43 = vector.extract_strided_slice %27 {offsets = [0, 0], sizes = [8, 8], strides = [1, 1]} : vector<8x32xbf16> to vector<8x8xbf16>
    %cst_20 = arith.constant dense<0.000000e+00> : vector<8x8xf32>
    %44 = tpu.matmul %42, %43, %cst_20 {dimension_numbers = #tpu.dot_dimension_numbers<[1], [0], [0], [1], [0, 0, 1, 1], [], []>} : vector<8x8xbf16>, vector<8x8xbf16>, vector<8x8xf32> -> vector<8x8xf32>
    %c0_21 = arith.constant 0 : index
    %c0_22 = arith.constant 0 : index
    %45 = vector.load %arg10[%c0_21, %c0_22] : memref<8x32xf32, #tpu.memory_space<vmem>>, vector<8x8xf32>
    tpu.vector_store %arg10[%c0_21, %c0_22], %44 {strides = array<i32>} : memref<8x32xf32, #tpu.memory_space<vmem>>, vector<8x8xf32>,
    %46 = vector.extract_strided_slice %25 {offsets = [0, 8], sizes = [8, 8], strides = [1, 1]} : vector<8x32xbf16> to vector<8x8xbf16>
    %47 = vector.extract_strided_slice %26 {offsets = [0, 8], sizes = [8, 8], strides = [1, 1]} : vector<8x32xbf16> to vector<8x8xbf16>
    %cst_23 = arith.constant dense<0.000000e+00> : vector<8x8xf32>
    %48 = tpu.matmul %46, %47, %cst_23 {dimension_numbers = #tpu.dot_dimension_numbers<[1], [1], [0], [0], [0, 0, 1, 0], [], []>} : vector<8x8xbf16>, vector<8x8xbf16>, vector<8x8xf32> -> vector<8x8xf32>
    %49 = arith.addf %48, %7 : vector<8x8xf32>
    %cst_24 = arith.constant dense<0xFF800000> : vector<8xf32>
    %50 = vector.multi_reduction <maximumf>, %49, %cst_24 [1] : vector<8x8xf32> to vector<8xf32>
    %51 = vector.shape_cast %50 : vector<8xf32> to vector<8x1xf32>
    %52 = vector.broadcast %51 : vector<8x1xf32> to vector<8x8xf32>
    %53 = arith.subf %49, %52 : vector<8x8xf32>
    %54 = math.exp %53 : vector<8x8xf32>
    %cst_25 = arith.constant dense<0.000000e+00> : vector<8xf32>
    %55 = vector.multi_reduction <add>, %54, %cst_25 [1] : vector<8x8xf32> to vector<8xf32>
    %56 = vector.shape_cast %55 : vector<8xf32> to vector<8x1xf32>
    %57 = tpu.reciprocal %56 {approx = true} : vector<8x1xf32> -> vector<8x1xf32>
    %58 = vector.broadcast %57 : vector<8x1xf32> to vector<8x8xf32>
    %59 = arith.mulf %54, %58 : vector<8x8xf32>
    %60 = arith.truncf %59 : vector<8x8xf32> to vector<8x8xbf16>
    %61 = vector.extract_strided_slice %27 {offsets = [0, 8], sizes = [8, 8], strides = [1, 1]} : vector<8x32xbf16> to vector<8x8xbf16>
    %cst_26 = arith.constant dense<0.000000e+00> : vector<8x8xf32>
    %62 = tpu.matmul %60, %61, %cst_26 {dimension_numbers = #tpu.dot_dimension_numbers<[1], [0], [0], [1], [0, 0, 1, 1], [], []>} : vector<8x8xbf16>, vector<8x8xbf16>, vector<8x8xf32> -> vector<8x8xf32>
    %c0_27 = arith.constant 0 : index
    %c8 = arith.constant 8 : index
    %63 = vector.load %arg10[%c0_27, %c8] : memref<8x32xf32, #tpu.memory_space<vmem>>, vector<8x8xf32>
    tpu.vector_store %arg10[%c0_27, %c8], %62 {strides = array<i32>} : memref<8x32xf32, #tpu.memory_space<vmem>>, vector<8x8xf32>,
    %64 = vector.extract_strided_slice %25 {offsets = [0, 16], sizes = [8, 8], strides = [1, 1]} : vector<8x32xbf16> to vector<8x8xbf16>
    %65 = vector.extract_strided_slice %26 {offsets = [0, 16], sizes = [8, 8], strides = [1, 1]} : vector<8x32xbf16> to vector<8x8xbf16>
    %cst_28 = arith.constant dense<0.000000e+00> : vector<8x8xf32>
    %66 = tpu.matmul %64, %65, %cst_28 {dimension_numbers = #tpu.dot_dimension_numbers<[1], [1], [0], [0], [0, 0, 1, 0], [], []>} : vector<8x8xbf16>, vector<8x8xbf16>, vector<8x8xf32> -> vector<8x8xf32>
    %67 = arith.addf %66, %7 : vector<8x8xf32>
    %cst_29 = arith.constant dense<0xFF800000> : vector<8xf32>
    %68 = vector.multi_reduction <maximumf>, %67, %cst_29 [1] : vector<8x8xf32> to vector<8xf32>
    %69 = vector.shape_cast %68 : vector<8xf32> to vector<8x1xf32>
    %70 = vector.broadcast %69 : vector<8x1xf32> to vector<8x8xf32>
    %71 = arith.subf %67, %70 : vector<8x8xf32>
    %72 = math.exp %71 : vector<8x8xf32>
    %cst_30 = arith.constant dense<0.000000e+00> : vector<8xf32>
    %73 = vector.multi_reduction <add>, %72, %cst_30 [1] : vector<8x8xf32> to vector<8xf32>
    %74 = vector.shape_cast %73 : vector<8xf32> to vector<8x1xf32>
    %75 = tpu.reciprocal %74 {approx = true} : vector<8x1xf32> -> vector<8x1xf32>
    %76 = vector.broadcast %75 : vector<8x1xf32> to vector<8x8xf32>
    %77 = arith.mulf %72, %76 : vector<8x8xf32>
    %78 = arith.truncf %77 : vector<8x8xf32> to vector<8x8xbf16>
    %79 = vector.extract_strided_slice %27 {offsets = [0, 16], sizes = [8, 8], strides = [1, 1]} : vector<8x32xbf16> to vector<8x8xbf16>
    %cst_31 = arith.constant dense<0.000000e+00> : vector<8x8xf32>
    %80 = tpu.matmul %78, %79, %cst_31 {dimension_numbers = #tpu.dot_dimension_numbers<[1], [0], [0], [1], [0, 0, 1, 1], [], []>} : vector<8x8xbf16>, vector<8x8xbf16>, vector<8x8xf32> -> vector<8x8xf32>
    %c0_32 = arith.constant 0 : index
    %c16 = arith.constant 16 : index
    %81 = vector.load %arg10[%c0_32, %c16] : memref<8x32xf32, #tpu.memory_space<vmem>>, vector<8x8xf32>
    tpu.vector_store %arg10[%c0_32, %c16], %80 {strides = array<i32>} : memref<8x32xf32, #tpu.memory_space<vmem>>, vector<8x8xf32>,
    %82 = vector.extract_strided_slice %25 {offsets = [0, 24], sizes = [8, 8], strides = [1, 1]} : vector<8x32xbf16> to vector<8x8xbf16>
    %83 = vector.extract_strided_slice %26 {offsets = [0, 24], sizes = [8, 8], strides = [1, 1]} : vector<8x32xbf16> to vector<8x8xbf16>
    %cst_33 = arith.constant dense<0.000000e+00> : vector<8x8xf32>
    %84 = tpu.matmul %82, %83, %cst_33 {dimension_numbers = #tpu.dot_dimension_numbers<[1], [1], [0], [0], [0, 0, 1, 0], [], []>} : vector<8x8xbf16>, vector<8x8xbf16>, vector<8x8xf32> -> vector<8x8xf32>
    %85 = arith.addf %84, %7 : vector<8x8xf32>
    %cst_34 = arith.constant dense<0xFF800000> : vector<8xf32>
    %86 = vector.multi_reduction <maximumf>, %85, %cst_34 [1] : vector<8x8xf32> to vector<8xf32>
    %87 = vector.shape_cast %86 : vector<8xf32> to vector<8x1xf32>
    %88 = vector.broadcast %87 : vector<8x1xf32> to vector<8x8xf32>
    %89 = arith.subf %85, %88 : vector<8x8xf32>
    %90 = math.exp %89 : vector<8x8xf32>
    %cst_35 = arith.constant dense<0.000000e+00> : vector<8xf32>
    %91 = vector.multi_reduction <add>, %90, %cst_35 [1] : vector<8x8xf32> to vector<8xf32>
    %92 = vector.shape_cast %91 : vector<8xf32> to vector<8x1xf32>
    %93 = tpu.reciprocal %92 {approx = true} : vector<8x1xf32> -> vector<8x1xf32>
    %94 = vector.broadcast %93 : vector<8x1xf32> to vector<8x8xf32>
    %95 = arith.mulf %90, %94 : vector<8x8xf32>
    %96 = arith.truncf %95 : vector<8x8xf32> to vector<8x8xbf16>
    %97 = vector.extract_strided_slice %27 {offsets = [0, 24], sizes = [8, 8], strides = [1, 1]} : vector<8x32xbf16> to vector<8x8xbf16>
    %cst_36 = arith.constant dense<0.000000e+00> : vector<8x8xf32>
    %98 = tpu.matmul %96, %97, %cst_36 {dimension_numbers = #tpu.dot_dimension_numbers<[1], [0], [0], [1], [0, 0, 1, 1], [], []>} : vector<8x8xbf16>, vector<8x8xbf16>, vector<8x8xf32> -> vector<8x8xf32>
    %c0_37 = arith.constant 0 : index
    %c24 = arith.constant 24 : index
    %99 = vector.load %arg10[%c0_37, %c24] : memref<8x32xf32, #tpu.memory_space<vmem>>, vector<8x8xf32>
    tpu.vector_store %arg10[%c0_37, %c24], %98 {strides = array<i32>} : memref<8x32xf32, #tpu.memory_space<vmem>>, vector<8x8xf32>,
    %c0_38 = arith.constant 0 : index
    %c0_39 = arith.constant 0 : index
    %100 = vector.load %arg10[%c0_38, %c0_39] : memref<8x32xf32, #tpu.memory_space<vmem>>, vector<8x32xf32>
    %101 = arith.truncf %100 : vector<8x32xf32> to vector<8x32xbf16>
    %c0_40 = arith.constant 0 : index
    %c0_41 = arith.constant 0 : index
    %102 = vector.load %arg7[%c0_40, %c0_41] : memref<32x32xbf16, #tpu.memory_space<vmem>>, vector<32x32xbf16>
    %cst_42 = arith.constant dense<0.000000e+00> : vector<8x32xf32>
    %103 = tpu.matmul %101, %102, %cst_42 {dimension_numbers = #tpu.dot_dimension_numbers<[1], [0], [0], [1], [0, 0, 1, 1], [], []>} : vector<8x32xbf16>, vector<32x32xbf16>, vector<8x32xf32> -> vector<8x32xf32>
    %104 = vector.extract_strided_slice %4 {offsets = [3, 0], sizes = [1, 32], strides = [1, 1]} : vector<6x32xf32> to vector<1x32xf32>
    %105 = vector.broadcast %104 : vector<1x32xf32> to vector<8x32xf32>
    %106 = arith.addf %103, %105 : vector<8x32xf32>
    %107 = arith.extf %1 : vector<8x32xbf16> to vector<8x32xf32>
    %108 = arith.addf %106, %107 : vector<8x32xf32>
    %109 = vector.extract_strided_slice %4 {offsets = [4, 0], sizes = [1, 32], strides = [1, 1]} : vector<6x32xf32> to vector<1x32xf32>
    %110 = vector.extract_strided_slice %4 {offsets = [5, 0], sizes = [1, 32], strides = [1, 1]} : vector<6x32xf32> to vector<1x32xf32>
    %cst_43 = arith.constant dense<0.000000e+00> : vector<8xf32>
    %111 = vector.multi_reduction <add>, %108, %cst_43 [1] : vector<8x32xf32> to vector<8xf32>
    %112 = vector.shape_cast %111 : vector<8xf32> to vector<8x1xf32>
    %cst_44 = arith.constant 3.200000e+01 : f32
    %113 = vector.broadcast %cst_44 : f32 to vector<8x1xf32>
    %114 = arith.divf %112, %113 : vector<8x1xf32>
    %115 = vector.broadcast %114 : vector<8x1xf32> to vector<8x32xf32>
    %116 = arith.subf %108, %115 : vector<8x32xf32>
    %117 = arith.mulf %116, %116 : vector<8x32xf32>
    %cst_45 = arith.constant dense<0.000000e+00> : vector<8xf32>
    %118 = vector.multi_reduction <add>, %117, %cst_45 [1] : vector<8x32xf32> to vector<8xf32>
    %119 = vector.shape_cast %118 : vector<8xf32> to vector<8x1xf32>
    %cst_46 = arith.constant 3.200000e+01 : f32
    %120 = vector.broadcast %cst_46 : f32 to vector<8x1xf32>
    %121 = arith.divf %119, %120 : vector<8x1xf32>
    %122 = vector.broadcast %114 : vector<8x1xf32> to vector<8x32xf32>
    %123 = arith.subf %108, %122 : vector<8x32xf32>
    %cst_47 = arith.constant 9.99999996E-13 : f32
    %124 = vector.broadcast %cst_47 : f32 to vector<8x1xf32>
    %125 = arith.addf %121, %124 : vector<8x1xf32>
    %126 = math.rsqrt %125 : vector<8x1xf32>
    %127 = vector.broadcast %126 : vector<8x1xf32> to vector<8x32xf32>
    %128 = arith.mulf %123, %127 : vector<8x32xf32>
    %129 = vector.broadcast %109 : vector<1x32xf32> to vector<8x32xf32>
    %130 = arith.mulf %128, %129 : vector<8x32xf32>
    %131 = vector.broadcast %110 : vector<1x32xf32> to vector<8x32xf32>
    %132 = arith.addf %130, %131 : vector<8x32xf32>
    %133 = arith.truncf %132 : vector<8x32xf32> to vector<8x32xbf16>
    %c0_48 = arith.constant 0 : index
    %c0_49 = arith.constant 0 : index
    %c0_50 = arith.constant 0 : index
    %134 = vector.load %arg9[%c0_48, %c0_49, %c0_50] : memref<1x8x32xbf16, #tpu.memory_space<vmem>>, vector<1x8x32xbf16>
    %135 = vector.shape_cast %134 : vector<1x8x32xbf16> to vector<8x32xbf16>
    %136 = vector.shape_cast %133 : vector<8x32xbf16> to vector<1x8x32xbf16>
    tpu.vector_store %arg9[%c0_48, %c0_49, %c0_50], %136 {strides = array<i32>} : memref<1x8x32xbf16, #tpu.memory_space<vmem>>, vector<1x8x32xbf16>,
    return
  }
  func.func @transform_0(%arg0: i32, %arg1: i32) -> (i32, i32, i32) {
    %c0_i32 = arith.constant 0 : i32
    %c0_i32_0 = arith.constant 0 : i32
    return %arg0, %arg1, %c0_i32 : i32, i32, i32
  }
  func.func @transform_1(%arg0: i32, %arg1: i32) -> (i32, i32, i32) {
    %c0_i32 = arith.constant 0 : i32
    %c0_i32_0 = arith.constant 0 : i32
    %c0_i32_1 = arith.constant 0 : i32
    return %arg0, %c0_i32, %c0_i32_0 : i32, i32, i32
  }
  func.func @transform_2(%arg0: i32, %arg1: i32) -> (i32, i32, i32, i32) {
    %c0_i32 = arith.constant 0 : i32
    %c0_i32_0 = arith.constant 0 : i32
    %c0_i32_1 = arith.constant 0 : i32
    return %arg0, %c0_i32, %arg1, %c0_i32_0 : i32, i32, i32, i32
  }
  func.func @transform_3(%arg0: i32, %arg1: i32) -> (i32, i32) {
    %c0_i32 = arith.constant 0 : i32
    %c0_i32_0 = arith.constant 0 : i32
    %c0_i32_1 = arith.constant 0 : i32
    return %c0_i32, %c0_i32_0 : i32, i32
  }
  func.func @transform_4(%arg0: i32, %arg1: i32) -> (i32, i32) {
    %c0_i32 = arith.constant 0 : i32
    %c0_i32_0 = arith.constant 0 : i32
    %c0_i32_1 = arith.constant 0 : i32
    return %c0_i32, %c0_i32_0 : i32, i32
  }
  func.func @transform_5(%arg0: i32, %arg1: i32) -> (i32, i32) {
    %c0_i32 = arith.constant 0 : i32
    %c0_i32_0 = arith.constant 0 : i32
    %c0_i32_1 = arith.constant 0 : i32
    return %c0_i32, %c0_i32_0 : i32, i32
  }
  func.func @transform_6(%arg0: i32, %arg1: i32) -> (i32, i32) {
    %c0_i32 = arith.constant 0 : i32
    %c0_i32_0 = arith.constant 0 : i32
    %c0_i32_1 = arith.constant 0 : i32
    return %c0_i32, %c0_i32_0 : i32, i32
  }
  func.func @transform_7(%arg0: i32, %arg1: i32) -> (i32, i32, i32) {
    %c0_i32 = arith.constant 0 : i32
    %c0_i32_0 = arith.constant 0 : i32
    return %arg0, %arg1, %c0_i32 : i32, i32, i32
  }
}

module attributes {stable_mosaic.version = 11 : i64} {
  func.func @_ffn_ln_kernel(%arg0: i32, %arg1: i32, %arg2: memref<16x32xbf16, #tpu.memory_space<vmem>>, %arg3: memref<32x64xbf16, #tpu.memory_space<vmem>>, %arg4: memref<1x64xf32, #tpu.memory_space<vmem>>, %arg5: memref<64x32xbf16, #tpu.memory_space<vmem>>, %arg6: memref<3x32xf32, #tpu.memory_space<vmem>>, %arg7: memref<16x32xbf16, #tpu.memory_space<vmem>>, %arg8: memref<16x32xf32, #tpu.memory_space<vmem>>) attributes {dimension_semantics = [#tpu.dimension_semantics<parallel>, #tpu.dimension_semantics<arbitrary>], iteration_bounds = array<i64: 1, 1>, scalar_prefetch = 0 : i64, scratch_operands = 1 : i64, tpu.core_type = #tpu.core_type<tc>, window_params = [{transform_indices = @transform_0, window_bounds = array<i64: 16, 32>}, {transform_indices = @transform_1, window_bounds = array<i64: 32, 64>}, {transform_indices = @transform_2, window_bounds = array<i64: 1, 64>}, {transform_indices = @transform_3, window_bounds = array<i64: 64, 32>}, {pipeline_mode = #tpu.pipeline_mode<synchronous>, transform_indices = @transform_4, window_bounds = array<i64: 3, 32>}, {transform_indices = @transform_5, window_bounds = array<i64: 16, 32>}]} {
    %c0_i32 = arith.constant 0 : i32
    %0 = arith.cmpi eq, %arg1, %c0_i32 : i32
    %1 = arith.extui %0 : i1 to i32
    %c0_i32_0 = arith.constant 0 : i32
    %2 = arith.cmpi ne, %1, %c0_i32_0 : i32
    scf.if %2 {
      %cst_16 = arith.constant 0.000000e+00 : f32
      %20 = vector.broadcast %cst_16 : f32 to vector<16x32xf32>
      %c0_17 = arith.constant 0 : index
      %c0_18 = arith.constant 0 : index
      %21 = vector.load %arg8[%c0_17, %c0_18] : memref<16x32xf32, #tpu.memory_space<vmem>>, vector<16x32xf32>
      tpu.vector_store %arg8[%c0_17, %c0_18], %20 {strides = array<i32>} : memref<16x32xf32, #tpu.memory_space<vmem>>, vector<16x32xf32>,
    } else {
    }
    %c0 = arith.constant 0 : index
    %c0_1 = arith.constant 0 : index
    %3 = vector.load %arg2[%c0, %c0_1] : memref<16x32xbf16, #tpu.memory_space<vmem>>, vector<16x32xbf16>
    %c0_2 = arith.constant 0 : index
    %c0_3 = arith.constant 0 : index
    %4 = vector.load %arg3[%c0_2, %c0_3] : memref<32x64xbf16, #tpu.memory_space<vmem>>, vector<32x64xbf16>
    %cst = arith.constant dense<0.000000e+00> : vector<16x64xf32>
    %5 = tpu.matmul %3, %4, %cst {dimension_numbers = #tpu.dot_dimension_numbers<[1], [0], [0], [1], [0, 0, 1, 1], [], []>} : vector<16x32xbf16>, vector<32x64xbf16>, vector<16x64xf32> -> vector<16x64xf32>
    %c0_4 = arith.constant 0 : index
    %c0_5 = arith.constant 0 : index
    %6 = vector.load %arg4[%c0_4, %c0_5] : memref<1x64xf32, #tpu.memory_space<vmem>>, vector<1x64xf32>
    %7 = vector.broadcast %6 : vector<1x64xf32> to vector<16x64xf32>
    %8 = arith.addf %5, %7 : vector<16x64xf32>
    %cst_6 = arith.constant 0.000000e+00 : f32
    %9 = vector.broadcast %cst_6 : f32 to vector<16x64xf32>
    %10 = arith.maximumf %8, %9 : vector<16x64xf32>
    %c0_7 = arith.constant 0 : index
    %c0_8 = arith.constant 0 : index
    %11 = vector.load %arg8[%c0_7, %c0_8] : memref<16x32xf32, #tpu.memory_space<vmem>>, vector<16x32xf32>
    %12 = arith.truncf %10 : vector<16x64xf32> to vector<16x64xbf16>
    %c0_9 = arith.constant 0 : index
    %c0_10 = arith.constant 0 : index
    %13 = vector.load %arg5[%c0_9, %c0_10] : memref<64x32xbf16, #tpu.memory_space<vmem>>, vector<64x32xbf16>
    %cst_11 = arith.constant dense<0.000000e+00> : vector<16x32xf32>
    %14 = tpu.matmul %12, %13, %cst_11 {dimension_numbers = #tpu.dot_dimension_numbers<[1], [0], [0], [1], [0, 0, 1, 1], [], []>} : vector<16x64xbf16>, vector<64x32xbf16>, vector<16x32xf32> -> vector<16x32xf32>
    %15 = arith.addf %11, %14 : vector<16x32xf32>
    %c0_12 = arith.constant 0 : index
    %c0_13 = arith.constant 0 : index
    %16 = vector.load %arg8[%c0_12, %c0_13] : memref<16x32xf32, #tpu.memory_space<vmem>>, vector<16x32xf32>
    tpu.vector_store %arg8[%c0_12, %c0_13], %15 {strides = array<i32>} : memref<16x32xf32, #tpu.memory_space<vmem>>, vector<16x32xf32>,
    %c0_i32_14 = arith.constant 0 : i32
    %17 = arith.cmpi eq, %arg1, %c0_i32_14 : i32
    %18 = arith.extui %17 : i1 to i32
    %c0_i32_15 = arith.constant 0 : i32
    %19 = arith.cmpi ne, %18, %c0_i32_15 : i32
    scf.if %19 {
      %c0_16 = arith.constant 0 : index
      %c0_17 = arith.constant 0 : index
      %20 = vector.load %arg6[%c0_16, %c0_17] : memref<3x32xf32, #tpu.memory_space<vmem>>, vector<3x32xf32>
      %c0_18 = arith.constant 0 : index
      %c0_19 = arith.constant 0 : index
      %21 = vector.load %arg8[%c0_18, %c0_19] : memref<16x32xf32, #tpu.memory_space<vmem>>, vector<16x32xf32>
      %22 = vector.extract_strided_slice %20 {offsets = [0, 0], sizes = [1, 32], strides = [1, 1]} : vector<3x32xf32> to vector<1x32xf32>
      %23 = vector.broadcast %22 : vector<1x32xf32> to vector<16x32xf32>
      %24 = arith.addf %21, %23 : vector<16x32xf32>
      %25 = arith.extf %3 : vector<16x32xbf16> to vector<16x32xf32>
      %26 = arith.addf %24, %25 : vector<16x32xf32>
      %27 = vector.extract_strided_slice %20 {offsets = [1, 0], sizes = [1, 32], strides = [1, 1]} : vector<3x32xf32> to vector<1x32xf32>
      %28 = vector.extract_strided_slice %20 {offsets = [2, 0], sizes = [1, 32], strides = [1, 1]} : vector<3x32xf32> to vector<1x32xf32>
      %cst_20 = arith.constant dense<0.000000e+00> : vector<16xf32>
      %29 = vector.multi_reduction <add>, %26, %cst_20 [1] : vector<16x32xf32> to vector<16xf32>
      %30 = vector.shape_cast %29 : vector<16xf32> to vector<16x1xf32>
      %cst_21 = arith.constant 3.200000e+01 : f32
      %31 = vector.broadcast %cst_21 : f32 to vector<16x1xf32>
      %32 = arith.divf %30, %31 : vector<16x1xf32>
      %33 = vector.broadcast %32 : vector<16x1xf32> to vector<16x32xf32>
      %34 = arith.subf %26, %33 : vector<16x32xf32>
      %35 = arith.mulf %34, %34 : vector<16x32xf32>
      %cst_22 = arith.constant dense<0.000000e+00> : vector<16xf32>
      %36 = vector.multi_reduction <add>, %35, %cst_22 [1] : vector<16x32xf32> to vector<16xf32>
      %37 = vector.shape_cast %36 : vector<16xf32> to vector<16x1xf32>
      %cst_23 = arith.constant 3.200000e+01 : f32
      %38 = vector.broadcast %cst_23 : f32 to vector<16x1xf32>
      %39 = arith.divf %37, %38 : vector<16x1xf32>
      %40 = vector.broadcast %32 : vector<16x1xf32> to vector<16x32xf32>
      %41 = arith.subf %26, %40 : vector<16x32xf32>
      %cst_24 = arith.constant 9.99999996E-13 : f32
      %42 = vector.broadcast %cst_24 : f32 to vector<16x1xf32>
      %43 = arith.addf %39, %42 : vector<16x1xf32>
      %44 = math.rsqrt %43 : vector<16x1xf32>
      %45 = vector.broadcast %44 : vector<16x1xf32> to vector<16x32xf32>
      %46 = arith.mulf %41, %45 : vector<16x32xf32>
      %47 = vector.broadcast %27 : vector<1x32xf32> to vector<16x32xf32>
      %48 = arith.mulf %46, %47 : vector<16x32xf32>
      %49 = vector.broadcast %28 : vector<1x32xf32> to vector<16x32xf32>
      %50 = arith.addf %48, %49 : vector<16x32xf32>
      %51 = arith.truncf %50 : vector<16x32xf32> to vector<16x32xbf16>
      %c0_25 = arith.constant 0 : index
      %c0_26 = arith.constant 0 : index
      %52 = vector.load %arg7[%c0_25, %c0_26] : memref<16x32xbf16, #tpu.memory_space<vmem>>, vector<16x32xbf16>
      tpu.vector_store %arg7[%c0_25, %c0_26], %51 {strides = array<i32>} : memref<16x32xbf16, #tpu.memory_space<vmem>>, vector<16x32xbf16>,
    } else {
    }
    return
  }
  func.func @transform_0(%arg0: i32, %arg1: i32) -> (i32, i32) {
    %c0_i32 = arith.constant 0 : i32
    %c0_i32_0 = arith.constant 0 : i32
    return %arg0, %c0_i32 : i32, i32
  }
  func.func @transform_1(%arg0: i32, %arg1: i32) -> (i32, i32) {
    %c0_i32 = arith.constant 0 : i32
    %c0_i32_0 = arith.constant 0 : i32
    return %c0_i32, %arg1 : i32, i32
  }
  func.func @transform_2(%arg0: i32, %arg1: i32) -> (i32, i32) {
    %c0_i32 = arith.constant 0 : i32
    %c0_i32_0 = arith.constant 0 : i32
    return %c0_i32, %arg1 : i32, i32
  }
  func.func @transform_3(%arg0: i32, %arg1: i32) -> (i32, i32) {
    %c0_i32 = arith.constant 0 : i32
    %c0_i32_0 = arith.constant 0 : i32
    return %arg1, %c0_i32 : i32, i32
  }
  func.func @transform_4(%arg0: i32, %arg1: i32) -> (i32, i32) {
    %c0_i32 = arith.constant 0 : i32
    %c0_i32_0 = arith.constant 0 : i32
    %c0_i32_1 = arith.constant 0 : i32
    return %c0_i32, %c0_i32_0 : i32, i32
  }
  func.func @transform_5(%arg0: i32, %arg1: i32) -> (i32, i32) {
    %c0_i32 = arith.constant 0 : i32
    %c0_i32_0 = arith.constant 0 : i32
    return %arg0, %c0_i32 : i32, i32
  }
}

module attributes {stable_mosaic.version = 11 : i64} {
  func.func @_linear_kernel(%arg0: i32, %arg1: i32, %arg2: i32, %arg3: memref<16x32xbf16, #tpu.memory_space<vmem>>, %arg4: memref<32x128xbf16, #tpu.memory_space<vmem>>, %arg5: memref<1x128xf32, #tpu.memory_space<vmem>>, %arg6: memref<16x128xf32, #tpu.memory_space<vmem>>, %arg7: memref<16x128xf32, #tpu.memory_space<vmem>>) attributes {dimension_semantics = [#tpu.dimension_semantics<parallel>, #tpu.dimension_semantics<parallel>, #tpu.dimension_semantics<arbitrary>], iteration_bounds = array<i64: 1, 1, 1>, scalar_prefetch = 0 : i64, scratch_operands = 1 : i64, tpu.core_type = #tpu.core_type<tc>, window_params = [{transform_indices = @transform_0, window_bounds = array<i64: 16, 32>}, {transform_indices = @transform_1, window_bounds = array<i64: 32, 128>}, {transform_indices = @transform_2, window_bounds = array<i64: 1, 128>}, {transform_indices = @transform_3, window_bounds = array<i64: 16, 128>}]} {
    %c0_i32 = arith.constant 0 : i32
    %0 = arith.cmpi eq, %arg2, %c0_i32 : i32
    %1 = arith.extui %0 : i1 to i32
    %c0_i32_0 = arith.constant 0 : i32
    %2 = arith.cmpi ne, %1, %c0_i32_0 : i32
    scf.if %2 {
      %cst_10 = arith.constant 0.000000e+00 : f32
      %12 = vector.broadcast %cst_10 : f32 to vector<16x128xf32>
      %c0_11 = arith.constant 0 : index
      %c0_12 = arith.constant 0 : index
      %13 = vector.load %arg7[%c0_11, %c0_12] : memref<16x128xf32, #tpu.memory_space<vmem>>, vector<16x128xf32>
      tpu.vector_store %arg7[%c0_11, %c0_12], %12 {strides = array<i32>} : memref<16x128xf32, #tpu.memory_space<vmem>>, vector<16x128xf32>,
    } else {
    }
    %c0 = arith.constant 0 : index
    %c0_1 = arith.constant 0 : index
    %3 = vector.load %arg7[%c0, %c0_1] : memref<16x128xf32, #tpu.memory_space<vmem>>, vector<16x128xf32>
    %c0_2 = arith.constant 0 : index
    %c0_3 = arith.constant 0 : index
    %4 = vector.load %arg3[%c0_2, %c0_3] : memref<16x32xbf16, #tpu.memory_space<vmem>>, vector<16x32xbf16>
    %c0_4 = arith.constant 0 : index
    %c0_5 = arith.constant 0 : index
    %5 = vector.load %arg4[%c0_4, %c0_5] : memref<32x128xbf16, #tpu.memory_space<vmem>>, vector<32x128xbf16>
    %cst = arith.constant dense<0.000000e+00> : vector<16x128xf32>
    %6 = tpu.matmul %4, %5, %cst {dimension_numbers = #tpu.dot_dimension_numbers<[1], [0], [0], [1], [0, 0, 1, 1], [], []>} : vector<16x32xbf16>, vector<32x128xbf16>, vector<16x128xf32> -> vector<16x128xf32>
    %7 = arith.addf %3, %6 : vector<16x128xf32>
    %c0_6 = arith.constant 0 : index
    %c0_7 = arith.constant 0 : index
    %8 = vector.load %arg7[%c0_6, %c0_7] : memref<16x128xf32, #tpu.memory_space<vmem>>, vector<16x128xf32>
    tpu.vector_store %arg7[%c0_6, %c0_7], %7 {strides = array<i32>} : memref<16x128xf32, #tpu.memory_space<vmem>>, vector<16x128xf32>,
    %c0_i32_8 = arith.constant 0 : i32
    %9 = arith.cmpi eq, %arg2, %c0_i32_8 : i32
    %10 = arith.extui %9 : i1 to i32
    %c0_i32_9 = arith.constant 0 : i32
    %11 = arith.cmpi ne, %10, %c0_i32_9 : i32
    scf.if %11 {
      %c0_10 = arith.constant 0 : index
      %c0_11 = arith.constant 0 : index
      %12 = vector.load %arg7[%c0_10, %c0_11] : memref<16x128xf32, #tpu.memory_space<vmem>>, vector<16x128xf32>
      %c0_12 = arith.constant 0 : index
      %c0_13 = arith.constant 0 : index
      %13 = vector.load %arg5[%c0_12, %c0_13] : memref<1x128xf32, #tpu.memory_space<vmem>>, vector<1x128xf32>
      %14 = vector.broadcast %13 : vector<1x128xf32> to vector<16x128xf32>
      %15 = arith.addf %12, %14 : vector<16x128xf32>
      %c0_14 = arith.constant 0 : index
      %c0_15 = arith.constant 0 : index
      %16 = vector.load %arg6[%c0_14, %c0_15] : memref<16x128xf32, #tpu.memory_space<vmem>>, vector<16x128xf32>
      tpu.vector_store %arg6[%c0_14, %c0_15], %15 {strides = array<i32>} : memref<16x128xf32, #tpu.memory_space<vmem>>, vector<16x128xf32>,
    } else {
    }
    return
  }
  func.func @transform_0(%arg0: i32, %arg1: i32, %arg2: i32) -> (i32, i32) {
    %c0_i32 = arith.constant 0 : i32
    return %arg0, %arg2 : i32, i32
  }
  func.func @transform_1(%arg0: i32, %arg1: i32, %arg2: i32) -> (i32, i32) {
    %c0_i32 = arith.constant 0 : i32
    return %arg2, %arg1 : i32, i32
  }
  func.func @transform_2(%arg0: i32, %arg1: i32, %arg2: i32) -> (i32, i32) {
    %c0_i32 = arith.constant 0 : i32
    %c0_i32_0 = arith.constant 0 : i32
    return %c0_i32, %arg1 : i32, i32
  }
  func.func @transform_3(%arg0: i32, %arg1: i32, %arg2: i32) -> (i32, i32) {
    %c0_i32 = arith.constant 0 : i32
    return %arg0, %arg1 : i32, i32
  }
}

</mosaic_0001>

<llo_original>
// kernel: _lambda_.13
$region0: #{_lambda_.13}
  #allocation0 [shape = 'u32[]', space=smem, size = 0x4, offset = 0x4, fixed_abs, tag = 'smem constant byte address 0x4 - core index']
  #allocation1 [shape = 'u32[144,128]{1,0:T(1,128)}', space=vmem, size = 0x12000, scoped, tag = 'internal scratch']
  #allocation2 [shape = 'f32[16,128]{1,0:T(8,128)}', space=vmem, size = 0x2000, scoped, tag = 'scratch operand']
  %s0 = inlined_call_operand.vmem [shape: bf16[16,32], index: 0, kind: input, shape index: {}]
  %s1 = inlined_call_operand.vmem [shape: bf16[32,128], index: 1, kind: input, shape index: {}]
  %s2 = inlined_call_operand.vmem [shape: f32[1,128], index: 2, kind: input, shape index: {}]
  %s3 = inlined_call_operand.vmem [shape: f32[16,128], index: 3, kind: output, shape index: {}]
  %s4 = sld [smem:[#allocation0]]
  $region30: #{_lambda_.13} parent=0
    _
  %s6 = ssub.s32 1, %s4
  %s7 = scalar_select 0, %s6, %s4
  // Predicated region
  $region2: #{_lambda_.13} parent=0 // pred_check
    _
  $region3: #{_lambda_.13} parent=0 // pred_check_branch
    %9 = sbr.rel (0) target = $region5
  $region4: #{_lambda_.13} parent=0 // pred_region
    _
  $region5: #{_lambda_.13} parent=0 // pred_fallthru
    _
  // Predicated region
  $region6: #{_lambda_.13} parent=0 // pred_check
    _
  $region7: #{_lambda_.13} parent=0 // pred_check_branch
    %11 = sbr.rel (0) target = $region9
  $region8: #{_lambda_.13} parent=0 // pred_region
    _
  $region9: #{_lambda_.13} parent=0 // pred_fallthru
    _
  // Predicated region
  $region10: #{_lambda_.13} parent=0 // pred_check
    _
  $region11: #{_lambda_.13} parent=0 // pred_check_branch
    %13 = sbr.rel (0) target = $region13
  $region12: #{_lambda_.13} parent=0 // pred_region
    _
  $region13: #{_lambda_.13} parent=0 // pred_fallthru
    _
  %p15 = scmp.eq.s32.totalorder 0, 0
  // Predicated region
  $region14: #{_lambda_.13} parent=0 // pred_check
    %p16 = pneg %p15
  $region15: #{_lambda_.13} parent=0 // pred_check_branch
    %18 = sbr.rel (%p16) target = $region17
  $region16: #{_lambda_.13} parent=0 // pred_region
    %19 = vst [vmem:[#allocation2] sm:$0xff] 0.0
    %20 = vst [vmem:[#allocation2 + $0x8] sm:$0xff] 0.0
  $region17: #{_lambda_.13} parent=0 // pred_fallthru
    _
  %v21 = vld [vmem:[#allocation2] sm:$0xff]
  %v22 = vld [vmem:[#allocation2 + $0x8] sm:$0xff]
  %v23 = vld [vmem:[%s0] sm:$0xf]
  %v24 = vld [vmem:[%s0 + $0x4] sm:$0xf]
  %v25 = vld [vmem:[%s1] sm:$0xf]
  %v26 = vld [vmem:[%s1 + $0x4] sm:$0xf]
  %v27 = vld [vmem:[%s1 + $0x8] sm:$0xf]
  %v28 = vld [vmem:[%s1 + $0xc] sm:$0xf]
  %v31 = vunpack.c.l.b16 %v23
  %v32 = vunpack.c.l.b16 %v24
  %v33 = vpack.c.b16 %v32, %v31
  %v38 = vunpack.c.l.b16 %v25
  %v39 = vunpack.c.l.b16 %v26
  %v40 = vunpack.c.l.b16 %v27
  %v41 = vunpack.c.l.b16 %v28
  %v42 = vpack.c.b16 %v39, %v38
  %v43 = vpack.c.b16 %v41, %v40
  %vm46 = vcmask 261120
  %v48 = vsel %vm46, %v33, 0
  %50 = vmatprep.subr.bf16.mxu0 0
  %51 = vmatpush1.bf16.msra.mxu0 %v42
  %52 = vmatprep.subr.bf16.mxu0 0
  %53 = vmatpush1.bf16.msra.mxu0 %v43
  %54 = vmatprep.subr.bf16.mxu0 0
  %55 = vmatpush1.bf16.msra.mxu0 0
  %56 = vmatprep.subr.bf16.mxu0 0
  %57 = vmatpush1.bf16.msra.mxu0 0
  %58 = vmatprep.subr.bf16.mxu0 0
  %59 = vmatpush1.bf16.msra.mxu0 0
  %60 = vmatprep.subr.bf16.mxu0 0
  %61 = vmatpush1.bf16.msra.mxu0 0
  %62 = vmatprep.subr.bf16.mxu0 0
  %63 = vmatpush1.bf16.msra.mxu0 0
  %64 = vmatprep.subr.bf16.mxu0 0
  %65 = vmatpush1.bf16.msra.mxu0 0
  %66 = vmatprep.subr.bf16.mxu0 0
  %67 = vmatpush1.bf16.msra.mxu0 0
  %68 = vmatprep.subr.bf16.mxu0 0
  %69 = vmatpush1.bf16.msra.mxu0 0
  %70 = vmatprep.subr.bf16.mxu0 0
  %71 = vmatpush1.bf16.msra.mxu0 0
  %72 = vmatprep.subr.bf16.mxu0 0
  %73 = vmatpush1.bf16.msra.mxu0 0
  %74 = vmatprep.subr.bf16.mxu0 0
  %75 = vmatpush1.bf16.msra.mxu0 0
  %76 = vmatprep.subr.bf16.mxu0 0
  %77 = vmatpush1.bf16.msra.mxu0 0
  %78 = vmatprep.subr.bf16.mxu0 0
  %79 = vmatpush1.bf16.msra.mxu0 0
  %80 = vmatprep.subr.bf16.mxu0 0
  %81 = vmatpush1.bf16.msra.mxu0 0
  %82 = vmatprep.mubr.bf16.mxu0 0
  %83 = vmatmul.mubr.bf16.gmra.mrb[0].mxu0 %v48
  %v84 = vpop.f32.mrb[0].mxu0
  %v85 = vadd.f32 0.0, %v84
  %v86 = vpop.f32.mrb[0].mxu0
  %v87 = vpop.f32.mrb[0].mxu0
  %v88 = vadd.f32 0.0, %v87
  %v89 = vpop.f32.mrb[0].mxu0
  %90 = vdwg.mxu0
  %v91 = vadd.f32 %v21, %v85
  %v92 = vadd.f32 %v22, %v88
  %93 = vst [vmem:[#allocation2] sm:$0xff] %v91
  %94 = vst [vmem:[#allocation2 + $0x8] sm:$0xff] %v92
  // Predicated region
  $region18: #{_lambda_.13} parent=0 // pred_check
    %p95 = pneg %p15
  $region19: #{_lambda_.13} parent=0 // pred_check_branch
    %97 = sbr.rel (%p95) target = $region21
  $region20: #{_lambda_.13} parent=0 // pred_region
    %v98 = vld [vmem:[#allocation2] sm:$0xff]
    %v99 = vld [vmem:[#allocation2 + $0x8] sm:$0xff]
    %v100 = vld [vmem:[%s2] sm:$0x1]
    %v102 = vlaneseq
    %v103 = vshrl.u32 %v102, 7
    %v104 = vsub.s32 0, %v103
    %v105 = vrot.slane %v100, %v104
    %v107 = vadd.f32 %v98, %v105
    %v108 = vadd.f32 %v99, %v105
    %109 = vst [vmem:[%s3] sm:$0xff] %v107
    %110 = vst [vmem:[%s3 + $0x8] sm:$0xff] %v108
  $region21: #{_lambda_.13} parent=0 // pred_fallthru
    _
  // Predicated region
  $region22: #{_lambda_.13} parent=0 // pred_check
    _
  $region23: #{_lambda_.13} parent=0 // pred_check_branch
    %112 = sbr.rel (0) target = $region25
  $region24: #{_lambda_.13} parent=0 // pred_region
    _
  $region25: #{_lambda_.13} parent=0 // pred_fallthru
    _
  // Predicated region
  $region26: #{_lambda_.13} parent=0 // pred_check
    _
  $region27: #{_lambda_.13} parent=0 // pred_check_branch
    %114 = sbr.rel (0) target = $region29
  $region28: #{_lambda_.13} parent=0 // pred_region
    _
  $region29: #{_lambda_.13} parent=0 // pred_fallthru
    _

// kernel: _lambda_.9
$region0: #{_lambda_.9}
  #allocation0 [shape = 'u32[]', space=smem, size = 0x4, offset = 0x4, fixed_abs, tag = 'smem constant byte address 0x4 - core index']
  #allocation1 [shape = 'u32[144,128]{1,0:T(1,128)}', space=vmem, size = 0x12000, scoped, tag = 'internal scratch']
  #allocation2 [shape = 'f32[16,32]{1,0:T(8,128)}', space=vmem, size = 0x2000, scoped, tag = 'scratch operand']
  %s0 = inlined_call_operand.vmem [shape: bf16[16,32], index: 0, kind: input, shape index: {}]
  %s1 = inlined_call_operand.vmem [shape: bf16[32,64], index: 1, kind: input, shape index: {}]
  %s2 = inlined_call_operand.vmem [shape: f32[1,64], index: 2, kind: input, shape index: {}]
  %s3 = inlined_call_operand.vmem [shape: bf16[64,32], index: 3, kind: input, shape index: {}]
  %s4 = inlined_call_operand.vmem [shape: f32[3,32], index: 4, kind: input, shape index: {}]
  %s5 = inlined_call_operand.vmem [shape: bf16[16,32], index: 5, kind: output, shape index: {}]
  %s6 = sld [smem:[#allocation0]]
  $region38: #{_lambda_.9} parent=0
    _
  %s8 = ssub.s32 1, %s6
  %s9 = scalar_select 0, %s8, %s6
  // Predicated region
  $region2: #{_lambda_.9} parent=0 // pred_check
    _
  $region3: #{_lambda_.9} parent=0 // pred_check_branch
    %11 = sbr.rel (0) target = $region5
  $region4: #{_lambda_.9} parent=0 // pred_region
    _
  $region5: #{_lambda_.9} parent=0 // pred_fallthru
    _
  // Predicated region
  $region6: #{_lambda_.9} parent=0 // pred_check
    _
  $region7: #{_lambda_.9} parent=0 // pred_check_branch
    %13 = sbr.rel (0) target = $region9
  $region8: #{_lambda_.9} parent=0 // pred_region
    _
  $region9: #{_lambda_.9} parent=0 // pred_fallthru
    _
  // Predicated region
  $region10: #{_lambda_.9} parent=0 // pred_check
    _
  $region11: #{_lambda_.9} parent=0 // pred_check_branch
    %15 = sbr.rel (0) target = $region13
  $region12: #{_lambda_.9} parent=0 // pred_region
    _
  $region13: #{_lambda_.9} parent=0 // pred_fallthru
    _
  // Predicated region
  $region14: #{_lambda_.9} parent=0 // pred_check
    _
  $region15: #{_lambda_.9} parent=0 // pred_check_branch
    %17 = sbr.rel (0) target = $region17
  $region16: #{_lambda_.9} parent=0 // pred_region
    _
  $region17: #{_lambda_.9} parent=0 // pred_fallthru
    _
  // Predicated region
  $region18: #{_lambda_.9} parent=0 // pred_check
    _
  $region19: #{_lambda_.9} parent=0 // pred_check_branch
    %19 = sbr.rel (0) target = $region21
  $region20: #{_lambda_.9} parent=0 // pred_region
    _
  $region21: #{_lambda_.9} parent=0 // pred_fallthru
    _
  %p21 = scmp.eq.s32.totalorder 0, 0
  // Predicated region
  $region22: #{_lambda_.9} parent=0 // pred_check
    %p22 = pneg %p21
  $region23: #{_lambda_.9} parent=0 // pred_check_branch
    %24 = sbr.rel (%p22) target = $region25
  $region24: #{_lambda_.9} parent=0 // pred_region
    %vm25 = vcmask 261120
    %26 = vst.msk [vmem:[#allocation2] sm:$0xff] %vm25, 0.0
    %27 = vst.msk [vmem:[#allocation2 + $0x8] sm:$0xff] %vm25, 0.0
  $region25: #{_lambda_.9} parent=0 // pred_fallthru
    _
  %v28 = vld [vmem:[%s0] sm:$0xf]
  %v29 = vld [vmem:[%s0 + $0x4] sm:$0xf]
  %v30 = vld [vmem:[%s1] sm:$0xf]
  %v31 = vld [vmem:[%s1 + $0x4] sm:$0xf]
  %v32 = vld [vmem:[%s1 + $0x8] sm:$0xf]
  %v33 = vld [vmem:[%s1 + $0xc] sm:$0xf]
  %v34 = vld [vmem:[%s2] sm:$0x1]
  %v36 = vlaneseq
  %v37 = vshrl.u32 %v36, 7
  %v38 = vsub.s32 0, %v37
  %v39 = vrot.slane %v34, %v38
  %v43 = vunpack.c.l.b16 %v28
  %v44 = vunpack.c.l.b16 %v29
  %v45 = vpack.c.b16 %v44, %v43
  %v50 = vunpack.c.l.b16 %v30
  %v51 = vunpack.c.l.b16 %v31
  %v52 = vunpack.c.l.b16 %v32
  %v53 = vunpack.c.l.b16 %v33
  %v54 = vpack.c.b16 %v51, %v50
  %v55 = vpack.c.b16 %v53, %v52
  %vm58 = vcmask 261120
  %v60 = vsel %vm58, %v45, 0
  %62 = vmatprep.subr.bf16.mxu0 0
  %63 = vmatpush1.bf16.msra.mxu0 %v54
  %64 = vmatprep.subr.bf16.mxu0 0
  %65 = vmatpush1.bf16.msra.mxu0 %v55
  %66 = vmatprep.subr.bf16.mxu0 0
  %67 = vmatpush1.bf16.msra.mxu0 0
  %68 = vmatprep.subr.bf16.mxu0 0
  %69 = vmatpush1.bf16.msra.mxu0 0
  %70 = vmatprep.subr.bf16.mxu0 0
  %71 = vmatpush1.bf16.msra.mxu0 0
  %72 = vmatprep.subr.bf16.mxu0 0
  %73 = vmatpush1.bf16.msra.mxu0 0
  %74 = vmatprep.subr.bf16.mxu0 0
  %75 = vmatpush1.bf16.msra.mxu0 0
  %76 = vmatprep.subr.bf16.mxu0 0
  %77 = vmatpush1.bf16.msra.mxu0 0
  %78 = vmatprep.subr.bf16.mxu0 0
  %79 = vmatpush1.bf16.msra.mxu0 0
  %80 = vmatprep.subr.bf16.mxu0 0
  %81 = vmatpush1.bf16.msra.mxu0 0
  %82 = vmatprep.subr.bf16.mxu0 0
  %83 = vmatpush1.bf16.msra.mxu0 0
  %84 = vmatprep.subr.bf16.mxu0 0
  %85 = vmatpush1.bf16.msra.mxu0 0
  %86 = vmatprep.subr.bf16.mxu0 0
  %87 = vmatpush1.bf16.msra.mxu0 0
  %88 = vmatprep.subr.bf16.mxu0 0
  %89 = vmatpush1.bf16.msra.mxu0 0
  %90 = vmatprep.subr.bf16.mxu0 0
  %91 = vmatpush1.bf16.msra.mxu0 0
  %92 = vmatprep.subr.bf16.mxu0 0
  %93 = vmatpush1.bf16.msra.mxu0 0
  %94 = vmatprep.mubr.bf16.mxu0 0
  %95 = vmatmul.mubr.bf16.gmra.mrb[0].mxu0 %v60
  %v96 = vpop.f32.mrb[0].mxu0
  %v97 = vadd.f32 %v39, %v96
  %v98 = vpop.f32.mrb[0].mxu0
  %v99 = vpop.f32.mrb[0].mxu0
  %v100 = vadd.f32 %v39, %v99
  %v101 = vpop.f32.mrb[0].mxu0
  %102 = vdwg.mxu0
  %v103 = vmax.f32 %v97, 0.0
  %v104 = vmax.f32 %v100, 0.0
  %v105 = vld [vmem:[#allocation2] sm:$0xff]
  %v106 = vld [vmem:[#allocation2 + $0x8] sm:$0xff]
  %v107 = vpack.c.bf16 %v104, %v103
  %v108 = vld [vmem:[%s3] sm:$0xf]
  %v109 = vld [vmem:[%s3 + $0x4] sm:$0xf]
  %v110 = vld [vmem:[%s3 + $0x8] sm:$0xf]
  %v111 = vld [vmem:[%s3 + $0xc] sm:$0xf]
  %v112 = vld [vmem:[%s3 + $0x10] sm:$0xf]
  %v113 = vld [vmem:[%s3 + $0x14] sm:$0xf]
  %v114 = vld [vmem:[%s3 + $0x18] sm:$0xf]
  %v115 = vld [vmem:[%s3 + $0x1c] sm:$0xf]
  %v124 = vunpack.c.l.b16 %v108
  %v125 = vunpack.c.l.b16 %v109
  %v126 = vunpack.c.l.b16 %v110
  %v127 = vunpack.c.l.b16 %v111
  %v128 = vunpack.c.l.b16 %v112
  %v129 = vunpack.c.l.b16 %v113
  %v130 = vunpack.c.l.b16 %v114
  %v131 = vunpack.c.l.b16 %v115
  %v132 = vpack.c.b16 %v125, %v124
  %v133 = vpack.c.b16 %v127, %v126
  %v134 = vpack.c.b16 %v129, %v128
  %v135 = vpack.c.b16 %v131, %v130
  %vm140 = vcmask 523264
  %v142 = vsel %vm140, %v107, 0
  %144 = vmatprep.subr.bf16.mxu0 0
  %145 = vmatpush1.bf16.msra.mxu0 %v132
  %146 = vmatprep.subr.bf16.mxu0 0
  %147 = vmatpush1.bf16.msra.mxu0 %v133
  %148 = vmatprep.subr.bf16.mxu0 0
  %149 = vmatpush1.bf16.msra.mxu0 %v134
  %150 = vmatprep.subr.bf16.mxu0 0
  %151 = vmatpush1.bf16.msra.mxu0 %v135
  %152 = vmatprep.subr.bf16.mxu0 0
  %153 = vmatpush1.bf16.msra.mxu0 0
  %154 = vmatprep.subr.bf16.mxu0 0
  %155 = vmatpush1.bf16.msra.mxu0 0
  %156 = vmatprep.subr.bf16.mxu0 0
  %157 = vmatpush1.bf16.msra.mxu0 0
  %158 = vmatprep.subr.bf16.mxu0 0
  %159 = vmatpush1.bf16.msra.mxu0 0
  %160 = vmatprep.subr.bf16.mxu0 0
  %161 = vmatpush1.bf16.msra.mxu0 0
  %162 = vmatprep.subr.bf16.mxu0 0
  %163 = vmatpush1.bf16.msra.mxu0 0
  %164 = vmatprep.subr.bf16.mxu0 0
  %165 = vmatpush1.bf16.msra.mxu0 0
  %166 = vmatprep.subr.bf16.mxu0 0
  %167 = vmatpush1.bf16.msra.mxu0 0
  %168 = vmatprep.subr.bf16.mxu0 0
  %169 = vmatpush1.bf16.msra.mxu0 0
  %170 = vmatprep.subr.bf16.mxu0 0
  %171 = vmatpush1.bf16.msra.mxu0 0
  %172 = vmatprep.subr.bf16.mxu0 0
  %173 = vmatpush1.bf16.msra.mxu0 0
  %174 = vmatprep.subr.bf16.mxu0 0
  %175 = vmatpush1.bf16.msra.mxu0 0
  %176 = vmatprep.mubr.bf16.mxu0 0
  %177 = vmatmul.mubr.bf16.gmra.mrb[0].mxu0 %v142
  %v178 = vpop.f32.mrb[0].mxu0
  %v179 = vadd.f32 0.0, %v178
  %v180 = vpop.f32.mrb[0].mxu0
  %v181 = vpop.f32.mrb[0].mxu0
  %v182 = vadd.f32 0.0, %v181
  %v183 = vpop.f32.mrb[0].mxu0
  %184 = vdwg.mxu0
  %v185 = vadd.f32 %v105, %v179
  %v186 = vadd.f32 %v106, %v182
  %187 = vst.msk [vmem:[#allocation2] sm:$0xff] %vm58, %v185
  %188 = vst.msk [vmem:[#allocation2 + $0x8] sm:$0xff] %vm58, %v186
  // Predicated region
  $region26: #{_lambda_.9} parent=0 // pred_check
    %p189 = pneg %p21
  $region27: #{_lambda_.9} parent=0 // pred_check_branch
    %191 = sbr.rel (%p189) target = $region29
  $region28: #{_lambda_.9} parent=0 // pred_region
    %v192 = vld [vmem:[%s4] sm:$0x7]
    %v193 = vld [vmem:[#allocation2] sm:$0xff]
    %v194 = vld [vmem:[#allocation2 + $0x8] sm:$0xff]
    %v195 = vlaneseq
    %v196 = vshrl.u32 %v195, 7
    %v197 = vsub.s32 0, %v196
    %v198 = vrot.slane %v192, %v197
    %v199 = vadd.f32 %v193, %v198
    %v200 = vadd.f32 %v194, %v198
    %v201 = vunpack.c.l.bf16 %v28
    %v202 = vunpack.c.l.bf16 %v29
    %v203 = vadd.f32 %v199, %v201
    %v204 = vadd.f32 %v200, %v202
    %v205 = vsel %vm58, %v203, 0.0
    %206 = vadd.xlane.f32.xlu0 %v205
    %v207 = vpop.xlane.xlu0 %206
    %v208 = vsel %vm58, %v204, 0.0
    %209 = vadd.xlane.f32.xlu0 %v208
    %v210 = vpop.xlane.xlu0 %209
    %v211 = vrcp.pop 32.0
    %v212 = vmul.f32 %v207, %v211
    %v213 = vmul.f32 %v210, %v211
    %v214 = vsub.f32 %v203, %v212
    %v215 = vsub.f32 %v204, %v213
    %v216 = vmul.f32 %v214, %v214
    %v217 = vmul.f32 %v215, %v215
    %v218 = vsel %vm58, %v216, 0.0
    %219 = vadd.xlane.f32.xlu0 %v218
    %v220 = vpop.xlane.xlu0 %219
    %v221 = vsel %vm58, %v217, 0.0
    %222 = vadd.xlane.f32.xlu0 %v221
    %v223 = vpop.xlane.xlu0 %222
    %v224 = vmul.f32 %v220, %v211
    %v225 = vmul.f32 %v223, %v211
    %v226 = vadd.f32 %v224, 1e-12
    %v227 = vadd.f32 %v225, 1e-12
    %v228 = vrsqrt.pop %v226
    %v229 = vrsqrt.pop %v227
    %v230 = vmul.f32 %v214, %v228
    %v231 = vmul.f32 %v215, %v229
    %v232 = vlaneseq
    %v233 = vshrl.u32 %v232, 7
    %v234 = vsub.s32 1, %v233
    %v235 = vrot.slane %v192, %v234
    %v236 = vmul.f32 %v230, %v235
    %v237 = vmul.f32 %v231, %v235
    %v238 = vlaneseq
    %v239 = vshrl.u32 %v238, 7
    %v240 = vsub.s32 2, %v239
    %v241 = vrot.slane %v192, %v240
    %v242 = vadd.f32 %v236, %v241
    %v243 = vadd.f32 %v237, %v241
    %v244 = vpack.c.bf16 %v243, %v242
    %v246 = vunpack.c.l.b16 %v244
    %v247 = vunpack.c.h.b16 %v244
    %v248 = vpack.c.b16 %v246, %v246
    %v249 = vpack.c.b16 %v247, %v247
    %vm252 = vcmask 257024
    %253 = vst.msk [vmem:[%s5] sm:$0xf] %vm252, %v248
    %254 = vst.msk [vmem:[%s5 + $0x4] sm:$0xf] %vm252, %v249
  $region29: #{_lambda_.9} parent=0 // pred_fallthru
    _
  // Predicated region
  $region30: #{_lambda_.9} parent=0 // pred_check
    _
  $region31: #{_lambda_.9} parent=0 // pred_check_branch
    %256 = sbr.rel (0) target = $region33
  $region32: #{_lambda_.9} parent=0 // pred_region
    _
  $region33: #{_lambda_.9} parent=0 // pred_fallthru
    _
  // Predicated region
  $region34: #{_lambda_.9} parent=0 // pred_check
    _
  $region35: #{_lambda_.9} parent=0 // pred_check_branch
    %258 = sbr.rel (0) target = $region37
  $region36: #{_lambda_.9} parent=0 // pred_region
    _
  $region37: #{_lambda_.9} parent=0 // pred_fallthru
    _

// kernel: _lambda_.7
$region0: #{_lambda_.7}
  #allocation0 [shape = 'u32[]', space=smem, size = 0x4, offset = 0x4, fixed_abs, tag = 'smem constant byte address 0x4 - core index']
  #allocation1 [shape = 'u32[144,128]{1,0:T(1,128)}', space=vmem, size = 0x12000, scoped, tag = 'internal scratch']
  #allocation2 [shape = 'f32[8,32]{1,0:T(8,128)}', space=vmem, size = 0x1000, scoped, tag = 'scratch operand']
  %s0 = inlined_call_operand.vmem [shape: bf16[2,8,32], index: 0, kind: input, shape index: {}, may-alias: {0,1}]
  %s1 = inlined_call_operand.vmem [shape: bf16[2,8,32], index: 1, kind: input, shape index: {}, may-alias: {0,1}]
  %s2 = inlined_call_operand.vmem [shape: bf16[2,1,8,8], index: 2, kind: input, shape index: {}]
  %s3 = inlined_call_operand.vmem [shape: bf16[32,32], index: 3, kind: input, shape index: {}]
  %s4 = inlined_call_operand.vmem [shape: bf16[32,64], index: 4, kind: input, shape index: {}]
  %s5 = inlined_call_operand.vmem [shape: bf16[32,32], index: 5, kind: input, shape index: {}]
  %s6 = inlined_call_operand.vmem [shape: f32[6,32], index: 6, kind: input, shape index: {}]
  %s7 = inlined_call_operand.vmem [shape: bf16[2,8,32], index: 7, kind: output, shape index: {}]
  %s8 = sld [smem:[#allocation0]]
  $region61: #{_lambda_.7} parent=0
    _
  %s10 = ssub.s32 1, %s8
  %s11 = scalar_select 0, %s10, %s8
  loop: start=0, step=1, limit=4
  $region2: #{_lambda_.7} parent=0 // loop_pre_header
    _
  $region3: #{_lambda_.7} parent=0 // loop_header
    %s13 = sphi 0, %s17
    %p14 = scmp.ge.s32.totalorder %s13, 4
    %s20 = sphi 0, %s32
    %s21 = sphi 0, %s28
    %s22 = sphi 0, %s20
    %s23 = sphi 0, %s21
    %s24 = sphi 0, %s22
    %s25 = sphi 0, %s23
    %s37 = sphi 0, %s39
    %s40 = sphi 0, %s37
    %s41 = sphi 0, %s40
    %s57 = sphi 0, %s41
    %s63 = sphi 0, %s65
    %s66 = sphi 0, %s63
    %s67 = sphi 0, %s66
    %s83 = sphi 0, %s67
    %s91 = sphi 0, %s93
    %s94 = sphi 0, %s91
    %s95 = sphi 0, %s94
    %s111 = sphi 0, %s95
    %s115 = sphi 0, %s115
    %s117 = sphi 0, %s115
    %s118 = sphi 0, %s117
    %s132 = sphi 0, %s118
    %s136 = sphi 0, %s136
    %s138 = sphi 0, %s136
    %s139 = sphi 0, %s138
    %s153 = sphi 0, %s139
    %s157 = sphi 0, %s157
    %s159 = sphi 0, %s157
    %s160 = sphi 0, %s159
    %s174 = sphi 0, %s160
    %s178 = sphi 0, %s178
    %s180 = sphi 0, %s178
    %s181 = sphi 0, %s180
    %s195 = sphi 0, %s181
    %s203 = sphi 0, %s205
    %s206 = sphi 0, %s203
    %s207 = sphi 0, %s206
    %s223 = sphi 0, %s207
  $region4: #{_lambda_.7} parent=0 // loop_header_branch
    %16 = sbr.rel (%p14) target = $region8
  $region5: #{_lambda_.7} parent=0 // loop_body
    %s18 = ssub.s32 %s13, 1
    %s19 = ssub.s32 %s13, 2
    %s26 = sadd.s32 1, %s21
    %p27 = scmp.ge.s32.totalorder %s26, 1
    %s28 = scalar_select %p27, 0, %s26
    %s29 = sadd.s32 1, %s20
    %s30 = scalar_select %p27, %s29, %s20
    %p31 = scmp.ge.s32.totalorder %s30, 2
    %s32 = scalar_select %p31, 0, %s30
    %s33 = ssub.s32 %s20, %s32
    %s34 = ssub.s32 %s21, %s28
    %s35 = sor.u32 %s33, %s34
    %p36 = scmp.eq.s32.totalorder %s35, 0
    %s38 = sadd.s32 %s37, 1
    %s39 = scalar_select %p36, %s37, %s38
    %p42 = pneg %p36
    %p43 = scmp.eq.s32.totalorder %s13, 1
    %p44 = por %p42, %p43
    %p45 = scmp.ne.s32.totalorder %s37, %s40
    %p46 = scmp.eq.s32.totalorder %s13, 0
    %p47 = por %p45, %p46
    %p48 = scmp.ne.s32.totalorder %s37, %s40
    %p49 = scmp.eq.s32.totalorder %s18, 1
    %p50 = por %p48, %p49
    %p51 = scmp.ne.s32.totalorder %s40, %s41
    %p52 = scmp.eq.s32.totalorder %s18, 0
    %p53 = por %p51, %p52
    %p54 = scmp.ne.s32.totalorder %s40, %s41
    %p55 = scmp.eq.s32.totalorder %s19, 1
    %p56 = por %p54, %p55
    %p58 = scmp.ne.s32.totalorder %s41, %s57
    %p59 = scmp.eq.s32.totalorder %s19, 0
    %p60 = por %p58, %p59
    %s61 = ssub.s32 %s20, %s32
    %p62 = scmp.eq.s32.totalorder %s61, 0
    %s64 = sadd.s32 %s63, 1
    %s65 = scalar_select %p62, %s63, %s64
    %p68 = pneg %p62
    %p69 = scmp.eq.s32.totalorder %s13, 1
    %p70 = por %p68, %p69
    %p71 = scmp.ne.s32.totalorder %s63, %s66
    %p72 = scmp.eq.s32.totalorder %s13, 0
    %p73 = por %p71, %p72
    %p74 = scmp.ne.s32.totalorder %s63, %s66
    %p75 = scmp.eq.s32.totalorder %s18, 1
    %p76 = por %p74, %p75
    %p77 = scmp.ne.s32.totalorder %s66, %s67
    %p78 = scmp.eq.s32.totalorder %s18, 0
    %p79 = por %p77, %p78
    %p80 = scmp.ne.s32.totalorder %s66, %s67
    %p81 = scmp.eq.s32.totalorder %s19, 1
    %p82 = por %p80, %p81
    %p84 = scmp.ne.s32.totalorder %s67, %s83
    %p85 = scmp.eq.s32.totalorder %s19, 0
    %p86 = por %p84, %p85
    %s87 = ssub.s32 %s20, %s32
    %s88 = ssub.s32 %s21, %s28
    %s89 = sor.u32 %s87, %s88
    %p90 = scmp.eq.s32.totalorder %s89, 0
    %s92 = sadd.s32 %s91, 1
    %s93 = scalar_select %p90, %s91, %s92
    %p96 = pneg %p90
    %p97 = scmp.eq.s32.totalorder %s13, 1
    %p98 = por %p96, %p97
    %p99 = scmp.ne.s32.totalorder %s91, %s94
    %p100 = scmp.eq.s32.totalorder %s13, 0
    %p101 = por %p99, %p100
    %p102 = scmp.ne.s32.totalorder %s91, %s94
    %p103 = scmp.eq.s32.totalorder %s18, 1
    %p104 = por %p102, %p103
    %p105 = scmp.ne.s32.totalorder %s94, %s95
    %p106 = scmp.eq.s32.totalorder %s18, 0
    %p107 = por %p105, %p106
    %p108 = scmp.ne.s32.totalorder %s94, %s95
    %p109 = scmp.eq.s32.totalorder %s19, 1
    %p110 = por %p108, %p109
    %p112 = scmp.ne.s32.totalorder %s95, %s111
    %p113 = scmp.eq.s32.totalorder %s19, 0
    %p114 = por %p112, %p113
    %s116 = sadd.s32 %s115, 1
    %p119 = scmp.eq.s32.totalorder %s13, 1
    %p120 = scmp.ne.s32.totalorder %s115, %s117
    %p121 = scmp.eq.s32.totalorder %s13, 0
    %p122 = por %p120, %p121
    %p123 = scmp.ne.s32.totalorder %s115, %s117
    %p124 = scmp.eq.s32.totalorder %s18, 1
    %p125 = por %p123, %p124
    %p126 = scmp.ne.s32.totalorder %s117, %s118
    %p127 = scmp.eq.s32.totalorder %s18, 0
    %p128 = por %p126, %p127
    %p129 = scmp.ne.s32.totalorder %s117, %s118
    %p130 = scmp.eq.s32.totalorder %s19, 1
    %p131 = por %p129, %p130
    %p133 = scmp.ne.s32.totalorder %s118, %s132
    %p134 = scmp.eq.s32.totalorder %s19, 0
    %p135 = por %p133, %p134
    %s137 = sadd.s32 %s136, 1
    %p140 = scmp.eq.s32.totalorder %s13, 1
    %p141 = scmp.ne.s32.totalorder %s136, %s138
    %p142 = scmp.eq.s32.totalorder %s13, 0
    %p143 = por %p141, %p142
    %p144 = scmp.ne.s32.totalorder %s136, %s138
    %p145 = scmp.eq.s32.totalorder %s18, 1
    %p146 = por %p144, %p145
    %p147 = scmp.ne.s32.totalorder %s138, %s139
    %p148 = scmp.eq.s32.totalorder %s18, 0
    %p149 = por %p147, %p148
    %p150 = scmp.ne.s32.totalorder %s138, %s139
    %p151 = scmp.eq.s32.totalorder %s19, 1
    %p152 = por %p150, %p151
    %p154 = scmp.ne.s32.totalorder %s139, %s153
    %p155 = scmp.eq.s32.totalorder %s19, 0
    %p156 = por %p154, %p155
    %s158 = sadd.s32 %s157, 1
    %p161 = scmp.eq.s32.totalorder %s13, 1
    %p162 = scmp.ne.s32.totalorder %s157, %s159
    %p163 = scmp.eq.s32.totalorder %s13, 0
    %p164 = por %p162, %p163
    %p165 = scmp.ne.s32.totalorder %s157, %s159
    %p166 = scmp.eq.s32.totalorder %s18, 1
    %p167 = por %p165, %p166
    %p168 = scmp.ne.s32.totalorder %s159, %s160
    %p169 = scmp.eq.s32.totalorder %s18, 0
    %p170 = por %p168, %p169
    %p171 = scmp.ne.s32.totalorder %s159, %s160
    %p172 = scmp.eq.s32.totalorder %s19, 1
    %p173 = por %p171, %p172
    %p175 = scmp.ne.s32.totalorder %s160, %s174
    %p176 = scmp.eq.s32.totalorder %s19, 0
    %p177 = por %p175, %p176
    %s179 = sadd.s32 %s178, 1
    %p182 = scmp.eq.s32.totalorder %s13, 1
    %p183 = scmp.ne.s32.totalorder %s178, %s180
    %p184 = scmp.eq.s32.totalorder %s13, 0
    %p185 = por %p183, %p184
    %p186 = scmp.ne.s32.totalorder %s178, %s180
    %p187 = scmp.eq.s32.totalorder %s18, 1
    %p188 = por %p186, %p187
    %p189 = scmp.ne.s32.totalorder %s180, %s181
    %p190 = scmp.eq.s32.totalorder %s18, 0
    %p191 = por %p189, %p190
    %p192 = scmp.ne.s32.totalorder %s180, %s181
    %p193 = scmp.eq.s32.totalorder %s19, 1
    %p194 = por %p192, %p193
    %p196 = scmp.ne.s32.totalorder %s181, %s195
    %p197 = scmp.eq.s32.totalorder %s19, 0
    %p198 = por %p196, %p197
    %s199 = ssub.s32 %s20, %s32
    %s200 = ssub.s32 %s21, %s28
    %s201 = sor.u32 %s199, %s200
    %p202 = scmp.eq.s32.totalorder %s201, 0
    %s204 = sadd.s32 %s203, 1
    %s205 = scalar_select %p202, %s203, %s204
    %p208 = pneg %p202
    %p209 = scmp.eq.s32.totalorder %s13, 1
    %p210 = por %p208, %p209
    %p211 = scmp.ne.s32.totalorder %s203, %s206
    %p212 = scmp.eq.s32.totalorder %s13, 0
    %p213 = por %p211, %p212
    %p214 = scmp.ne.s32.totalorder %s203, %s206
    %p215 = scmp.eq.s32.totalorder %s18, 1
    %p216 = por %p214, %p215
    %p217 = scmp.ne.s32.totalorder %s206, %s207
    %p218 = scmp.eq.s32.totalorder %s18, 0
    %p219 = por %p217, %p218
    %p220 = scmp.ne.s32.totalorder %s206, %s207
    %p221 = scmp.eq.s32.totalorder %s19, 1
    %p222 = por %p220, %p221
    %p224 = scmp.ne.s32.totalorder %s207, %s223
    %p225 = scmp.eq.s32.totalorder %s19, 0
    %p226 = por %p224, %p225
    %p227 = scmp.le.s32.totalorder 1, %s13
    %p228 = scmp.lt.s32.totalorder %s13, 3
    %p229 = pnand %p227, %p228
    %p230 = pneg %p229
    // Predicated region
    $region9: #{_lambda_.7} parent=5 // pred_check
      _
    $region10: #{_lambda_.7} parent=5 // pred_check_branch
      %232 = sbr.rel (%p229) target = $region12
    $region11: #{_lambda_.7} parent=5 // pred_region
      %s233 = ssub.s32 %s13, 1
      // Predicated region
      $region13: #{_lambda_.7} parent=11 // pred_check
        %p234 = pneg %p128
      $region14: #{_lambda_.7} parent=11 // pred_check_branch
        %236 = sbr.rel (%p234) target = $region16
      $region15: #{_lambda_.7} parent=11 // pred_region
        _
      $region16: #{_lambda_.7} parent=11 // pred_fallthru
        _
      // Predicated region
      $region17: #{_lambda_.7} parent=11 // pred_check
        %p237 = pneg %p149
      $region18: #{_lambda_.7} parent=11 // pred_check_branch
        %239 = sbr.rel (%p237) target = $region20
      $region19: #{_lambda_.7} parent=11 // pred_region
        _
      $region20: #{_lambda_.7} parent=11 // pred_fallthru
        _
      // Predicated region
      $region21: #{_lambda_.7} parent=11 // pred_check
        %p240 = pneg %p170
      $region22: #{_lambda_.7} parent=11 // pred_check_branch
        %242 = sbr.rel (%p240) target = $region24
      $region23: #{_lambda_.7} parent=11 // pred_region
        _
      $region24: #{_lambda_.7} parent=11 // pred_fallthru
        _
      // Predicated region
      $region25: #{_lambda_.7} parent=11 // pred_check
        %p243 = pneg %p191
      $region26: #{_lambda_.7} parent=11 // pred_check_branch
        %245 = sbr.rel (%p243) target = $region28
      $region27: #{_lambda_.7} parent=11 // pred_region
        _
      $region28: #{_lambda_.7} parent=11 // pred_fallthru
        _
    $region12: #{_lambda_.7} parent=5 // pred_fallthru
      _
    %p246 = scmp.lt.s32.totalorder %s13, 2
    // Predicated region
    $region29: #{_lambda_.7} parent=5 // pred_check
      %p247 = pneg %p246
    $region30: #{_lambda_.7} parent=5 // pred_check_branch
      %249 = sbr.rel (%p247) target = $region32
    $region31: #{_lambda_.7} parent=5 // pred_region
      // Predicated region
      $region33: #{_lambda_.7} parent=31 // pred_check
        %p250 = pneg %p47
      $region34: #{_lambda_.7} parent=31 // pred_check_branch
        %252 = sbr.rel (%p250) target = $region36
      $region35: #{_lambda_.7} parent=31 // pred_region
        %p253 = scmp.lt.s32.totalorder %s20, 1
        %s254 = scalar_select %p253, %s20, 1
        %p255 = scmp.lt.s32.totalorder %s21, 0
        %s256 = scalar_select %p255, %s21, 0
        %s257 = sadd.s32 %s256, %s254
        %s258 = smul.addr %s257, 4
        %s259 = scalar_lea.vmem %s0, %s258
      $region36: #{_lambda_.7} parent=31 // pred_fallthru
        _
      // Predicated region
      $region37: #{_lambda_.7} parent=31 // pred_check
        %p260 = pneg %p73
      $region38: #{_lambda_.7} parent=31 // pred_check_branch
        %262 = sbr.rel (%p260) target = $region40
      $region39: #{_lambda_.7} parent=31 // pred_region
        %p263 = scmp.lt.s32.totalorder %s20, 1
        %s264 = scalar_select %p263, %s20, 1
        %s265 = smul.addr %s264, 4
        %s266 = scalar_lea.vmem %s1, %s265
      $region40: #{_lambda_.7} parent=31 // pred_fallthru
        _
      // Predicated region
      $region41: #{_lambda_.7} parent=31 // pred_check
        %p267 = pneg %p101
      $region42: #{_lambda_.7} parent=31 // pred_check_branch
        %269 = sbr.rel (%p267) target = $region44
      $region43: #{_lambda_.7} parent=31 // pred_region
        %p270 = scmp.lt.s32.totalorder %s20, 1
        %s271 = scalar_select %p270, %s20, 1
        %p272 = scmp.lt.s32.totalorder %s21, 0
        %s273 = scalar_select %p272, %s21, 0
        %s274 = sadd.s32 %s273, %s271
        %s275 = smul.addr %s274, 4
        %s276 = scalar_lea.vmem %s2, %s275
      $region44: #{_lambda_.7} parent=31 // pred_fallthru
        _
    $region32: #{_lambda_.7} parent=5 // pred_fallthru
      _
    %p277 = scmp.le.s32.totalorder 1, %s13
    %p278 = scmp.lt.s32.totalorder %s13, 3
    %p279 = pnand %p277, %p278
    %p280 = pneg %p279
    // Predicated region
    $region45: #{_lambda_.7} parent=5 // pred_check
      _
    $region46: #{_lambda_.7} parent=5 // pred_check_branch
      %282 = sbr.rel (%p279) target = $region48
    $region47: #{_lambda_.7} parent=5 // pred_region
      %s283 = ssub.s32 %s13, 1
      %p284 = scmp.lt.s32.totalorder %s22, 1
      %s285 = scalar_select %p284, %s22, 1
      %p286 = scmp.lt.s32.totalorder %s23, 0
      %s287 = scalar_select %p286, %s23, 0
      %s288 = sadd.s32 %s287, %s285
      %s289 = smul.addr %s288, 4
      %s290 = scalar_lea.vmem %s0, %s289
      %p291 = pneg %p53
      %p292 = pneg %p50
      %p293 = scmp.lt.s32.totalorder %s22, 1
      %s294 = scalar_select %p293, %s22, 1
      %s295 = smul.addr %s294, 4
      %s296 = scalar_lea.vmem %s1, %s295
      %p297 = pneg %p79
      %p298 = pneg %p76
      %p299 = scmp.lt.s32.totalorder %s22, 1
      %s300 = scalar_select %p299, %s22, 1
      %p301 = scmp.lt.s32.totalorder %s23, 0
      %s302 = scalar_select %p301, %s23, 0
      %s303 = sadd.s32 %s302, %s300
      %s304 = smul.addr %s303, 4
      %s305 = scalar_lea.vmem %s2, %s304
      %p306 = pneg %p107
      %p307 = pneg %p104
      %p308 = pneg %p128
      %p309 = pneg %p125
      %p310 = pneg %p149
      %p311 = pneg %p146
      %p312 = pneg %p170
      %p313 = pneg %p167
      %p314 = pneg %p191
      %p315 = pneg %p188
      %p316 = pneg %p219
      %p317 = pneg %p216
      %p318 = scmp.lt.s32.totalorder %s22, 1
      %s319 = scalar_select %p318, %s22, 1
      %p320 = scmp.lt.s32.totalorder %s23, 0
      %s321 = scalar_select %p320, %s23, 0
      %s322 = sadd.s32 %s321, %s319
      %s323 = smul.addr %s322, 4
      %s324 = scalar_lea.vmem %s7, %s323
      %p325 = scmp.lt.s32.totalorder %s22, 1
      %s326 = scalar_select %p325, %s22, 1
      %p327 = scmp.lt.s32.totalorder %s23, 0
      %s328 = scalar_select %p327, %s23, 0
      %s329 = sadd.s32 %s328, %s326
      %s330 = smul.addr %s329, 4
      %s331 = scalar_lea.vmem %s0, %s330
      %p332 = scmp.lt.s32.totalorder %s22, 1
      %s333 = scalar_select %p332, %s22, 1
      %s334 = smul.addr %s333, 4
      %s335 = scalar_lea.vmem %s1, %s334
      %p336 = scmp.lt.s32.totalorder %s22, 1
      %s337 = scalar_select %p336, %s22, 1
      %p338 = scmp.lt.s32.totalorder %s23, 0
      %s339 = scalar_select %p338, %s23, 0
      %s340 = sadd.s32 %s339, %s337
      %s341 = smul.addr %s340, 4
      %s342 = scalar_lea.vmem %s2, %s341
      %p343 = scmp.lt.s32.totalorder %s22, 1
      %s344 = scalar_select %p343, %s22, 1
      %p345 = scmp.lt.s32.totalorder %s23, 0
      %s346 = scalar_select %p345, %s23, 0
      %s347 = sadd.s32 %s346, %s344
      %s348 = smul.addr %s347, 4
      %s349 = scalar_lea.vmem %s7, %s348
      %v351 = vld [vmem:[%s331] sm:$0xf]
      %v352 = vld [vmem:[%s335] sm:$0xf]
      %v353 = vld [vmem:[%s6] sm:$0x3f]
      %v354 = vld [vmem:[%s342] sm:$0xf]
      %v355 = vunpack.c.l.bf16 %v354
      %v356 = vld [vmem:[%s3] sm:$0xf]
      %v357 = vld [vmem:[%s3 + $0x4] sm:$0xf]
      %v358 = vld [vmem:[%s3 + $0x8] sm:$0xf]
      %v359 = vld [vmem:[%s3 + $0xc] sm:$0xf]
      %v360 = vlaneseq
      %v361 = vshrl.u32 %v360, 7
      %v362 = vsub.s32 0, %v361
      %v363 = vrot.slane %v353, %v362
      %v368 = vunpack.c.l.b16 %v356
      %v369 = vunpack.c.l.b16 %v357
      %v370 = vunpack.c.l.b16 %v358
      %v371 = vunpack.c.l.b16 %v359
      %v372 = vpack.c.b16 %v369, %v368
      %v373 = vpack.c.b16 %v371, %v370
      %vm376 = vcmask 261120
      %v378 = vsel %vm376, %v351, 0
      %380 = vmatprep.subr.bf16.mxu0 0
      %381 = vmatpush1.bf16.msra.mxu0 %v372
      %382 = vmatprep.subr.bf16.mxu0 0
      %383 = vmatpush1.bf16.msra.mxu0 %v373
      %384 = vmatprep.subr.bf16.mxu0 0
      %385 = vmatpush1.bf16.msra.mxu0 0
      %386 = vmatprep.subr.bf16.mxu0 0
      %387 = vmatpush1.bf16.msra.mxu0 0
      %388 = vmatprep.subr.bf16.mxu0 0
      %389 = vmatpush1.bf16.msra.mxu0 0
      %390 = vmatprep.subr.bf16.mxu0 0
      %391 = vmatpush1.bf16.msra.mxu0 0
      %392 = vmatprep.subr.bf16.mxu0 0
      %393 = vmatpush1.bf16.msra.mxu0 0
      %394 = vmatprep.subr.bf16.mxu0 0
      %395 = vmatpush1.bf16.msra.mxu0 0
      %396 = vmatprep.subr.bf16.mxu0 0
      %397 = vmatpush1.bf16.msra.mxu0 0
      %398 = vmatprep.subr.bf16.mxu0 0
      %399 = vmatpush1.bf16.msra.mxu0 0
      %400 = vmatprep.subr.bf16.mxu0 0
      %401 = vmatpush1.bf16.msra.mxu0 0
      %402 = vmatprep.subr.bf16.mxu0 0
      %403 = vmatpush1.bf16.msra.mxu0 0
      %404 = vmatprep.subr.bf16.mxu0 0
      %405 = vmatpush1.bf16.msra.mxu0 0
      %406 = vmatprep.subr.bf16.mxu0 0
      %407 = vmatpush1.bf16.msra.mxu0 0
      %408 = vmatprep.subr.bf16.mxu0 0
      %409 = vmatpush1.bf16.msra.mxu0 0
      %410 = vmatprep.subr.bf16.mxu0 0
      %411 = vmatpush1.bf16.msra.mxu0 0
      %412 = vmatprep.mubr.bf16.mxu0 0
      %413 = vmatmul.mubr.bf16.gmra.mrb[0].mxu0 %v378
      %v414 = vpop.f32.mrb[0].mxu0
      %v415 = vadd.f32 %v363, %v414
      %v416 = vpop.f32.mrb[0].mxu0
      %v417 = vpop.f32.mrb[0].mxu0
      %v418 = vpop.f32.mrb[0].mxu0
      %419 = vdwg.mxu0
      %v420 = vmul.f32 %v415, 0.35355338
      %v421 = vld [vmem:[%s4] sm:$0xf]
      %v422 = vld [vmem:[%s4 + $0x4] sm:$0xf]
      %v423 = vld [vmem:[%s4 + $0x8] sm:$0xf]
      %v424 = vld [vmem:[%s4 + $0xc] sm:$0xf]
      %v429 = vunpack.c.l.b16 %v421
      %v430 = vunpack.c.l.b16 %v422
      %v431 = vunpack.c.l.b16 %v423
      %v432 = vunpack.c.l.b16 %v424
      %v433 = vpack.c.b16 %v430, %v429
      %v434 = vpack.c.b16 %v432, %v431
      %v438 = vsel %vm376, %v352, 0
      %440 = vmatprep.subr.bf16.mxu0 0
      %441 = vmatpush1.bf16.msra.mxu0 %v433
      %442 = vmatprep.subr.bf16.mxu0 0
      %443 = vmatpush1.bf16.msra.mxu0 %v434
      %444 = vmatprep.subr.bf16.mxu0 0
      %445 = vmatpush1.bf16.msra.mxu0 0
      %446 = vmatprep.subr.bf16.mxu0 0
      %447 = vmatpush1.bf16.msra.mxu0 0
      %448 = vmatprep.subr.bf16.mxu0 0
      %449 = vmatpush1.bf16.msra.mxu0 0
      %450 = vmatprep.subr.bf16.mxu0 0
      %451 = vmatpush1.bf16.msra.mxu0 0
      %452 = vmatprep.subr.bf16.mxu0 0
      %453 = vmatpush1.bf16.msra.mxu0 0
      %454 = vmatprep.subr.bf16.mxu0 0
      %455 = vmatpush1.bf16.msra.mxu0 0
      %456 = vmatprep.subr.bf16.mxu0 0
      %457 = vmatpush1.bf16.msra.mxu0 0
      %458 = vmatprep.subr.bf16.mxu0 0
      %459 = vmatpush1.bf16.msra.mxu0 0
      %460 = vmatprep.subr.bf16.mxu0 0
      %461 = vmatpush1.bf16.msra.mxu0 0
      %462 = vmatprep.subr.bf16.mxu0 0
      %463 = vmatpush1.bf16.msra.mxu0 0
      %464 = vmatprep.subr.bf16.mxu0 0
      %465 = vmatpush1.bf16.msra.mxu0 0
      %466 = vmatprep.subr.bf16.mxu0 0
      %467 = vmatpush1.bf16.msra.mxu0 0
      %468 = vmatprep.subr.bf16.mxu0 0
      %469 = vmatpush1.bf16.msra.mxu0 0
      %470 = vmatprep.subr.bf16.mxu0 0
      %471 = vmatpush1.bf16.msra.mxu0 0
      %472 = vmatprep.mubr.bf16.mxu0 0
      %473 = vmatmul.mubr.bf16.gmra.mrb[0].mxu0 %v438
      %v474 = vpop.f32.mrb[0].mxu0
      %v475 = vadd.f32 0.0, %v474
      %v476 = vpop.f32.mrb[0].mxu0
      %v477 = vpop.f32.mrb[0].mxu0
      %v478 = vpop.f32.mrb[0].mxu0
      %479 = vdwg.mxu0
      %v480 = vlaneseq
      %v481 = vshrl.u32 %v480, 7
      %v482 = vsub.s32 1, %v481
      %v483 = vrot.slane %v353, %v482
      %v484 = vadd.f32 %v475, %v483
      %v485 = vlaneseq
      %v486 = vshrl.u32 %v485, 7
      %v487 = vsub.s32 2, %v486
      %v488 = vrot.slane %v353, %v487
      %490 = vrot.lane.b32.xlu0 %v488, 32
      %v491 = vpop.permute.xlu0 %490
      %v493 = vadd.f32 %v475, %v491
      %v494 = vpack.c.bf16 %v420, %v420
      %v495 = vpack.c.bf16 %v484, %v484
      %v496 = vpack.c.bf16 %v493, %v493
      %vm497 = vcmask 64512
      %v499 = vsel %vm497, %v494, 0
      %v502 = vsel %vm497, %v495, 0
      %504 = vmatprep.subr.bf16.mxu0 0
      %505 = vmatpush1.bf16.xpose.msra.mxu0 %v502
      %506 = vmatprep.subr.bf16.mxu0 0
      %507 = vmatpush1.bf16.xpose.msra.mxu0 0
      %508 = vmatprep.subr.bf16.mxu0 0
      %509 = vmatpush1.bf16.xpose.msra.mxu0 0
      %510 = vmatprep.subr.bf16.mxu0 0
      %511 = vmatpush1.bf16.xpose.msra.mxu0 0
      %512 = vmatprep.subr.bf16.mxu0 0
      %513 = vmatpush1.bf16.xpose.msra.mxu0 0
      %514 = vmatprep.subr.bf16.mxu0 0
      %515 = vmatpush1.bf16.xpose.msra.mxu0 0
      %516 = vmatprep.subr.bf16.mxu0 0
      %517 = vmatpush1.bf16.xpose.msra.mxu0 0
      %518 = vmatprep.subr.bf16.mxu0 0
      %519 = vmatpush1.bf16.xpose.msra.mxu0 0
      %520 = vmatprep.subr.bf16.mxu0 0
      %521 = vmatpush1.bf16.xpose.msra.mxu0 0
      %522 = vmatprep.subr.bf16.mxu0 0
      %523 = vmatpush1.bf16.xpose.msra.mxu0 0
      %524 = vmatprep.subr.bf16.mxu0 0
      %525 = vmatpush1.bf16.xpose.msra.mxu0 0
      %526 = vmatprep.subr.bf16.mxu0 0
      %527 = vmatpush1.bf16.xpose.msra.mxu0 0
      %528 = vmatprep.subr.bf16.mxu0 0
      %529 = vmatpush1.bf16.xpose.msra.mxu0 0
      %530 = vmatprep.subr.bf16.mxu0 0
      %531 = vmatpush1.bf16.xpose.msra.mxu0 0
      %532 = vmatprep.subr.bf16.mxu0 0
      %533 = vmatpush1.bf16.xpose.msra.mxu0 0
      %534 = vmatprep.subr.bf16.mxu0 0
      %535 = vmatpush1.bf16.xpose.msra.mxu0 0
      %536 = vmatprep.mubr.bf16.mxu0 0
      %537 = vmatmul.mubr.bf16.gmra.mrb[0].mxu0 %v499
      %v538 = vpop.f32.mrb[0].mxu0
      %v539 = vadd.f32 %v355, %v538
      %v540 = vpop.f32.mrb[0].mxu0
      %v541 = vpop.f32.mrb[0].mxu0
      %v542 = vpop.f32.mrb[0].mxu0
      %543 = vdwg.mxu0
      %v544 = vsel %vm497, %v539, -inf
      %545 = vmax.xlane.f32.xlu0 %v544
      %v546 = vpop.xlane.xlu0 %545
      %v547 = vsub.f32 %v539, %v546
      %v548 = vmul.f32 %v547, 1.442695
      %v549 = vpow.pop %v548
      %v550 = vsel %vm497, %v549, 0.0
      %551 = vadd.xlane.f32.xlu0 %v550
      %v552 = vpop.xlane.xlu0 %551
      %v553 = vrcp.pop %v552
      %v554 = vmul.f32 %v549, %v553
      %v555 = vpack.c.bf16 %v554, %v554
      %557 = vrot.lane.b32.xlu0 %v496, 96
      %v558 = vpop.permute.xlu0 %557
      %v560 = vsel %vm497, %v555, 0
      %vm562 = vcmask 1043456
      %v564 = vsel %vm562, %v558, 0
      %566 = vmatprep.subr.bf16.mxu0 0
      %567 = vmatpush1.bf16.msra.mxu0 %v564
      %568 = vmatprep.subr.bf16.mxu0 0
      %569 = vmatpush1.bf16.msra.mxu0 0
      %570 = vmatprep.subr.bf16.mxu0 0
      %571 = vmatpush1.bf16.msra.mxu0 0
      %572 = vmatprep.subr.bf16.mxu0 0
      %573 = vmatpush1.bf16.msra.mxu0 0
      %574 = vmatprep.subr.bf16.mxu0 0
      %575 = vmatpush1.bf16.msra.mxu0 0
      %576 = vmatprep.subr.bf16.mxu0 0
      %577 = vmatpush1.bf16.msra.mxu0 0
      %578 = vmatprep.subr.bf16.mxu0 0
      %579 = vmatpush1.bf16.msra.mxu0 0
      %580 = vmatprep.subr.bf16.mxu0 0
      %581 = vmatpush1.bf16.msra.mxu0 0
      %582 = vmatprep.subr.bf16.mxu0 0
      %583 = vmatpush1.bf16.msra.mxu0 0
      %584 = vmatprep.subr.bf16.mxu0 0
      %585 = vmatpush1.bf16.msra.mxu0 0
      %586 = vmatprep.subr.bf16.mxu0 0
      %587 = vmatpush1.bf16.msra.mxu0 0
      %588 = vmatprep.subr.bf16.mxu0 0
      %589 = vmatpush1.bf16.msra.mxu0 0
      %590 = vmatprep.subr.bf16.mxu0 0
      %591 = vmatpush1.bf16.msra.mxu0 0
      %592 = vmatprep.subr.bf16.mxu0 0
      %593 = vmatpush1.bf16.msra.mxu0 0
      %594 = vmatprep.subr.bf16.mxu0 0
      %595 = vmatpush1.bf16.msra.mxu0 0
      %596 = vmatprep.subr.bf16.mxu0 0
      %597 = vmatpush1.bf16.msra.mxu0 0
      %598 = vmatprep.mubr.bf16.mxu0 0
      %599 = vmatmul.mubr.bf16.gmra.mrb[0].mxu0 %v560
      %v600 = vpop.f32.mrb[0].mxu0
      %v601 = vadd.f32 0.0, %v600
      %v602 = vpop.f32.mrb[0].mxu0
      %v603 = vpop.f32.mrb[0].mxu0
      %v604 = vpop.f32.mrb[0].mxu0
      %605 = vdwg.mxu0
      %606 = vst.msk [vmem:[#allocation2] sm:$0xff] %vm497, %v601
      %608 = vrot.lane.b32.xlu0 %v494, 120
      %v609 = vpop.permute.xlu0 %608
      %611 = vrot.lane.b32.xlu0 %v495, 120
      %v612 = vpop.permute.xlu0 %611
      %v614 = vsel %vm497, %v609, 0
      %v617 = vsel %vm497, %v612, 0
      %619 = vmatprep.subr.bf16.mxu0 0
      %620 = vmatpush1.bf16.xpose.msra.mxu0 %v617
      %621 = vmatprep.subr.bf16.mxu0 0
      %622 = vmatpush1.bf16.xpose.msra.mxu0 0
      %623 = vmatprep.subr.bf16.mxu0 0
      %624 = vmatpush1.bf16.xpose.msra.mxu0 0
      %625 = vmatprep.subr.bf16.mxu0 0
      %626 = vmatpush1.bf16.xpose.msra.mxu0 0
      %627 = vmatprep.subr.bf16.mxu0 0
      %628 = vmatpush1.bf16.xpose.msra.mxu0 0
      %629 = vmatprep.subr.bf16.mxu0 0
      %630 = vmatpush1.bf16.xpose.msra.mxu0 0
      %631 = vmatprep.subr.bf16.mxu0 0
      %632 = vmatpush1.bf16.xpose.msra.mxu0 0
      %633 = vmatprep.subr.bf16.mxu0 0
      %634 = vmatpush1.bf16.xpose.msra.mxu0 0
      %635 = vmatprep.subr.bf16.mxu0 0
      %636 = vmatpush1.bf16.xpose.msra.mxu0 0
      %637 = vmatprep.subr.bf16.mxu0 0
      %638 = vmatpush1.bf16.xpose.msra.mxu0 0
      %639 = vmatprep.subr.bf16.mxu0 0
      %640 = vmatpush1.bf16.xpose.msra.mxu0 0
      %641 = vmatprep.subr.bf16.mxu0 0
      %642 = vmatpush1.bf16.xpose.msra.mxu0 0
      %643 = vmatprep.subr.bf16.mxu0 0
      %644 = vmatpush1.bf16.xpose.msra.mxu0 0
      %645 = vmatprep.subr.bf16.mxu0 0
      %646 = vmatpush1.bf16.xpose.msra.mxu0 0
      %647 = vmatprep.subr.bf16.mxu0 0
      %648 = vmatpush1.bf16.xpose.msra.mxu0 0
      %649 = vmatprep.subr.bf16.mxu0 0
      %650 = vmatpush1.bf16.xpose.msra.mxu0 0
      %651 = vmatprep.mubr.bf16.mxu0 0
      %652 = vmatmul.mubr.bf16.gmra.mrb[0].mxu0 %v614
      %v653 = vpop.f32.mrb[0].mxu0
      %v654 = vadd.f32 %v355, %v653
      %v655 = vpop.f32.mrb[0].mxu0
      %v656 = vpop.f32.mrb[0].mxu0
      %v657 = vpop.f32.mrb[0].mxu0
      %658 = vdwg.mxu0
      %v659 = vsel %vm497, %v654, -inf
      %660 = vmax.xlane.f32.xlu0 %v659
      %v661 = vpop.xlane.xlu0 %660
      %v662 = vsub.f32 %v654, %v661
      %v663 = vmul.f32 %v662, 1.442695
      %v664 = vpow.pop %v663
      %v665 = vsel %vm497, %v664, 0.0
      %666 = vadd.xlane.f32.xlu0 %v665
      %v667 = vpop.xlane.xlu0 %666
      %v668 = vrcp.pop %v667
      %v669 = vmul.f32 %v664, %v668
      %v670 = vpack.c.bf16 %v669, %v669
      %671 = vrot.lane.b32.xlu0 %v496, 88
      %v672 = vpop.permute.xlu0 %671
      %v674 = vsel %vm497, %v670, 0
      %v677 = vsel %vm562, %v672, 0
      %679 = vmatprep.subr.bf16.mxu0 0
      %680 = vmatpush1.bf16.msra.mxu0 %v677
      %681 = vmatprep.subr.bf16.mxu0 0
      %682 = vmatpush1.bf16.msra.mxu0 0
      %683 = vmatprep.subr.bf16.mxu0 0
      %684 = vmatpush1.bf16.msra.mxu0 0
      %685 = vmatprep.subr.bf16.mxu0 0
      %686 = vmatpush1.bf16.msra.mxu0 0
      %687 = vmatprep.subr.bf16.mxu0 0
      %688 = vmatpush1.bf16.msra.mxu0 0
      %689 = vmatprep.subr.bf16.mxu0 0
      %690 = vmatpush1.bf16.msra.mxu0 0
      %691 = vmatprep.subr.bf16.mxu0 0
      %692 = vmatpush1.bf16.msra.mxu0 0
      %693 = vmatprep.subr.bf16.mxu0 0
      %694 = vmatpush1.bf16.msra.mxu0 0
      %695 = vmatprep.subr.bf16.mxu0 0
      %696 = vmatpush1.bf16.msra.mxu0 0
      %697 = vmatprep.subr.bf16.mxu0 0
      %698 = vmatpush1.bf16.msra.mxu0 0
      %699 = vmatprep.subr.bf16.mxu0 0
      %700 = vmatpush1.bf16.msra.mxu0 0
      %701 = vmatprep.subr.bf16.mxu0 0
      %702 = vmatpush1.bf16.msra.mxu0 0
      %703 = vmatprep.subr.bf16.mxu0 0
      %704 = vmatpush1.bf16.msra.mxu0 0
      %705 = vmatprep.subr.bf16.mxu0 0
      %706 = vmatpush1.bf16.msra.mxu0 0
      %707 = vmatprep.subr.bf16.mxu0 0
      %708 = vmatpush1.bf16.msra.mxu0 0
      %709 = vmatprep.subr.bf16.mxu0 0
      %710 = vmatpush1.bf16.msra.mxu0 0
      %711 = vmatprep.mubr.bf16.mxu0 0
      %712 = vmatmul.mubr.bf16.gmra.mrb[0].mxu0 %v674
      %v713 = vpop.f32.mrb[0].mxu0
      %v714 = vadd.f32 0.0, %v713
      %v715 = vpop.f32.mrb[0].mxu0
      %v716 = vpop.f32.mrb[0].mxu0
      %v717 = vpop.f32.mrb[0].mxu0
      %718 = vdwg.mxu0
      %720 = vrot.lane.b32.xlu0 %v714, 8
      %v721 = vpop.permute.xlu0 %720
      %vm723 = vcmask 130112
      %724 = vst.msk [vmem:[#allocation2] sm:$0xff] %vm723, %v721
      %725 = vrot.lane.b32.xlu0 %v494, 112
      %v726 = vpop.permute.xlu0 %725
      %727 = vrot.lane.b32.xlu0 %v495, 112
      %v728 = vpop.permute.xlu0 %727
      %v730 = vsel %vm497, %v726, 0
      %v733 = vsel %vm497, %v728, 0
      %735 = vmatprep.subr.bf16.mxu0 0
      %736 = vmatpush1.bf16.xpose.msra.mxu0 %v733
      %737 = vmatprep.subr.bf16.mxu0 0
      %738 = vmatpush1.bf16.xpose.msra.mxu0 0
      %739 = vmatprep.subr.bf16.mxu0 0
      %740 = vmatpush1.bf16.xpose.msra.mxu0 0
      %741 = vmatprep.subr.bf16.mxu0 0
      %742 = vmatpush1.bf16.xpose.msra.mxu0 0
      %743 = vmatprep.subr.bf16.mxu0 0
      %744 = vmatpush1.bf16.xpose.msra.mxu0 0
      %745 = vmatprep.subr.bf16.mxu0 0
      %746 = vmatpush1.bf16.xpose.msra.mxu0 0
      %747 = vmatprep.subr.bf16.mxu0 0
      %748 = vmatpush1.bf16.xpose.msra.mxu0 0
      %749 = vmatprep.subr.bf16.mxu0 0
      %750 = vmatpush1.bf16.xpose.msra.mxu0 0
      %751 = vmatprep.subr.bf16.mxu0 0
      %752 = vmatpush1.bf16.xpose.msra.mxu0 0
      %753 = vmatprep.subr.bf16.mxu0 0
      %754 = vmatpush1.bf16.xpose.msra.mxu0 0
      %755 = vmatprep.subr.bf16.mxu0 0
      %756 = vmatpush1.bf16.xpose.msra.mxu0 0
      %757 = vmatprep.subr.bf16.mxu0 0
      %758 = vmatpush1.bf16.xpose.msra.mxu0 0
      %759 = vmatprep.subr.bf16.mxu0 0
      %760 = vmatpush1.bf16.xpose.msra.mxu0 0
      %761 = vmatprep.subr.bf16.mxu0 0
      %762 = vmatpush1.bf16.xpose.msra.mxu0 0
      %763 = vmatprep.subr.bf16.mxu0 0
      %764 = vmatpush1.bf16.xpose.msra.mxu0 0
      %765 = vmatprep.subr.bf16.mxu0 0
      %766 = vmatpush1.bf16.xpose.msra.mxu0 0
      %767 = vmatprep.mubr.bf16.mxu0 0
      %768 = vmatmul.mubr.bf16.gmra.mrb[0].mxu0 %v730
      %v769 = vpop.f32.mrb[0].mxu0
      %v770 = vadd.f32 %v355, %v769
      %v771 = vpop.f32.mrb[0].mxu0
      %v772 = vpop.f32.mrb[0].mxu0
      %v773 = vpop.f32.mrb[0].mxu0
      %774 = vdwg.mxu0
      %v775 = vsel %vm497, %v770, -inf
      %776 = vmax.xlane.f32.xlu0 %v775
      %v777 = vpop.xlane.xlu0 %776
      %v778 = vsub.f32 %v770, %v777
      %v779 = vmul.f32 %v778, 1.442695
      %v780 = vpow.pop %v779
      %v781 = vsel %vm497, %v780, 0.0
      %782 = vadd.xlane.f32.xlu0 %v781
      %v783 = vpop.xlane.xlu0 %782
      %v784 = vrcp.pop %v783
      %v785 = vmul.f32 %v780, %v784
      %v786 = vpack.c.bf16 %v785, %v785
      %787 = vrot.lane.b32.xlu0 %v496, 80
      %v788 = vpop.permute.xlu0 %787
      %v790 = vsel %vm497, %v786, 0
      %v793 = vsel %vm562, %v788, 0
      %795 = vmatprep.subr.bf16.mxu0 0
      %796 = vmatpush1.bf16.msra.mxu0 %v793
      %797 = vmatprep.subr.bf16.mxu0 0
      %798 = vmatpush1.bf16.msra.mxu0 0
      %799 = vmatprep.subr.bf16.mxu0 0
      %800 = vmatpush1.bf16.msra.mxu0 0
      %801 = vmatprep.subr.bf16.mxu0 0
      %802 = vmatpush1.bf16.msra.mxu0 0
      %803 = vmatprep.subr.bf16.mxu0 0
      %804 = vmatpush1.bf16.msra.mxu0 0
      %805 = vmatprep.subr.bf16.mxu0 0
      %806 = vmatpush1.bf16.msra.mxu0 0
      %807 = vmatprep.subr.bf16.mxu0 0
      %808 = vmatpush1.bf16.msra.mxu0 0
      %809 = vmatprep.subr.bf16.mxu0 0
      %810 = vmatpush1.bf16.msra.mxu0 0
      %811 = vmatprep.subr.bf16.mxu0 0
      %812 = vmatpush1.bf16.msra.mxu0 0
      %813 = vmatprep.subr.bf16.mxu0 0
      %814 = vmatpush1.bf16.msra.mxu0 0
      %815 = vmatprep.subr.bf16.mxu0 0
      %816 = vmatpush1.bf16.msra.mxu0 0
      %817 = vmatprep.subr.bf16.mxu0 0
      %818 = vmatpush1.bf16.msra.mxu0 0
      %819 = vmatprep.subr.bf16.mxu0 0
      %820 = vmatpush1.bf16.msra.mxu0 0
      %821 = vmatprep.subr.bf16.mxu0 0
      %822 = vmatpush1.bf16.msra.mxu0 0
      %823 = vmatprep.subr.bf16.mxu0 0
      %824 = vmatpush1.bf16.msra.mxu0 0
      %825 = vmatprep.subr.bf16.mxu0 0
      %826 = vmatpush1.bf16.msra.mxu0 0
      %827 = vmatprep.mubr.bf16.mxu0 0
      %828 = vmatmul.mubr.bf16.gmra.mrb[0].mxu0 %v790
      %v829 = vpop.f32.mrb[0].mxu0
      %v830 = vadd.f32 0.0, %v829
      %v831 = vpop.f32.mrb[0].mxu0
      %v832 = vpop.f32.mrb[0].mxu0
      %v833 = vpop.f32.mrb[0].mxu0
      %834 = vdwg.mxu0
      %836 = vrot.lane.b32.xlu0 %v830, 16
      %v837 = vpop.permute.xlu0 %836
      %vm839 = vcmask 195712
      %840 = vst.msk [vmem:[#allocation2] sm:$0xff] %vm839, %v837
      %841 = vrot.lane.b32.xlu0 %v494, 104
      %v842 = vpop.permute.xlu0 %841
      %843 = vrot.lane.b32.xlu0 %v495, 104
      %v844 = vpop.permute.xlu0 %843
      %v846 = vsel %vm497, %v842, 0
      %v849 = vsel %vm497, %v844, 0
      %851 = vmatprep.subr.bf16.mxu0 0
      %852 = vmatpush1.bf16.xpose.msra.mxu0 %v849
      %853 = vmatprep.subr.bf16.mxu0 0
      %854 = vmatpush1.bf16.xpose.msra.mxu0 0
      %855 = vmatprep.subr.bf16.mxu0 0
      %856 = vmatpush1.bf16.xpose.msra.mxu0 0
      %857 = vmatprep.subr.bf16.mxu0 0
      %858 = vmatpush1.bf16.xpose.msra.mxu0 0
      %859 = vmatprep.subr.bf16.mxu0 0
      %860 = vmatpush1.bf16.xpose.msra.mxu0 0
      %861 = vmatprep.subr.bf16.mxu0 0
      %862 = vmatpush1.bf16.xpose.msra.mxu0 0
      %863 = vmatprep.subr.bf16.mxu0 0
      %864 = vmatpush1.bf16.xpose.msra.mxu0 0
      %865 = vmatprep.subr.bf16.mxu0 0
      %866 = vmatpush1.bf16.xpose.msra.mxu0 0
      %867 = vmatprep.subr.bf16.mxu0 0
      %868 = vmatpush1.bf16.xpose.msra.mxu0 0
      %869 = vmatprep.subr.bf16.mxu0 0
      %870 = vmatpush1.bf16.xpose.msra.mxu0 0
      %871 = vmatprep.subr.bf16.mxu0 0
      %872 = vmatpush1.bf16.xpose.msra.mxu0 0
      %873 = vmatprep.subr.bf16.mxu0 0
      %874 = vmatpush1.bf16.xpose.msra.mxu0 0
      %875 = vmatprep.subr.bf16.mxu0 0
      %876 = vmatpush1.bf16.xpose.msra.mxu0 0
      %877 = vmatprep.subr.bf16.mxu0 0
      %878 = vmatpush1.bf16.xpose.msra.mxu0 0
      %879 = vmatprep.subr.bf16.mxu0 0
      %880 = vmatpush1.bf16.xpose.msra.mxu0 0
      %881 = vmatprep.subr.bf16.mxu0 0
      %882 = vmatpush1.bf16.xpose.msra.mxu0 0
      %883 = vmatprep.mubr.bf16.mxu0 0
      %884 = vmatmul.mubr.bf16.gmra.mrb[0].mxu0 %v846
      %v885 = vpop.f32.mrb[0].mxu0
      %v886 = vadd.f32 %v355, %v885
      %v887 = vpop.f32.mrb[0].mxu0
      %v888 = vpop.f32.mrb[0].mxu0
      %v889 = vpop.f32.mrb[0].mxu0
      %890 = vdwg.mxu0
      %v891 = vsel %vm497, %v886, -inf
      %892 = vmax.xlane.f32.xlu0 %v891
      %v893 = vpop.xlane.xlu0 %892
      %v894 = vsub.f32 %v886, %v893
      %v895 = vmul.f32 %v894, 1.442695
      %v896 = vpow.pop %v895
      %v897 = vsel %vm497, %v896, 0.0
      %898 = vadd.xlane.f32.xlu0 %v897
      %v899 = vpop.xlane.xlu0 %898
      %v900 = vrcp.pop %v899
      %v901 = vmul.f32 %v896, %v900
      %v902 = vpack.c.bf16 %v901, %v901
      %903 = vrot.lane.b32.xlu0 %v496, 72
      %v904 = vpop.permute.xlu0 %903
      %v906 = vsel %vm497, %v902, 0
      %v909 = vsel %vm562, %v904, 0
      %911 = vmatprep.subr.bf16.mxu0 0
      %912 = vmatpush1.bf16.msra.mxu0 %v909
      %913 = vmatprep.subr.bf16.mxu0 0
      %914 = vmatpush1.bf16.msra.mxu0 0
      %915 = vmatprep.subr.bf16.mxu0 0
      %916 = vmatpush1.bf16.msra.mxu0 0
      %917 = vmatprep.subr.bf16.mxu0 0
      %918 = vmatpush1.bf16.msra.mxu0 0
      %919 = vmatprep.subr.bf16.mxu0 0
      %920 = vmatpush1.bf16.msra.mxu0 0
      %921 = vmatprep.subr.bf16.mxu0 0
      %922 = vmatpush1.bf16.msra.mxu0 0
      %923 = vmatprep.subr.bf16.mxu0 0
      %924 = vmatpush1.bf16.msra.mxu0 0
      %925 = vmatprep.subr.bf16.mxu0 0
      %926 = vmatpush1.bf16.msra.mxu0 0
      %927 = vmatprep.subr.bf16.mxu0 0
      %928 = vmatpush1.bf16.msra.mxu0 0
      %929 = vmatprep.subr.bf16.mxu0 0
      %930 = vmatpush1.bf16.msra.mxu0 0
      %931 = vmatprep.subr.bf16.mxu0 0
      %932 = vmatpush1.bf16.msra.mxu0 0
      %933 = vmatprep.subr.bf16.mxu0 0
      %934 = vmatpush1.bf16.msra.mxu0 0
      %935 = vmatprep.subr.bf16.mxu0 0
      %936 = vmatpush1.bf16.msra.mxu0 0
      %937 = vmatprep.subr.bf16.mxu0 0
      %938 = vmatpush1.bf16.msra.mxu0 0
      %939 = vmatprep.subr.bf16.mxu0 0
      %940 = vmatpush1.bf16.msra.mxu0 0
      %941 = vmatprep.subr.bf16.mxu0 0
      %942 = vmatpush1.bf16.msra.mxu0 0
      %943 = vmatprep.mubr.bf16.mxu0 0
      %944 = vmatmul.mubr.bf16.gmra.mrb[0].mxu0 %v906
      %v945 = vpop.f32.mrb[0].mxu0
      %v946 = vadd.f32 0.0, %v945
      %v947 = vpop.f32.mrb[0].mxu0
      %v948 = vpop.f32.mrb[0].mxu0
      %v949 = vpop.f32.mrb[0].mxu0
      %950 = vdwg.mxu0
      %952 = vrot.lane.b32.xlu0 %v946, 24
      %v953 = vpop.permute.xlu0 %952
      %vm955 = vcmask 261312
      %956 = vst.msk [vmem:[#allocation2] sm:$0xff] %vm955, %v953
      %v957 = vld [vmem:[#allocation2] sm:$0xff]
      %v958 = vpack.c.bf16 %v957, %v957
      %v959 = vld [vmem:[%s5] sm:$0xf]
      %v960 = vld [vmem:[%s5 + $0x4] sm:$0xf]
      %v961 = vld [vmem:[%s5 + $0x8] sm:$0xf]
      %v962 = vld [vmem:[%s5 + $0xc] sm:$0xf]
      %v963 = vlaneseq
      %v964 = vshrl.u32 %v963, 7
      %v965 = vsub.s32 3, %v964
      %v966 = vrot.slane %v353, %v965
      %v971 = vunpack.c.l.b16 %v959
      %v972 = vunpack.c.l.b16 %v960
      %v973 = vunpack.c.l.b16 %v961
      %v974 = vunpack.c.l.b16 %v962
      %v975 = vpack.c.b16 %v972, %v971
      %v976 = vpack.c.b16 %v974, %v973
      %v980 = vsel %vm376, %v958, 0
      %982 = vmatprep.subr.bf16.mxu0 0
      %983 = vmatpush1.bf16.msra.mxu0 %v975
      %984 = vmatprep.subr.bf16.mxu0 0
      %985 = vmatpush1.bf16.msra.mxu0 %v976
      %986 = vmatprep.subr.bf16.mxu0 0
      %987 = vmatpush1.bf16.msra.mxu0 0
      %988 = vmatprep.subr.bf16.mxu0 0
      %989 = vmatpush1.bf16.msra.mxu0 0
      %990 = vmatprep.subr.bf16.mxu0 0
      %991 = vmatpush1.bf16.msra.mxu0 0
      %992 = vmatprep.subr.bf16.mxu0 0
      %993 = vmatpush1.bf16.msra.mxu0 0
      %994 = vmatprep.subr.bf16.mxu0 0
      %995 = vmatpush1.bf16.msra.mxu0 0
      %996 = vmatprep.subr.bf16.mxu0 0
      %997 = vmatpush1.bf16.msra.mxu0 0
      %998 = vmatprep.subr.bf16.mxu0 0
      %999 = vmatpush1.bf16.msra.mxu0 0
      %1000 = vmatprep.subr.bf16.mxu0 0
      %1001 = vmatpush1.bf16.msra.mxu0 0
      %1002 = vmatprep.subr.bf16.mxu0 0
      %1003 = vmatpush1.bf16.msra.mxu0 0
      %1004 = vmatprep.subr.bf16.mxu0 0
      %1005 = vmatpush1.bf16.msra.mxu0 0
      %1006 = vmatprep.subr.bf16.mxu0 0
      %1007 = vmatpush1.bf16.msra.mxu0 0
      %1008 = vmatprep.subr.bf16.mxu0 0
      %1009 = vmatpush1.bf16.msra.mxu0 0
      %1010 = vmatprep.subr.bf16.mxu0 0
      %1011 = vmatpush1.bf16.msra.mxu0 0
      %1012 = vmatprep.subr.bf16.mxu0 0
      %1013 = vmatpush1.bf16.msra.mxu0 0
      %1014 = vmatprep.mubr.bf16.mxu0 0
      %1015 = vmatmul.mubr.bf16.gmra.mrb[0].mxu0 %v980
      %v1016 = vpop.f32.mrb[0].mxu0
      %v1017 = vadd.f32 %v966, %v1016
      %v1018 = vpop.f32.mrb[0].mxu0
      %v1019 = vpop.f32.mrb[0].mxu0
      %v1020 = vpop.f32.mrb[0].mxu0
      %1021 = vdwg.mxu0
      %v1022 = vunpack.c.l.bf16 %v351
      %v1023 = vadd.f32 %v1017, %v1022
      %v1024 = vsel %vm376, %v1023, 0.0
      %1025 = vadd.xlane.f32.xlu0 %v1024
      %v1026 = vpop.xlane.xlu0 %1025
      %v1027 = vrcp.pop 32.0
      %v1028 = vmul.f32 %v1026, %v1027
      %v1029 = vsub.f32 %v1023, %v1028
      %v1030 = vmul.f32 %v1029, %v1029
      %v1031 = vsel %vm376, %v1030, 0.0
      %1032 = vadd.xlane.f32.xlu0 %v1031
      %v1033 = vpop.xlane.xlu0 %1032
      %v1034 = vmul.f32 %v1033, %v1027
      %v1035 = vadd.f32 %v1034, 1e-12
      %v1036 = vrsqrt.pop %v1035
      %v1037 = vmul.f32 %v1029, %v1036
      %v1038 = vlaneseq
      %v1039 = vshrl.u32 %v1038, 7
      %v1040 = vsub.s32 4, %v1039
      %v1041 = vrot.slane %v353, %v1040
      %v1042 = vmul.f32 %v1037, %v1041
      %v1043 = vlaneseq
      %v1044 = vshrl.u32 %v1043, 7
      %v1045 = vsub.s32 5, %v1044
      %v1046 = vrot.slane %v353, %v1045
      %v1047 = vadd.f32 %v1042, %v1046
      %v1048 = vpack.c.bf16 %v1047, %v1047
      %vm1049 = vcmask 257024
      %1050 = vst.msk [vmem:[%s349] sm:$0xf] %vm1049, %v1048
      %p1051 = scmp.lt.s32.totalorder %s22, 1
      %s1052 = scalar_select %p1051, %s22, 1
      %p1053 = scmp.lt.s32.totalorder %s23, 0
      %s1054 = scalar_select %p1053, %s23, 0
      %s1055 = sadd.s32 %s1054, %s1052
      %s1056 = smul.addr %s1055, 4
      %s1057 = scalar_lea.vmem %s7, %s1056
      // Predicated region
      $region49: #{_lambda_.7} parent=47 // pred_check
        %p1058 = pneg %p216
      $region50: #{_lambda_.7} parent=47 // pred_check_branch
        %1060 = sbr.rel (%p1058) target = $region52
      $region51: #{_lambda_.7} parent=47 // pred_region
        _
      $region52: #{_lambda_.7} parent=47 // pred_fallthru
        _
    $region48: #{_lambda_.7} parent=5 // pred_fallthru
      _
    %p1061 = scmp.le.s32.totalorder 2, %s13
    // Predicated region
    $region53: #{_lambda_.7} parent=5 // pred_check
      %p1062 = pneg %p1061
    $region54: #{_lambda_.7} parent=5 // pred_check_branch
      %1064 = sbr.rel (%p1062) target = $region56
    $region55: #{_lambda_.7} parent=5 // pred_region
      %s1065 = ssub.s32 %s13, 2
      // Predicated region
      $region57: #{_lambda_.7} parent=55 // pred_check
        %p1066 = pneg %p222
      $region58: #{_lambda_.7} parent=55 // pred_check_branch
        %1068 = sbr.rel (%p1066) target = $region60
      $region59: #{_lambda_.7} parent=55 // pred_region
        %p1069 = scmp.lt.s32.totalorder %s24, 1
        %s1070 = scalar_select %p1069, %s24, 1
        %p1071 = scmp.lt.s32.totalorder %s25, 0
        %s1072 = scalar_select %p1071, %s25, 0
        %s1073 = sadd.s32 %s1072, %s1070
        %s1074 = smul.addr %s1073, 4
        %s1075 = scalar_lea.vmem %s7, %s1074
      $region60: #{_lambda_.7} parent=55 // pred_fallthru
        _
    $region56: #{_lambda_.7} parent=5 // pred_fallthru
      _
  $region6: #{_lambda_.7} parent=0 // loop_footer
    %s17 = sadd.s32 1, %s13
  $region7: #{_lambda_.7} parent=0 // loop_footer_branch
    %12 = sbr.rel target = $region3
  $region8: #{_lambda_.7} parent=0 // loop_exit
    _

// kernel: _lambda_.8
$region0: #{_lambda_.8}
  #allocation0 [shape = 'u32[]', space=smem, size = 0x4, offset = 0x4, fixed_abs, tag = 'smem constant byte address 0x4 - core index']
  #allocation1 [shape = 'u32[144,128]{1,0:T(1,128)}', space=vmem, size = 0x12000, scoped, tag = 'internal scratch']
  #allocation2 [shape = 'f32[8,32]{1,0:T(8,128)}', space=vmem, size = 0x1000, scoped, tag = 'scratch operand']
  %s0 = inlined_call_operand.vmem [shape: bf16[2,8,32], index: 0, kind: input, shape index: {}]
  %s1 = inlined_call_operand.vmem [shape: bf16[2,8,32], index: 1, kind: input, shape index: {}]
  %s2 = inlined_call_operand.vmem [shape: bf16[2,1,1,8], index: 2, kind: input, shape index: {}]
  %s3 = inlined_call_operand.vmem [shape: bf16[32,32], index: 3, kind: input, shape index: {}]
  %s4 = inlined_call_operand.vmem [shape: bf16[32,64], index: 4, kind: input, shape index: {}]
  %s5 = inlined_call_operand.vmem [shape: bf16[32,32], index: 5, kind: input, shape index: {}]
  %s6 = inlined_call_operand.vmem [shape: f32[6,32], index: 6, kind: input, shape index: {}]
  %s7 = inlined_call_operand.vmem [shape: bf16[2,8,32], index: 7, kind: output, shape index: {}]
  %s8 = sld [smem:[#allocation0]]
  $region61: #{_lambda_.8} parent=0
    _
  %s10 = ssub.s32 1, %s8
  %s11 = scalar_select 0, %s10, %s8
  loop: start=0, step=1, limit=4
  $region2: #{_lambda_.8} parent=0 // loop_pre_header
    _
  $region3: #{_lambda_.8} parent=0 // loop_header
    %s13 = sphi 0, %s17
    %p14 = scmp.ge.s32.totalorder %s13, 4
    %s20 = sphi 0, %s32
    %s21 = sphi 0, %s28
    %s22 = sphi 0, %s20
    %s23 = sphi 0, %s21
    %s24 = sphi 0, %s22
    %s25 = sphi 0, %s23
    %s37 = sphi 0, %s39
    %s40 = sphi 0, %s37
    %s41 = sphi 0, %s40
    %s57 = sphi 0, %s41
    %s63 = sphi 0, %s65
    %s66 = sphi 0, %s63
    %s67 = sphi 0, %s66
    %s83 = sphi 0, %s67
    %s89 = sphi 0, %s91
    %s92 = sphi 0, %s89
    %s93 = sphi 0, %s92
    %s109 = sphi 0, %s93
    %s113 = sphi 0, %s113
    %s115 = sphi 0, %s113
    %s116 = sphi 0, %s115
    %s130 = sphi 0, %s116
    %s134 = sphi 0, %s134
    %s136 = sphi 0, %s134
    %s137 = sphi 0, %s136
    %s151 = sphi 0, %s137
    %s155 = sphi 0, %s155
    %s157 = sphi 0, %s155
    %s158 = sphi 0, %s157
    %s172 = sphi 0, %s158
    %s176 = sphi 0, %s176
    %s178 = sphi 0, %s176
    %s179 = sphi 0, %s178
    %s193 = sphi 0, %s179
    %s201 = sphi 0, %s203
    %s204 = sphi 0, %s201
    %s205 = sphi 0, %s204
    %s221 = sphi 0, %s205
  $region4: #{_lambda_.8} parent=0 // loop_header_branch
    %16 = sbr.rel (%p14) target = $region8
  $region5: #{_lambda_.8} parent=0 // loop_body
    %s18 = ssub.s32 %s13, 1
    %s19 = ssub.s32 %s13, 2
    %s26 = sadd.s32 1, %s21
    %p27 = scmp.ge.s32.totalorder %s26, 1
    %s28 = scalar_select %p27, 0, %s26
    %s29 = sadd.s32 1, %s20
    %s30 = scalar_select %p27, %s29, %s20
    %p31 = scmp.ge.s32.totalorder %s30, 2
    %s32 = scalar_select %p31, 0, %s30
    %s33 = ssub.s32 %s20, %s32
    %s34 = ssub.s32 %s21, %s28
    %s35 = sor.u32 %s33, %s34
    %p36 = scmp.eq.s32.totalorder %s35, 0
    %s38 = sadd.s32 %s37, 1
    %s39 = scalar_select %p36, %s37, %s38
    %p42 = pneg %p36
    %p43 = scmp.eq.s32.totalorder %s13, 1
    %p44 = por %p42, %p43
    %p45 = scmp.ne.s32.totalorder %s37, %s40
    %p46 = scmp.eq.s32.totalorder %s13, 0
    %p47 = por %p45, %p46
    %p48 = scmp.ne.s32.totalorder %s37, %s40
    %p49 = scmp.eq.s32.totalorder %s18, 1
    %p50 = por %p48, %p49
    %p51 = scmp.ne.s32.totalorder %s40, %s41
    %p52 = scmp.eq.s32.totalorder %s18, 0
    %p53 = por %p51, %p52
    %p54 = scmp.ne.s32.totalorder %s40, %s41
    %p55 = scmp.eq.s32.totalorder %s19, 1
    %p56 = por %p54, %p55
    %p58 = scmp.ne.s32.totalorder %s41, %s57
    %p59 = scmp.eq.s32.totalorder %s19, 0
    %p60 = por %p58, %p59
    %s61 = ssub.s32 %s20, %s32
    %p62 = scmp.eq.s32.totalorder %s61, 0
    %s64 = sadd.s32 %s63, 1
    %s65 = scalar_select %p62, %s63, %s64
    %p68 = pneg %p62
    %p69 = scmp.eq.s32.totalorder %s13, 1
    %p70 = por %p68, %p69
    %p71 = scmp.ne.s32.totalorder %s63, %s66
    %p72 = scmp.eq.s32.totalorder %s13, 0
    %p73 = por %p71, %p72
    %p74 = scmp.ne.s32.totalorder %s63, %s66
    %p75 = scmp.eq.s32.totalorder %s18, 1
    %p76 = por %p74, %p75
    %p77 = scmp.ne.s32.totalorder %s66, %s67
    %p78 = scmp.eq.s32.totalorder %s18, 0
    %p79 = por %p77, %p78
    %p80 = scmp.ne.s32.totalorder %s66, %s67
    %p81 = scmp.eq.s32.totalorder %s19, 1
    %p82 = por %p80, %p81
    %p84 = scmp.ne.s32.totalorder %s67, %s83
    %p85 = scmp.eq.s32.totalorder %s19, 0
    %p86 = por %p84, %p85
    %s87 = ssub.s32 %s20, %s32
    %p88 = scmp.eq.s32.totalorder %s87, 0
    %s90 = sadd.s32 %s89, 1
    %s91 = scalar_select %p88, %s89, %s90
    %p94 = pneg %p88
    %p95 = scmp.eq.s32.totalorder %s13, 1
    %p96 = por %p94, %p95
    %p97 = scmp.ne.s32.totalorder %s89, %s92
    %p98 = scmp.eq.s32.totalorder %s13, 0
    %p99 = por %p97, %p98
    %p100 = scmp.ne.s32.totalorder %s89, %s92
    %p101 = scmp.eq.s32.totalorder %s18, 1
    %p102 = por %p100, %p101
    %p103 = scmp.ne.s32.totalorder %s92, %s93
    %p104 = scmp.eq.s32.totalorder %s18, 0
    %p105 = por %p103, %p104
    %p106 = scmp.ne.s32.totalorder %s92, %s93
    %p107 = scmp.eq.s32.totalorder %s19, 1
    %p108 = por %p106, %p107
    %p110 = scmp.ne.s32.totalorder %s93, %s109
    %p111 = scmp.eq.s32.totalorder %s19, 0
    %p112 = por %p110, %p111
    %s114 = sadd.s32 %s113, 1
    %p117 = scmp.eq.s32.totalorder %s13, 1
    %p118 = scmp.ne.s32.totalorder %s113, %s115
    %p119 = scmp.eq.s32.totalorder %s13, 0
    %p120 = por %p118, %p119
    %p121 = scmp.ne.s32.totalorder %s113, %s115
    %p122 = scmp.eq.s32.totalorder %s18, 1
    %p123 = por %p121, %p122
    %p124 = scmp.ne.s32.totalorder %s115, %s116
    %p125 = scmp.eq.s32.totalorder %s18, 0
    %p126 = por %p124, %p125
    %p127 = scmp.ne.s32.totalorder %s115, %s116
    %p128 = scmp.eq.s32.totalorder %s19, 1
    %p129 = por %p127, %p128
    %p131 = scmp.ne.s32.totalorder %s116, %s130
    %p132 = scmp.eq.s32.totalorder %s19, 0
    %p133 = por %p131, %p132
    %s135 = sadd.s32 %s134, 1
    %p138 = scmp.eq.s32.totalorder %s13, 1
    %p139 = scmp.ne.s32.totalorder %s134, %s136
    %p140 = scmp.eq.s32.totalorder %s13, 0
    %p141 = por %p139, %p140
    %p142 = scmp.ne.s32.totalorder %s134, %s136
    %p143 = scmp.eq.s32.totalorder %s18, 1
    %p144 = por %p142, %p143
    %p145 = scmp.ne.s32.totalorder %s136, %s137
    %p146 = scmp.eq.s32.totalorder %s18, 0
    %p147 = por %p145, %p146
    %p148 = scmp.ne.s32.totalorder %s136, %s137
    %p149 = scmp.eq.s32.totalorder %s19, 1
    %p150 = por %p148, %p149
    %p152 = scmp.ne.s32.totalorder %s137, %s151
    %p153 = scmp.eq.s32.totalorder %s19, 0
    %p154 = por %p152, %p153
    %s156 = sadd.s32 %s155, 1
    %p159 = scmp.eq.s32.totalorder %s13, 1
    %p160 = scmp.ne.s32.totalorder %s155, %s157
    %p161 = scmp.eq.s32.totalorder %s13, 0
    %p162 = por %p160, %p161
    %p163 = scmp.ne.s32.totalorder %s155, %s157
    %p164 = scmp.eq.s32.totalorder %s18, 1
    %p165 = por %p163, %p164
    %p166 = scmp.ne.s32.totalorder %s157, %s158
    %p167 = scmp.eq.s32.totalorder %s18, 0
    %p168 = por %p166, %p167
    %p169 = scmp.ne.s32.totalorder %s157, %s158
    %p170 = scmp.eq.s32.totalorder %s19, 1
    %p171 = por %p169, %p170
    %p173 = scmp.ne.s32.totalorder %s158, %s172
    %p174 = scmp.eq.s32.totalorder %s19, 0
    %p175 = por %p173, %p174
    %s177 = sadd.s32 %s176, 1
    %p180 = scmp.eq.s32.totalorder %s13, 1
    %p181 = scmp.ne.s32.totalorder %s176, %s178
    %p182 = scmp.eq.s32.totalorder %s13, 0
    %p183 = por %p181, %p182
    %p184 = scmp.ne.s32.totalorder %s176, %s178
    %p185 = scmp.eq.s32.totalorder %s18, 1
    %p186 = por %p184, %p185
    %p187 = scmp.ne.s32.totalorder %s178, %s179
    %p188 = scmp.eq.s32.totalorder %s18, 0
    %p189 = por %p187, %p188
    %p190 = scmp.ne.s32.totalorder %s178, %s179
    %p191 = scmp.eq.s32.totalorder %s19, 1
    %p192 = por %p190, %p191
    %p194 = scmp.ne.s32.totalorder %s179, %s193
    %p195 = scmp.eq.s32.totalorder %s19, 0
    %p196 = por %p194, %p195
    %s197 = ssub.s32 %s20, %s32
    %s198 = ssub.s32 %s21, %s28
    %s199 = sor.u32 %s197, %s198
    %p200 = scmp.eq.s32.totalorder %s199, 0
    %s202 = sadd.s32 %s201, 1
    %s203 = scalar_select %p200, %s201, %s202
    %p206 = pneg %p200
    %p207 = scmp.eq.s32.totalorder %s13, 1
    %p208 = por %p206, %p207
    %p209 = scmp.ne.s32.totalorder %s201, %s204
    %p210 = scmp.eq.s32.totalorder %s13, 0
    %p211 = por %p209, %p210
    %p212 = scmp.ne.s32.totalorder %s201, %s204
    %p213 = scmp.eq.s32.totalorder %s18, 1
    %p214 = por %p212, %p213
    %p215 = scmp.ne.s32.totalorder %s204, %s205
    %p216 = scmp.eq.s32.totalorder %s18, 0
    %p217 = por %p215, %p216
    %p218 = scmp.ne.s32.totalorder %s204, %s205
    %p219 = scmp.eq.s32.totalorder %s19, 1
    %p220 = por %p218, %p219
    %p222 = scmp.ne.s32.totalorder %s205, %s221
    %p223 = scmp.eq.s32.totalorder %s19, 0
    %p224 = por %p222, %p223
    %p225 = scmp.le.s32.totalorder 1, %s13
    %p226 = scmp.lt.s32.totalorder %s13, 3
    %p227 = pnand %p225, %p226
    %p228 = pneg %p227
    // Predicated region
    $region9: #{_lambda_.8} parent=5 // pred_check
      _
    $region10: #{_lambda_.8} parent=5 // pred_check_branch
      %230 = sbr.rel (%p227) target = $region12
    $region11: #{_lambda_.8} parent=5 // pred_region
      %s231 = ssub.s32 %s13, 1
      // Predicated region
      $region13: #{_lambda_.8} parent=11 // pred_check
        %p232 = pneg %p126
      $region14: #{_lambda_.8} parent=11 // pred_check_branch
        %234 = sbr.rel (%p232) target = $region16
      $region15: #{_lambda_.8} parent=11 // pred_region
        _
      $region16: #{_lambda_.8} parent=11 // pred_fallthru
        _
      // Predicated region
      $region17: #{_lambda_.8} parent=11 // pred_check
        %p235 = pneg %p147
      $region18: #{_lambda_.8} parent=11 // pred_check_branch
        %237 = sbr.rel (%p235) target = $region20
      $region19: #{_lambda_.8} parent=11 // pred_region
        _
      $region20: #{_lambda_.8} parent=11 // pred_fallthru
        _
      // Predicated region
      $region21: #{_lambda_.8} parent=11 // pred_check
        %p238 = pneg %p168
      $region22: #{_lambda_.8} parent=11 // pred_check_branch
        %240 = sbr.rel (%p238) target = $region24
      $region23: #{_lambda_.8} parent=11 // pred_region
        _
      $region24: #{_lambda_.8} parent=11 // pred_fallthru
        _
      // Predicated region
      $region25: #{_lambda_.8} parent=11 // pred_check
        %p241 = pneg %p189
      $region26: #{_lambda_.8} parent=11 // pred_check_branch
        %243 = sbr.rel (%p241) target = $region28
      $region27: #{_lambda_.8} parent=11 // pred_region
        _
      $region28: #{_lambda_.8} parent=11 // pred_fallthru
        _
    $region12: #{_lambda_.8} parent=5 // pred_fallthru
      _
    %p244 = scmp.lt.s32.totalorder %s13, 2
    // Predicated region
    $region29: #{_lambda_.8} parent=5 // pred_check
      %p245 = pneg %p244
    $region30: #{_lambda_.8} parent=5 // pred_check_branch
      %247 = sbr.rel (%p245) target = $region32
    $region31: #{_lambda_.8} parent=5 // pred_region
      // Predicated region
      $region33: #{_lambda_.8} parent=31 // pred_check
        %p248 = pneg %p47
      $region34: #{_lambda_.8} parent=31 // pred_check_branch
        %250 = sbr.rel (%p248) target = $region36
      $region35: #{_lambda_.8} parent=31 // pred_region
        %p251 = scmp.lt.s32.totalorder %s20, 1
        %s252 = scalar_select %p251, %s20, 1
        %p253 = scmp.lt.s32.totalorder %s21, 0
        %s254 = scalar_select %p253, %s21, 0
        %s255 = sadd.s32 %s254, %s252
        %s256 = smul.addr %s255, 4
        %s257 = scalar_lea.vmem %s0, %s256
      $region36: #{_lambda_.8} parent=31 // pred_fallthru
        _
      // Predicated region
      $region37: #{_lambda_.8} parent=31 // pred_check
        %p258 = pneg %p73
      $region38: #{_lambda_.8} parent=31 // pred_check_branch
        %260 = sbr.rel (%p258) target = $region40
      $region39: #{_lambda_.8} parent=31 // pred_region
        %p261 = scmp.lt.s32.totalorder %s20, 1
        %s262 = scalar_select %p261, %s20, 1
        %s263 = smul.addr %s262, 4
        %s264 = scalar_lea.vmem %s1, %s263
      $region40: #{_lambda_.8} parent=31 // pred_fallthru
        _
      // Predicated region
      $region41: #{_lambda_.8} parent=31 // pred_check
        %p265 = pneg %p99
      $region42: #{_lambda_.8} parent=31 // pred_check_branch
        %267 = sbr.rel (%p265) target = $region44
      $region43: #{_lambda_.8} parent=31 // pred_region
        %p268 = scmp.lt.s32.totalorder %s20, 1
        %s269 = scalar_select %p268, %s20, 1
        %s270 = scalar_lea.vmem %s2, %s269
      $region44: #{_lambda_.8} parent=31 // pred_fallthru
        _
    $region32: #{_lambda_.8} parent=5 // pred_fallthru
      _
    %p271 = scmp.le.s32.totalorder 1, %s13
    %p272 = scmp.lt.s32.totalorder %s13, 3
    %p273 = pnand %p271, %p272
    %p274 = pneg %p273
    // Predicated region
    $region45: #{_lambda_.8} parent=5 // pred_check
      _
    $region46: #{_lambda_.8} parent=5 // pred_check_branch
      %276 = sbr.rel (%p273) target = $region48
    $region47: #{_lambda_.8} parent=5 // pred_region
      %s277 = ssub.s32 %s13, 1
      %p278 = scmp.lt.s32.totalorder %s22, 1
      %s279 = scalar_select %p278, %s22, 1
      %p280 = scmp.lt.s32.totalorder %s23, 0
      %s281 = scalar_select %p280, %s23, 0
      %s282 = sadd.s32 %s281, %s279
      %s283 = smul.addr %s282, 4
      %s284 = scalar_lea.vmem %s0, %s283
      %p285 = pneg %p53
      %p286 = pneg %p50
      %p287 = scmp.lt.s32.totalorder %s22, 1
      %s288 = scalar_select %p287, %s22, 1
      %s289 = smul.addr %s288, 4
      %s290 = scalar_lea.vmem %s1, %s289
      %p291 = pneg %p79
      %p292 = pneg %p76
      %p293 = scmp.lt.s32.totalorder %s22, 1
      %s294 = scalar_select %p293, %s22, 1
      %s295 = scalar_lea.vmem %s2, %s294
      %p296 = pneg %p105
      %p297 = pneg %p102
      %p298 = pneg %p126
      %p299 = pneg %p123
      %p300 = pneg %p147
      %p301 = pneg %p144
      %p302 = pneg %p168
      %p303 = pneg %p165
      %p304 = pneg %p189
      %p305 = pneg %p186
      %p306 = pneg %p217
      %p307 = pneg %p214
      %p308 = scmp.lt.s32.totalorder %s22, 1
      %s309 = scalar_select %p308, %s22, 1
      %p310 = scmp.lt.s32.totalorder %s23, 0
      %s311 = scalar_select %p310, %s23, 0
      %s312 = sadd.s32 %s311, %s309
      %s313 = smul.addr %s312, 4
      %s314 = scalar_lea.vmem %s7, %s313
      %p315 = scmp.lt.s32.totalorder %s22, 1
      %s316 = scalar_select %p315, %s22, 1
      %p317 = scmp.lt.s32.totalorder %s23, 0
      %s318 = scalar_select %p317, %s23, 0
      %s319 = sadd.s32 %s318, %s316
      %s320 = smul.addr %s319, 4
      %s321 = scalar_lea.vmem %s0, %s320
      %p322 = scmp.lt.s32.totalorder %s22, 1
      %s323 = scalar_select %p322, %s22, 1
      %s324 = smul.addr %s323, 4
      %s325 = scalar_lea.vmem %s1, %s324
      %p326 = scmp.lt.s32.totalorder %s22, 1
      %s327 = scalar_select %p326, %s22, 1
      %s328 = scalar_lea.vmem %s2, %s327
      %p329 = scmp.lt.s32.totalorder %s22, 1
      %s330 = scalar_select %p329, %s22, 1
      %p331 = scmp.lt.s32.totalorder %s23, 0
      %s332 = scalar_select %p331, %s23, 0
      %s333 = sadd.s32 %s332, %s330
      %s334 = smul.addr %s333, 4
      %s335 = scalar_lea.vmem %s7, %s334
      %v337 = vld [vmem:[%s321] sm:$0xf]
      %v338 = vld [vmem:[%s325] sm:$0xf]
      %v339 = vld [vmem:[%s6] sm:$0x3f]
      %v340 = vld [vmem:[%s328] sm:$0x1]
      %v341 = vunpack.c.l.bf16 %v340
      %v342 = vld [vmem:[%s3] sm:$0xf]
      %v343 = vld [vmem:[%s3 + $0x4] sm:$0xf]
      %v344 = vld [vmem:[%s3 + $0x8] sm:$0xf]
      %v345 = vld [vmem:[%s3 + $0xc] sm:$0xf]
      %v346 = vlaneseq
      %v347 = vshrl.u32 %v346, 7
      %v348 = vsub.s32 0, %v347
      %v349 = vrot.slane %v339, %v348
      %v354 = vunpack.c.l.b16 %v342
      %v355 = vunpack.c.l.b16 %v343
      %v356 = vunpack.c.l.b16 %v344
      %v357 = vunpack.c.l.b16 %v345
      %v358 = vpack.c.b16 %v355, %v354
      %v359 = vpack.c.b16 %v357, %v356
      %vm362 = vcmask 261120
      %v364 = vsel %vm362, %v337, 0
      %366 = vmatprep.subr.bf16.mxu0 0
      %367 = vmatpush1.bf16.msra.mxu0 %v358
      %368 = vmatprep.subr.bf16.mxu0 0
      %369 = vmatpush1.bf16.msra.mxu0 %v359
      %370 = vmatprep.subr.bf16.mxu0 0
      %371 = vmatpush1.bf16.msra.mxu0 0
      %372 = vmatprep.subr.bf16.mxu0 0
      %373 = vmatpush1.bf16.msra.mxu0 0
      %374 = vmatprep.subr.bf16.mxu0 0
      %375 = vmatpush1.bf16.msra.mxu0 0
      %376 = vmatprep.subr.bf16.mxu0 0
      %377 = vmatpush1.bf16.msra.mxu0 0
      %378 = vmatprep.subr.bf16.mxu0 0
      %379 = vmatpush1.bf16.msra.mxu0 0
      %380 = vmatprep.subr.bf16.mxu0 0
      %381 = vmatpush1.bf16.msra.mxu0 0
      %382 = vmatprep.subr.bf16.mxu0 0
      %383 = vmatpush1.bf16.msra.mxu0 0
      %384 = vmatprep.subr.bf16.mxu0 0
      %385 = vmatpush1.bf16.msra.mxu0 0
      %386 = vmatprep.subr.bf16.mxu0 0
      %387 = vmatpush1.bf16.msra.mxu0 0
      %388 = vmatprep.subr.bf16.mxu0 0
      %389 = vmatpush1.bf16.msra.mxu0 0
      %390 = vmatprep.subr.bf16.mxu0 0
      %391 = vmatpush1.bf16.msra.mxu0 0
      %392 = vmatprep.subr.bf16.mxu0 0
      %393 = vmatpush1.bf16.msra.mxu0 0
      %394 = vmatprep.subr.bf16.mxu0 0
      %395 = vmatpush1.bf16.msra.mxu0 0
      %396 = vmatprep.subr.bf16.mxu0 0
      %397 = vmatpush1.bf16.msra.mxu0 0
      %398 = vmatprep.mubr.bf16.mxu0 0
      %399 = vmatmul.mubr.bf16.gmra.mrb[0].mxu0 %v364
      %v400 = vpop.f32.mrb[0].mxu0
      %v401 = vadd.f32 %v349, %v400
      %v402 = vpop.f32.mrb[0].mxu0
      %v403 = vpop.f32.mrb[0].mxu0
      %v404 = vpop.f32.mrb[0].mxu0
      %405 = vdwg.mxu0
      %v406 = vmul.f32 %v401, 0.35355338
      %v407 = vld [vmem:[%s4] sm:$0xf]
      %v408 = vld [vmem:[%s4 + $0x4] sm:$0xf]
      %v409 = vld [vmem:[%s4 + $0x8] sm:$0xf]
      %v410 = vld [vmem:[%s4 + $0xc] sm:$0xf]
      %v415 = vunpack.c.l.b16 %v407
      %v416 = vunpack.c.l.b16 %v408
      %v417 = vunpack.c.l.b16 %v409
      %v418 = vunpack.c.l.b16 %v410
      %v419 = vpack.c.b16 %v416, %v415
      %v420 = vpack.c.b16 %v418, %v417
      %v424 = vsel %vm362, %v338, 0
      %426 = vmatprep.subr.bf16.mxu0 0
      %427 = vmatpush1.bf16.msra.mxu0 %v419
      %428 = vmatprep.subr.bf16.mxu0 0
      %429 = vmatpush1.bf16.msra.mxu0 %v420
      %430 = vmatprep.subr.bf16.mxu0 0
      %431 = vmatpush1.bf16.msra.mxu0 0
      %432 = vmatprep.subr.bf16.mxu0 0
      %433 = vmatpush1.bf16.msra.mxu0 0
      %434 = vmatprep.subr.bf16.mxu0 0
      %435 = vmatpush1.bf16.msra.mxu0 0
      %436 = vmatprep.subr.bf16.mxu0 0
      %437 = vmatpush1.bf16.msra.mxu0 0
      %438 = vmatprep.subr.bf16.mxu0 0
      %439 = vmatpush1.bf16.msra.mxu0 0
      %440 = vmatprep.subr.bf16.mxu0 0
      %441 = vmatpush1.bf16.msra.mxu0 0
      %442 = vmatprep.subr.bf16.mxu0 0
      %443 = vmatpush1.bf16.msra.mxu0 0
      %444 = vmatprep.subr.bf16.mxu0 0
      %445 = vmatpush1.bf16.msra.mxu0 0
      %446 = vmatprep.subr.bf16.mxu0 0
      %447 = vmatpush1.bf16.msra.mxu0 0
      %448 = vmatprep.subr.bf16.mxu0 0
      %449 = vmatpush1.bf16.msra.mxu0 0
      %450 = vmatprep.subr.bf16.mxu0 0
      %451 = vmatpush1.bf16.msra.mxu0 0
      %452 = vmatprep.subr.bf16.mxu0 0
      %453 = vmatpush1.bf16.msra.mxu0 0
      %454 = vmatprep.subr.bf16.mxu0 0
      %455 = vmatpush1.bf16.msra.mxu0 0
      %456 = vmatprep.subr.bf16.mxu0 0
      %457 = vmatpush1.bf16.msra.mxu0 0
      %458 = vmatprep.mubr.bf16.mxu0 0
      %459 = vmatmul.mubr.bf16.gmra.mrb[0].mxu0 %v424
      %v460 = vpop.f32.mrb[0].mxu0
      %v461 = vadd.f32 0.0, %v460
      %v462 = vpop.f32.mrb[0].mxu0
      %v463 = vpop.f32.mrb[0].mxu0
      %v464 = vpop.f32.mrb[0].mxu0
      %465 = vdwg.mxu0
      %v466 = vlaneseq
      %v467 = vshrl.u32 %v466, 7
      %v468 = vsub.s32 1, %v467
      %v469 = vrot.slane %v339, %v468
      %v470 = vadd.f32 %v461, %v469
      %v471 = vlaneseq
      %v472 = vshrl.u32 %v471, 7
      %v473 = vsub.s32 2, %v472
      %v474 = vrot.slane %v339, %v473
      %476 = vrot.lane.b32.xlu0 %v474, 32
      %v477 = vpop.permute.xlu0 %476
      %v479 = vadd.f32 %v461, %v477
      %v480 = vpack.c.bf16 %v406, %v406
      %v481 = vpack.c.bf16 %v470, %v470
      %v482 = vpack.c.bf16 %v479, %v479
      %v483 = vlaneseq
      %v484 = vshrl.u32 %v483, 7
      %v485 = vsub.s32 0, %v484
      %v486 = vrot.slane %v341, %v485
      %vm487 = vcmask 64512
      %v489 = vsel %vm487, %v480, 0
      %v492 = vsel %vm487, %v481, 0
      %494 = vmatprep.subr.bf16.mxu0 0
      %495 = vmatpush1.bf16.xpose.msra.mxu0 %v492
      %496 = vmatprep.subr.bf16.mxu0 0
      %497 = vmatpush1.bf16.xpose.msra.mxu0 0
      %498 = vmatprep.subr.bf16.mxu0 0
      %499 = vmatpush1.bf16.xpose.msra.mxu0 0
      %500 = vmatprep.subr.bf16.mxu0 0
      %501 = vmatpush1.bf16.xpose.msra.mxu0 0
      %502 = vmatprep.subr.bf16.mxu0 0
      %503 = vmatpush1.bf16.xpose.msra.mxu0 0
      %504 = vmatprep.subr.bf16.mxu0 0
      %505 = vmatpush1.bf16.xpose.msra.mxu0 0
      %506 = vmatprep.subr.bf16.mxu0 0
      %507 = vmatpush1.bf16.xpose.msra.mxu0 0
      %508 = vmatprep.subr.bf16.mxu0 0
      %509 = vmatpush1.bf16.xpose.msra.mxu0 0
      %510 = vmatprep.subr.bf16.mxu0 0
      %511 = vmatpush1.bf16.xpose.msra.mxu0 0
      %512 = vmatprep.subr.bf16.mxu0 0
      %513 = vmatpush1.bf16.xpose.msra.mxu0 0
      %514 = vmatprep.subr.bf16.mxu0 0
      %515 = vmatpush1.bf16.xpose.msra.mxu0 0
      %516 = vmatprep.subr.bf16.mxu0 0
      %517 = vmatpush1.bf16.xpose.msra.mxu0 0
      %518 = vmatprep.subr.bf16.mxu0 0
      %519 = vmatpush1.bf16.xpose.msra.mxu0 0
      %520 = vmatprep.subr.bf16.mxu0 0
      %521 = vmatpush1.bf16.xpose.msra.mxu0 0
      %522 = vmatprep.subr.bf16.mxu0 0
      %523 = vmatpush1.bf16.xpose.msra.mxu0 0
      %524 = vmatprep.subr.bf16.mxu0 0
      %525 = vmatpush1.bf16.xpose.msra.mxu0 0
      %526 = vmatprep.mubr.bf16.mxu0 0
      %527 = vmatmul.mubr.bf16.gmra.mrb[0].mxu0 %v489
      %v528 = vpop.f32.mrb[0].mxu0
      %v529 = vadd.f32 %v486, %v528
      %v530 = vpop.f32.mrb[0].mxu0
      %v531 = vpop.f32.mrb[0].mxu0
      %v532 = vpop.f32.mrb[0].mxu0
      %533 = vdwg.mxu0
      %v534 = vsel %vm487, %v529, -inf
      %535 = vmax.xlane.f32.xlu0 %v534
      %v536 = vpop.xlane.xlu0 %535
      %v537 = vsub.f32 %v529, %v536
      %v538 = vmul.f32 %v537, 1.442695
      %v539 = vpow.pop %v538
      %v540 = vsel %vm487, %v539, 0.0
      %541 = vadd.xlane.f32.xlu0 %v540
      %v542 = vpop.xlane.xlu0 %541
      %v543 = vrcp.pop %v542
      %v544 = vmul.f32 %v539, %v543
      %v545 = vpack.c.bf16 %v544, %v544
      %547 = vrot.lane.b32.xlu0 %v482, 96
      %v548 = vpop.permute.xlu0 %547
      %v550 = vsel %vm487, %v545, 0
      %vm552 = vcmask 1043456
      %v554 = vsel %vm552, %v548, 0
      %556 = vmatprep.subr.bf16.mxu0 0
      %557 = vmatpush1.bf16.msra.mxu0 %v554
      %558 = vmatprep.subr.bf16.mxu0 0
      %559 = vmatpush1.bf16.msra.mxu0 0
      %560 = vmatprep.subr.bf16.mxu0 0
      %561 = vmatpush1.bf16.msra.mxu0 0
      %562 = vmatprep.subr.bf16.mxu0 0
      %563 = vmatpush1.bf16.msra.mxu0 0
      %564 = vmatprep.subr.bf16.mxu0 0
      %565 = vmatpush1.bf16.msra.mxu0 0
      %566 = vmatprep.subr.bf16.mxu0 0
      %567 = vmatpush1.bf16.msra.mxu0 0
      %568 = vmatprep.subr.bf16.mxu0 0
      %569 = vmatpush1.bf16.msra.mxu0 0
      %570 = vmatprep.subr.bf16.mxu0 0
      %571 = vmatpush1.bf16.msra.mxu0 0
      %572 = vmatprep.subr.bf16.mxu0 0
      %573 = vmatpush1.bf16.msra.mxu0 0
      %574 = vmatprep.subr.bf16.mxu0 0
      %575 = vmatpush1.bf16.msra.mxu0 0
      %576 = vmatprep.subr.bf16.mxu0 0
      %577 = vmatpush1.bf16.msra.mxu0 0
      %578 = vmatprep.subr.bf16.mxu0 0
      %579 = vmatpush1.bf16.msra.mxu0 0
      %580 = vmatprep.subr.bf16.mxu0 0
      %581 = vmatpush1.bf16.msra.mxu0 0
      %582 = vmatprep.subr.bf16.mxu0 0
      %583 = vmatpush1.bf16.msra.mxu0 0
      %584 = vmatprep.subr.bf16.mxu0 0
      %585 = vmatpush1.bf16.msra.mxu0 0
      %586 = vmatprep.subr.bf16.mxu0 0
      %587 = vmatpush1.bf16.msra.mxu0 0
      %588 = vmatprep.mubr.bf16.mxu0 0
      %589 = vmatmul.mubr.bf16.gmra.mrb[0].mxu0 %v550
      %v590 = vpop.f32.mrb[0].mxu0
      %v591 = vadd.f32 0.0, %v590
      %v592 = vpop.f32.mrb[0].mxu0
      %v593 = vpop.f32.mrb[0].mxu0
      %v594 = vpop.f32.mrb[0].mxu0
      %595 = vdwg.mxu0
      %596 = vst.msk [vmem:[#allocation2] sm:$0xff] %vm487, %v591
      %598 = vrot.lane.b32.xlu0 %v480, 120
      %v599 = vpop.permute.xlu0 %598
      %601 = vrot.lane.b32.xlu0 %v481, 120
      %v602 = vpop.permute.xlu0 %601
      %v604 = vsel %vm487, %v599, 0
      %v607 = vsel %vm487, %v602, 0
      %609 = vmatprep.subr.bf16.mxu0 0
      %610 = vmatpush1.bf16.xpose.msra.mxu0 %v607
      %611 = vmatprep.subr.bf16.mxu0 0
      %612 = vmatpush1.bf16.xpose.msra.mxu0 0
      %613 = vmatprep.subr.bf16.mxu0 0
      %614 = vmatpush1.bf16.xpose.msra.mxu0 0
      %615 = vmatprep.subr.bf16.mxu0 0
      %616 = vmatpush1.bf16.xpose.msra.mxu0 0
      %617 = vmatprep.subr.bf16.mxu0 0
      %618 = vmatpush1.bf16.xpose.msra.mxu0 0
      %619 = vmatprep.subr.bf16.mxu0 0
      %620 = vmatpush1.bf16.xpose.msra.mxu0 0
      %621 = vmatprep.subr.bf16.mxu0 0
      %622 = vmatpush1.bf16.xpose.msra.mxu0 0
      %623 = vmatprep.subr.bf16.mxu0 0
      %624 = vmatpush1.bf16.xpose.msra.mxu0 0
      %625 = vmatprep.subr.bf16.mxu0 0
      %626 = vmatpush1.bf16.xpose.msra.mxu0 0
      %627 = vmatprep.subr.bf16.mxu0 0
      %628 = vmatpush1.bf16.xpose.msra.mxu0 0
      %629 = vmatprep.subr.bf16.mxu0 0
      %630 = vmatpush1.bf16.xpose.msra.mxu0 0
      %631 = vmatprep.subr.bf16.mxu0 0
      %632 = vmatpush1.bf16.xpose.msra.mxu0 0
      %633 = vmatprep.subr.bf16.mxu0 0
      %634 = vmatpush1.bf16.xpose.msra.mxu0 0
      %635 = vmatprep.subr.bf16.mxu0 0
      %636 = vmatpush1.bf16.xpose.msra.mxu0 0
      %637 = vmatprep.subr.bf16.mxu0 0
      %638 = vmatpush1.bf16.xpose.msra.mxu0 0
      %639 = vmatprep.subr.bf16.mxu0 0
      %640 = vmatpush1.bf16.xpose.msra.mxu0 0
      %641 = vmatprep.mubr.bf16.mxu0 0
      %642 = vmatmul.mubr.bf16.gmra.mrb[0].mxu0 %v604
      %v643 = vpop.f32.mrb[0].mxu0
      %v644 = vadd.f32 %v486, %v643
      %v645 = vpop.f32.mrb[0].mxu0
      %v646 = vpop.f32.mrb[0].mxu0
      %v647 = vpop.f32.mrb[0].mxu0
      %648 = vdwg.mxu0
      %v649 = vsel %vm487, %v644, -inf
      %650 = vmax.xlane.f32.xlu0 %v649
      %v651 = vpop.xlane.xlu0 %650
      %v652 = vsub.f32 %v644, %v651
      %v653 = vmul.f32 %v652, 1.442695
      %v654 = vpow.pop %v653
      %v655 = vsel %vm487, %v654, 0.0
      %656 = vadd.xlane.f32.xlu0 %v655
      %v657 = vpop.xlane.xlu0 %656
      %v658 = vrcp.pop %v657
      %v659 = vmul.f32 %v654, %v658
      %v660 = vpack.c.bf16 %v659, %v659
      %661 = vrot.lane.b32.xlu0 %v482, 88
      %v662 = vpop.permute.xlu0 %661
      %v664 = vsel %vm487, %v660, 0
      %v667 = vsel %vm552, %v662, 0
      %669 = vmatprep.subr.bf16.mxu0 0
      %670 = vmatpush1.bf16.msra.mxu0 %v667
      %671 = vmatprep.subr.bf16.mxu0 0
      %672 = vmatpush1.bf16.msra.mxu0 0
      %673 = vmatprep.subr.bf16.mxu0 0
      %674 = vmatpush1.bf16.msra.mxu0 0
      %675 = vmatprep.subr.bf16.mxu0 0
      %676 = vmatpush1.bf16.msra.mxu0 0
      %677 = vmatprep.subr.bf16.mxu0 0
      %678 = vmatpush1.bf16.msra.mxu0 0
      %679 = vmatprep.subr.bf16.mxu0 0
      %680 = vmatpush1.bf16.msra.mxu0 0
      %681 = vmatprep.subr.bf16.mxu0 0
      %682 = vmatpush1.bf16.msra.mxu0 0
      %683 = vmatprep.subr.bf16.mxu0 0
      %684 = vmatpush1.bf16.msra.mxu0 0
      %685 = vmatprep.subr.bf16.mxu0 0
      %686 = vmatpush1.bf16.msra.mxu0 0
      %687 = vmatprep.subr.bf16.mxu0 0
      %688 = vmatpush1.bf16.msra.mxu0 0
      %689 = vmatprep.subr.bf16.mxu0 0
      %690 = vmatpush1.bf16.msra.mxu0 0
      %691 = vmatprep.subr.bf16.mxu0 0
      %692 = vmatpush1.bf16.msra.mxu0 0
      %693 = vmatprep.subr.bf16.mxu0 0
      %694 = vmatpush1.bf16.msra.mxu0 0
      %695 = vmatprep.subr.bf16.mxu0 0
      %696 = vmatpush1.bf16.msra.mxu0 0
      %697 = vmatprep.subr.bf16.mxu0 0
      %698 = vmatpush1.bf16.msra.mxu0 0
      %699 = vmatprep.subr.bf16.mxu0 0
      %700 = vmatpush1.bf16.msra.mxu0 0
      %701 = vmatprep.mubr.bf16.mxu0 0
      %702 = vmatmul.mubr.bf16.gmra.mrb[0].mxu0 %v664
      %v703 = vpop.f32.mrb[0].mxu0
      %v704 = vadd.f32 0.0, %v703
      %v705 = vpop.f32.mrb[0].mxu0
      %v706 = vpop.f32.mrb[0].mxu0
      %v707 = vpop.f32.mrb[0].mxu0
      %708 = vdwg.mxu0
      %710 = vrot.lane.b32.xlu0 %v704, 8
      %v711 = vpop.permute.xlu0 %710
      %vm713 = vcmask 130112
      %714 = vst.msk [vmem:[#allocation2] sm:$0xff] %vm713, %v711
      %715 = vrot.lane.b32.xlu0 %v480, 112
      %v716 = vpop.permute.xlu0 %715
      %717 = vrot.lane.b32.xlu0 %v481, 112
      %v718 = vpop.permute.xlu0 %717
      %v720 = vsel %vm487, %v716, 0
      %v723 = vsel %vm487, %v718, 0
      %725 = vmatprep.subr.bf16.mxu0 0
      %726 = vmatpush1.bf16.xpose.msra.mxu0 %v723
      %727 = vmatprep.subr.bf16.mxu0 0
      %728 = vmatpush1.bf16.xpose.msra.mxu0 0
      %729 = vmatprep.subr.bf16.mxu0 0
      %730 = vmatpush1.bf16.xpose.msra.mxu0 0
      %731 = vmatprep.subr.bf16.mxu0 0
      %732 = vmatpush1.bf16.xpose.msra.mxu0 0
      %733 = vmatprep.subr.bf16.mxu0 0
      %734 = vmatpush1.bf16.xpose.msra.mxu0 0
      %735 = vmatprep.subr.bf16.mxu0 0
      %736 = vmatpush1.bf16.xpose.msra.mxu0 0
      %737 = vmatprep.subr.bf16.mxu0 0
      %738 = vmatpush1.bf16.xpose.msra.mxu0 0
      %739 = vmatprep.subr.bf16.mxu0 0
      %740 = vmatpush1.bf16.xpose.msra.mxu0 0
      %741 = vmatprep.subr.bf16.mxu0 0
      %742 = vmatpush1.bf16.xpose.msra.mxu0 0
      %743 = vmatprep.subr.bf16.mxu0 0
      %744 = vmatpush1.bf16.xpose.msra.mxu0 0
      %745 = vmatprep.subr.bf16.mxu0 0
      %746 = vmatpush1.bf16.xpose.msra.mxu0 0
      %747 = vmatprep.subr.bf16.mxu0 0
      %748 = vmatpush1.bf16.xpose.msra.mxu0 0
      %749 = vmatprep.subr.bf16.mxu0 0
      %750 = vmatpush1.bf16.xpose.msra.mxu0 0
      %751 = vmatprep.subr.bf16.mxu0 0
      %752 = vmatpush1.bf16.xpose.msra.mxu0 0
      %753 = vmatprep.subr.bf16.mxu0 0
      %754 = vmatpush1.bf16.xpose.msra.mxu0 0
      %755 = vmatprep.subr.bf16.mxu0 0
      %756 = vmatpush1.bf16.xpose.msra.mxu0 0
      %757 = vmatprep.mubr.bf16.mxu0 0
      %758 = vmatmul.mubr.bf16.gmra.mrb[0].mxu0 %v720
      %v759 = vpop.f32.mrb[0].mxu0
      %v760 = vadd.f32 %v486, %v759
      %v761 = vpop.f32.mrb[0].mxu0
      %v762 = vpop.f32.mrb[0].mxu0
      %v763 = vpop.f32.mrb[0].mxu0
      %764 = vdwg.mxu0
      %v765 = vsel %vm487, %v760, -inf
      %766 = vmax.xlane.f32.xlu0 %v765
      %v767 = vpop.xlane.xlu0 %766
      %v768 = vsub.f32 %v760, %v767
      %v769 = vmul.f32 %v768, 1.442695
      %v770 = vpow.pop %v769
      %v771 = vsel %vm487, %v770, 0.0
      %772 = vadd.xlane.f32.xlu0 %v771
      %v773 = vpop.xlane.xlu0 %772
      %v774 = vrcp.pop %v773
      %v775 = vmul.f32 %v770, %v774
      %v776 = vpack.c.bf16 %v775, %v775
      %777 = vrot.lane.b32.xlu0 %v482, 80
      %v778 = vpop.permute.xlu0 %777
      %v780 = vsel %vm487, %v776, 0
      %v783 = vsel %vm552, %v778, 0
      %785 = vmatprep.subr.bf16.mxu0 0
      %786 = vmatpush1.bf16.msra.mxu0 %v783
      %787 = vmatprep.subr.bf16.mxu0 0
      %788 = vmatpush1.bf16.msra.mxu0 0
      %789 = vmatprep.subr.bf16.mxu0 0
      %790 = vmatpush1.bf16.msra.mxu0 0
      %791 = vmatprep.subr.bf16.mxu0 0
      %792 = vmatpush1.bf16.msra.mxu0 0
      %793 = vmatprep.subr.bf16.mxu0 0
      %794 = vmatpush1.bf16.msra.mxu0 0
      %795 = vmatprep.subr.bf16.mxu0 0
      %796 = vmatpush1.bf16.msra.mxu0 0
      %797 = vmatprep.subr.bf16.mxu0 0
      %798 = vmatpush1.bf16.msra.mxu0 0
      %799 = vmatprep.subr.bf16.mxu0 0
      %800 = vmatpush1.bf16.msra.mxu0 0
      %801 = vmatprep.subr.bf16.mxu0 0
      %802 = vmatpush1.bf16.msra.mxu0 0
      %803 = vmatprep.subr.bf16.mxu0 0
      %804 = vmatpush1.bf16.msra.mxu0 0
      %805 = vmatprep.subr.bf16.mxu0 0
      %806 = vmatpush1.bf16.msra.mxu0 0
      %807 = vmatprep.subr.bf16.mxu0 0
      %808 = vmatpush1.bf16.msra.mxu0 0
      %809 = vmatprep.subr.bf16.mxu0 0
      %810 = vmatpush1.bf16.msra.mxu0 0
      %811 = vmatprep.subr.bf16.mxu0 0
      %812 = vmatpush1.bf16.msra.mxu0 0
      %813 = vmatprep.subr.bf16.mxu0 0
      %814 = vmatpush1.bf16.msra.mxu0 0
      %815 = vmatprep.subr.bf16.mxu0 0
      %816 = vmatpush1.bf16.msra.mxu0 0
      %817 = vmatprep.mubr.bf16.mxu0 0
      %818 = vmatmul.mubr.bf16.gmra.mrb[0].mxu0 %v780
      %v819 = vpop.f32.mrb[0].mxu0
      %v820 = vadd.f32 0.0, %v819
      %v821 = vpop.f32.mrb[0].mxu0
      %v822 = vpop.f32.mrb[0].mxu0
      %v823 = vpop.f32.mrb[0].mxu0
      %824 = vdwg.mxu0
      %826 = vrot.lane.b32.xlu0 %v820, 16
      %v827 = vpop.permute.xlu0 %826
      %vm829 = vcmask 195712
      %830 = vst.msk [vmem:[#allocation2] sm:$0xff] %vm829, %v827
      %831 = vrot.lane.b32.xlu0 %v480, 104
      %v832 = vpop.permute.xlu0 %831
      %833 = vrot.lane.b32.xlu0 %v481, 104
      %v834 = vpop.permute.xlu0 %833
      %v836 = vsel %vm487, %v832, 0
      %v839 = vsel %vm487, %v834, 0
      %841 = vmatprep.subr.bf16.mxu0 0
      %842 = vmatpush1.bf16.xpose.msra.mxu0 %v839
      %843 = vmatprep.subr.bf16.mxu0 0
      %844 = vmatpush1.bf16.xpose.msra.mxu0 0
      %845 = vmatprep.subr.bf16.mxu0 0
      %846 = vmatpush1.bf16.xpose.msra.mxu0 0
      %847 = vmatprep.subr.bf16.mxu0 0
      %848 = vmatpush1.bf16.xpose.msra.mxu0 0
      %849 = vmatprep.subr.bf16.mxu0 0
      %850 = vmatpush1.bf16.xpose.msra.mxu0 0
      %851 = vmatprep.subr.bf16.mxu0 0
      %852 = vmatpush1.bf16.xpose.msra.mxu0 0
      %853 = vmatprep.subr.bf16.mxu0 0
      %854 = vmatpush1.bf16.xpose.msra.mxu0 0
      %855 = vmatprep.subr.bf16.mxu0 0
      %856 = vmatpush1.bf16.xpose.msra.mxu0 0
      %857 = vmatprep.subr.bf16.mxu0 0
      %858 = vmatpush1.bf16.xpose.msra.mxu0 0
      %859 = vmatprep.subr.bf16.mxu0 0
      %860 = vmatpush1.bf16.xpose.msra.mxu0 0
      %861 = vmatprep.subr.bf16.mxu0 0
      %862 = vmatpush1.bf16.xpose.msra.mxu0 0
      %863 = vmatprep.subr.bf16.mxu0 0
      %864 = vmatpush1.bf16.xpose.msra.mxu0 0
      %865 = vmatprep.subr.bf16.mxu0 0
      %866 = vmatpush1.bf16.xpose.msra.mxu0 0
      %867 = vmatprep.subr.bf16.mxu0 0
      %868 = vmatpush1.bf16.xpose.msra.mxu0 0
      %869 = vmatprep.subr.bf16.mxu0 0
      %870 = vmatpush1.bf16.xpose.msra.mxu0 0
      %871 = vmatprep.subr.bf16.mxu0 0
      %872 = vmatpush1.bf16.xpose.msra.mxu0 0
      %873 = vmatprep.mubr.bf16.mxu0 0
      %874 = vmatmul.mubr.bf16.gmra.mrb[0].mxu0 %v836
      %v875 = vpop.f32.mrb[0].mxu0
      %v876 = vadd.f32 %v486, %v875
      %v877 = vpop.f32.mrb[0].mxu0
      %v878 = vpop.f32.mrb[0].mxu0
      %v879 = vpop.f32.mrb[0].mxu0
      %880 = vdwg.mxu0
      %v881 = vsel %vm487, %v876, -inf
      %882 = vmax.xlane.f32.xlu0 %v881
      %v883 = vpop.xlane.xlu0 %882
      %v884 = vsub.f32 %v876, %v883
      %v885 = vmul.f32 %v884, 1.442695
      %v886 = vpow.pop %v885
      %v887 = vsel %vm487, %v886, 0.0
      %888 = vadd.xlane.f32.xlu0 %v887
      %v889 = vpop.xlane.xlu0 %888
      %v890 = vrcp.pop %v889
      %v891 = vmul.f32 %v886, %v890
      %v892 = vpack.c.bf16 %v891, %v891
      %893 = vrot.lane.b32.xlu0 %v482, 72
      %v894 = vpop.permute.xlu0 %893
      %v896 = vsel %vm487, %v892, 0
      %v899 = vsel %vm552, %v894, 0
      %901 = vmatprep.subr.bf16.mxu0 0
      %902 = vmatpush1.bf16.msra.mxu0 %v899
      %903 = vmatprep.subr.bf16.mxu0 0
      %904 = vmatpush1.bf16.msra.mxu0 0
      %905 = vmatprep.subr.bf16.mxu0 0
      %906 = vmatpush1.bf16.msra.mxu0 0
      %907 = vmatprep.subr.bf16.mxu0 0
      %908 = vmatpush1.bf16.msra.mxu0 0
      %909 = vmatprep.subr.bf16.mxu0 0
      %910 = vmatpush1.bf16.msra.mxu0 0
      %911 = vmatprep.subr.bf16.mxu0 0
      %912 = vmatpush1.bf16.msra.mxu0 0
      %913 = vmatprep.subr.bf16.mxu0 0
      %914 = vmatpush1.bf16.msra.mxu0 0
      %915 = vmatprep.subr.bf16.mxu0 0
      %916 = vmatpush1.bf16.msra.mxu0 0
      %917 = vmatprep.subr.bf16.mxu0 0
      %918 = vmatpush1.bf16.msra.mxu0 0
      %919 = vmatprep.subr.bf16.mxu0 0
      %920 = vmatpush1.bf16.msra.mxu0 0
      %921 = vmatprep.subr.bf16.mxu0 0
      %922 = vmatpush1.bf16.msra.mxu0 0
      %923 = vmatprep.subr.bf16.mxu0 0
      %924 = vmatpush1.bf16.msra.mxu0 0
      %925 = vmatprep.subr.bf16.mxu0 0
      %926 = vmatpush1.bf16.msra.mxu0 0
      %927 = vmatprep.subr.bf16.mxu0 0
      %928 = vmatpush1.bf16.msra.mxu0 0
      %929 = vmatprep.subr.bf16.mxu0 0
      %930 = vmatpush1.bf16.msra.mxu0 0
      %931 = vmatprep.subr.bf16.mxu0 0
      %932 = vmatpush1.bf16.msra.mxu0 0
      %933 = vmatprep.mubr.bf16.mxu0 0
      %934 = vmatmul.mubr.bf16.gmra.mrb[0].mxu0 %v896
      %v935 = vpop.f32.mrb[0].mxu0
      %v936 = vadd.f32 0.0, %v935
      %v937 = vpop.f32.mrb[0].mxu0
      %v938 = vpop.f32.mrb[0].mxu0
      %v939 = vpop.f32.mrb[0].mxu0
      %940 = vdwg.mxu0
      %942 = vrot.lane.b32.xlu0 %v936, 24
      %v943 = vpop.permute.xlu0 %942
      %vm945 = vcmask 261312
      %946 = vst.msk [vmem:[#allocation2] sm:$0xff] %vm945, %v943
      %v947 = vld [vmem:[#allocation2] sm:$0xff]
      %v948 = vpack.c.bf16 %v947, %v947
      %v949 = vld [vmem:[%s5] sm:$0xf]
      %v950 = vld [vmem:[%s5 + $0x4] sm:$0xf]
      %v951 = vld [vmem:[%s5 + $0x8] sm:$0xf]
      %v952 = vld [vmem:[%s5 + $0xc] sm:$0xf]
      %v953 = vlaneseq
      %v954 = vshrl.u32 %v953, 7
      %v955 = vsub.s32 3, %v954
      %v956 = vrot.slane %v339, %v955
      %v961 = vunpack.c.l.b16 %v949
      %v962 = vunpack.c.l.b16 %v950
      %v963 = vunpack.c.l.b16 %v951
      %v964 = vunpack.c.l.b16 %v952
      %v965 = vpack.c.b16 %v962, %v961
      %v966 = vpack.c.b16 %v964, %v963
      %v970 = vsel %vm362, %v948, 0
      %972 = vmatprep.subr.bf16.mxu0 0
      %973 = vmatpush1.bf16.msra.mxu0 %v965
      %974 = vmatprep.subr.bf16.mxu0 0
      %975 = vmatpush1.bf16.msra.mxu0 %v966
      %976 = vmatprep.subr.bf16.mxu0 0
      %977 = vmatpush1.bf16.msra.mxu0 0
      %978 = vmatprep.subr.bf16.mxu0 0
      %979 = vmatpush1.bf16.msra.mxu0 0
      %980 = vmatprep.subr.bf16.mxu0 0
      %981 = vmatpush1.bf16.msra.mxu0 0
      %982 = vmatprep.subr.bf16.mxu0 0
      %983 = vmatpush1.bf16.msra.mxu0 0
      %984 = vmatprep.subr.bf16.mxu0 0
      %985 = vmatpush1.bf16.msra.mxu0 0
      %986 = vmatprep.subr.bf16.mxu0 0
      %987 = vmatpush1.bf16.msra.mxu0 0
      %988 = vmatprep.subr.bf16.mxu0 0
      %989 = vmatpush1.bf16.msra.mxu0 0
      %990 = vmatprep.subr.bf16.mxu0 0
      %991 = vmatpush1.bf16.msra.mxu0 0
      %992 = vmatprep.subr.bf16.mxu0 0
      %993 = vmatpush1.bf16.msra.mxu0 0
      %994 = vmatprep.subr.bf16.mxu0 0
      %995 = vmatpush1.bf16.msra.mxu0 0
      %996 = vmatprep.subr.bf16.mxu0 0
      %997 = vmatpush1.bf16.msra.mxu0 0
      %998 = vmatprep.subr.bf16.mxu0 0
      %999 = vmatpush1.bf16.msra.mxu0 0
      %1000 = vmatprep.subr.bf16.mxu0 0
      %1001 = vmatpush1.bf16.msra.mxu0 0
      %1002 = vmatprep.subr.bf16.mxu0 0
      %1003 = vmatpush1.bf16.msra.mxu0 0
      %1004 = vmatprep.mubr.bf16.mxu0 0
      %1005 = vmatmul.mubr.bf16.gmra.mrb[0].mxu0 %v970
      %v1006 = vpop.f32.mrb[0].mxu0
      %v1007 = vadd.f32 %v956, %v1006
      %v1008 = vpop.f32.mrb[0].mxu0
      %v1009 = vpop.f32.mrb[0].mxu0
      %v1010 = vpop.f32.mrb[0].mxu0
      %1011 = vdwg.mxu0
      %v1012 = vunpack.c.l.bf16 %v337
      %v1013 = vadd.f32 %v1007, %v1012
      %v1014 = vsel %vm362, %v1013, 0.0
      %1015 = vadd.xlane.f32.xlu0 %v1014
      %v1016 = vpop.xlane.xlu0 %1015
      %v1017 = vrcp.pop 32.0
      %v1018 = vmul.f32 %v1016, %v1017
      %v1019 = vsub.f32 %v1013, %v1018
      %v1020 = vmul.f32 %v1019, %v1019
      %v1021 = vsel %vm362, %v1020, 0.0
      %1022 = vadd.xlane.f32.xlu0 %v1021
      %v1023 = vpop.xlane.xlu0 %1022
      %v1024 = vmul.f32 %v1023, %v1017
      %v1025 = vadd.f32 %v1024, 1e-12
      %v1026 = vrsqrt.pop %v1025
      %v1027 = vmul.f32 %v1019, %v1026
      %v1028 = vlaneseq
      %v1029 = vshrl.u32 %v1028, 7
      %v1030 = vsub.s32 4, %v1029
      %v1031 = vrot.slane %v339, %v1030
      %v1032 = vmul.f32 %v1027, %v1031
      %v1033 = vlaneseq
      %v1034 = vshrl.u32 %v1033, 7
      %v1035 = vsub.s32 5, %v1034
      %v1036 = vrot.slane %v339, %v1035
      %v1037 = vadd.f32 %v1032, %v1036
      %v1038 = vpack.c.bf16 %v1037, %v1037
      %vm1039 = vcmask 257024
      %1040 = vst.msk [vmem:[%s335] sm:$0xf] %vm1039, %v1038
      %p1041 = scmp.lt.s32.totalorder %s22, 1
      %s1042 = scalar_select %p1041, %s22, 1
      %p1043 = scmp.lt.s32.totalorder %s23, 0
      %s1044 = scalar_select %p1043, %s23, 0
      %s1045 = sadd.s32 %s1044, %s1042
      %s1046 = smul.addr %s1045, 4
      %s1047 = scalar_lea.vmem %s7, %s1046
      // Predicated region
      $region49: #{_lambda_.8} parent=47 // pred_check
        %p1048 = pneg %p214
      $region50: #{_lambda_.8} parent=47 // pred_check_branch
        %1050 = sbr.rel (%p1048) target = $region52
      $region51: #{_lambda_.8} parent=47 // pred_region
        _
      $region52: #{_lambda_.8} parent=47 // pred_fallthru
        _
    $region48: #{_lambda_.8} parent=5 // pred_fallthru
      _
    %p1051 = scmp.le.s32.totalorder 2, %s13
    // Predicated region
    $region53: #{_lambda_.8} parent=5 // pred_check
      %p1052 = pneg %p1051
    $region54: #{_lambda_.8} parent=5 // pred_check_branch
      %1054 = sbr.rel (%p1052) target = $region56
    $region55: #{_lambda_.8} parent=5 // pred_region
      %s1055 = ssub.s32 %s13, 2
      // Predicated region
      $region57: #{_lambda_.8} parent=55 // pred_check
        %p1056 = pneg %p220
      $region58: #{_lambda_.8} parent=55 // pred_check_branch
        %1058 = sbr.rel (%p1056) target = $region60
      $region59: #{_lambda_.8} parent=55 // pred_region
        %p1059 = scmp.lt.s32.totalorder %s24, 1
        %s1060 = scalar_select %p1059, %s24, 1
        %p1061 = scmp.lt.s32.totalorder %s25, 0
        %s1062 = scalar_select %p1061, %s25, 0
        %s1063 = sadd.s32 %s1062, %s1060
        %s1064 = smul.addr %s1063, 4
        %s1065 = scalar_lea.vmem %s7, %s1064
      $region60: #{_lambda_.8} parent=55 // pred_fallthru
        _
    $region56: #{_lambda_.8} parent=5 // pred_fallthru
      _
  $region6: #{_lambda_.8} parent=0 // loop_footer
    %s17 = sadd.s32 1, %s13
  $region7: #{_lambda_.8} parent=0 // loop_footer_branch
    %12 = sbr.rel target = $region3
  $region8: #{_lambda_.8} parent=0 // loop_exit
    _

</llo_original>
